<compile_context>
chip_gen: v6e
topology: v6e:2x2x1
jax: 0.10.0
libtpu: 0.0.40
codegen_flags: <defaults>
</compile_context>

<pallas_src>
import functools

import numpy as np

import jax
import jax.numpy as jnp
from jax import lax
from jax.experimental import pallas as pl
from jax.experimental.pallas import tpu as pltpu


def _round_up(x, m):
    return (x + m - 1) // m * m


def _padded_bytes(shape, dtype):
    """Rough VMEM footprint of a block after (8, 128) tile padding."""
    s = [int(d) for d in shape]
    if len(s) >= 1:
        s[-1] = _round_up(s[-1], 128)
    if len(s) >= 2:
        s[-2] = _round_up(s[-2], 8)
    n = 1
    for d in s:
        n *= d
    return n * np.dtype(dtype).itemsize


def _vmem_ceiling_bytes():
    """Per-generation VMEM budget: ~104-110 MiB of 128 on v5e/v6e, ~56 MiB of 64 on v7x."""
    cap = 64 << 20
    try:
        cap = int(pltpu.get_tpu_info().vmem_capacity_bytes)
    except Exception:
        # Hardware query unavailable (e.g. interpret/mock) -> conservative default.
        pass
    if cap <= (64 << 20):
        return max(cap - (8 << 20), 32 << 20)          # v7x: leave compiler-scratch headroom
    return min(cap - (20 << 20), 110 << 20)            # v5e / v6e: use most of 128 MiB


def _pick_block_b(batch, per_example_bytes, target_steps=4, max_block_bytes=(4 << 20)):
    """Largest divisor of `batch` keeping >= min(batch, target_steps) grid steps and a
    modest per-step input block, so DMA pipelining and v7x dual-TC sharding both
    have work (never collapse the grid to one step)."""
    best = 1
    for bb in range(1, batch + 1):
        if batch % bb:
            continue
        if batch // bb < min(batch, target_steps):
            continue
        if bb > 1 and bb * per_example_bytes > max_block_bytes:
            continue
        best = bb
    return best


def _pick_tile_i(w, live_bytes_per_row, budget):
    """Largest i-row tile (divisor of W, preferring multiples of 8) whose live pairwise
    intermediates fit the VMEM budget."""
    divs = [d for d in range(1, w + 1) if w % d == 0]
    fit = [d for d in divs if d * live_bytes_per_row <= budget]
    if not fit:
        return 1
    mult8 = [d for d in fit if d % 8 == 0]
    return max(mult8) if mult8 else max(fit)


def entity_matrix_kernel(word_ids_ref, tok_ref, w1_ref, w2_ref, b1_ref, b2_ref,
                         v_ref, out_ref, *, max_words, tile_i, hp, flat_out):
    """One grid step = `block_b` examples; weights are grid-invariant.

    Matmul M is batched over (example, word) for the first layer and over
    (example, i-row, j) for the pairwise second layer.
    """
    W, TI, Hp = max_words, tile_i, hp
    BB, T, H = tok_ref.shape
    cdt = w1_ref.dtype               # MXU operand dtype (f32 or bf16)
    NT = W // TI

    # ---- word-level mean pooling: scatter-mean as a batched one-hot matmul ----
    wid = word_ids_ref[0]                                              # [BB, T]
    w_iota = lax.broadcasted_iota(jnp.int32, (BB, W, T), 1)
    assign = (w_iota == wid[:, None, :]) & (wid[:, None, :] >= 0)      # [BB, W, T] bool
    sums = jnp.einsum('bwt,bth->bwh', assign.astype(cdt), tok_ref[...],
                      preferred_element_type=jnp.float32)              # [BB, W, H] f32
    # counts kept in f32 (exact integers) even on the bf16 path.
    counts = jnp.sum(assign.astype(jnp.float32), axis=-1, keepdims=True)
    word_emb = sums / jnp.maximum(counts, 1.0)                         # [BB, W, H] f32

    # ---- fused first layer for the whole block: ONE [BB*W, H] @ [H, 4*Hp] dot ----
    # RHS column groups (each zero-padded to Hp lanes, so slices are vreg-aligned):
    #   [ i@w1a_f | j@w1b_f | i@w1a_b | j@w1b_b ]
    h_all = jnp.dot(word_emb.reshape(BB * W, H).astype(cdt), w1_ref[...],
                    preferred_element_type=jnp.float32)                # [BB*W, 4*Hp]
    hi_f = h_all[:, 0 * Hp:1 * Hp].reshape(BB, W, Hp)
    hj_f = h_all[:, 1 * Hp:2 * Hp].reshape(BB, W, Hp)
    hi_b = h_all[:, 2 * Hp:3 * Hp].reshape(BB, W, Hp)
    hj_b = h_all[:, 3 * Hp:4 * Hp].reshape(BB, W, Hp)
    hjb_f = hj_f + b1_ref[0:1, :].reshape(1, 1, Hp)                    # bias folded into j half
    hjb_b = hj_b + b1_ref[1:2, :].reshape(1, 1, Hp)

    # ---- loop-invariant constants hoisted out of the tile loop ----
    b2 = b2_ref[...]                                                   # [1, 2*Hp]
    vf = v_ref[0:1, :].reshape(1, 1, 1, Hp)
    vb = v_ref[1:2, :].reshape(1, 1, 1, Hp)
    ti_iota = lax.broadcasted_iota(jnp.int32, (1, TI, W), 1)
    col_iota = lax.broadcasted_iota(jnp.int32, (1, TI, W), 2)

    # ---- pairwise MLP tiled over i-row blocks; M = BB*TI*W per dot ----
    # TODO(synk): for very large W move this static tile loop onto an 'arbitrary'
    # grid axis to bound code size / live ranges further.
    tiles = []
    for t in range(NT):
        i0 = t * TI
        h1f = jnp.maximum(hi_f[:, i0:i0 + TI, None, :] + hjb_f[:, None, :, :], 0.0)
        h1b = jnp.maximum(hi_b[:, i0:i0 + TI, None, :] + hjb_b[:, None, :, :], 0.0)
        m2 = BB * TI * W
        # forward + backward second layer fused into ONE dot vs block-diag RHS.
        lhs2 = jnp.concatenate([h1f.reshape(m2, Hp), h1b.reshape(m2, Hp)],
                               axis=-1).astype(cdt)                    # [m2, 2*Hp]
        h2 = jnp.maximum(jnp.dot(lhs2, w2_ref[...],
                                 preferred_element_type=jnp.float32) + b2, 0.0)
        h2 = h2.reshape(BB, TI, W, 2 * Hp)
        # final v-projection: VPU multiply + lane reduce keeps W lane-dense
        # (an MXU N=2 projection would need a sublane->lane relayout afterwards).
        lf = jnp.sum(h2[..., :Hp] * vf, axis=-1)                       # [BB, TI, W]
        lb = jnp.sum(h2[..., Hp:] * vb, axis=-1)
        logits_t = jnp.where((i0 + ti_iota) <= col_iota, lf, lb)       # triu/tril merge
        if flat_out:
            tiles.append(logits_t)
        else:
            # lane-dense (W % 128 == 0), sublane-dense (TI >= 8) direct tile store
            out_ref[:, i0:i0 + TI, :] = logits_t

    if flat_out:
        logits = tiles[0] if NT == 1 else jnp.concatenate(tiles, axis=1)   # [BB, W, W]
        flat = logits.reshape(1, BB, W * W)
        P = out_ref.shape[-1]
        if P > W * W:
            flat = jnp.concatenate(
                [flat, jnp.zeros((1, BB, P - W * W), jnp.float32)], axis=-1)
        out_ref[...] = flat                         # ONE dense [BB, P] store per step


def entity_matrix_predictor(word_ids, token_embeddings, params, max_words, *,
                            block_b=None, tile_i=None, use_bf16=False,
                            single_buffer_params=True):
    (w1a_f, w1b_f, b1_f, w2_f, b2_f, vf,
     w1a_b, w1b_b, b1_b, w2_b, b2_b, vb) = params
    B, T, H = token_embeddings.shape
    W = int(max_words)
    Hp = _round_up(H, 128)
    cdt = jnp.bfloat16 if use_bf16 else jnp.float32
    itok = np.dtype(cdt).itemsize

    vmem_ceiling = _vmem_ceiling_bytes()

    # ---- block_b: several examples per step, but always >= min(B, 4) grid steps ----
    per_ex_in = _padded_bytes((T, H), cdt) + _padded_bytes((1, T), jnp.int32)
    if block_b is None:
        block_b = _pick_block_b(B, per_ex_in)
    assert B % block_b == 0, "block_b must divide the batch"
    G = B // block_b

    # ---- i-row tile: largest that keeps the pairwise intermediates in budget ----
    live_per_i_row = block_b * W * Hp * (16 + 2 * itok)   # h1f+h1b(f32), lhs2(cdt,2Hp), h2(f32,2Hp)
    if tile_i is None:
        tile_i = _pick_tile_i(W, live_per_i_row, max(vmem_ceiling // 3, 2 << 20))
    assert W % tile_i == 0

    # Flat zero-padded output row for small W; direct (B, W, W) tile stores when
    # W is lane-aligned and the tile is sublane-dense.
    flat_out = not (W % 128 == 0 and (tile_i % 8 == 0 or tile_i == W))

    # ---- wrapper-side parameter fusion (pure layout, mathematically identical) ----
    def _pad_cols(w):                      # [H, H] -> [H, Hp]
        return jnp.pad(w, ((0, 0), (0, Hp - H)))

    def _pad_row(b):                       # [1, H] -> [1, Hp]
        return jnp.pad(b, ((0, 0), (0, Hp - H)))

    w1_fused = jnp.concatenate(
        [_pad_cols(w1a_f), _pad_cols(w1b_f), _pad_cols(w1a_b), _pad_cols(w1b_b)],
        axis=1).astype(cdt)                                            # [H, 4*Hp]
    w2_bd = jnp.zeros((2 * Hp, 2 * Hp), jnp.float32)
    w2_bd = w2_bd.at[:H, :H].set(w2_f).at[Hp:Hp + H, Hp:Hp + H].set(w2_b)
    w2_bd = w2_bd.astype(cdt)                                          # block-diag [2Hp, 2Hp]
    b1_stack = jnp.concatenate([_pad_row(b1_f), _pad_row(b1_b)], axis=0).astype(jnp.float32)
    b2_cat = jnp.concatenate([_pad_row(b2_f), _pad_row(b2_b)], axis=1).astype(jnp.float32)
    v_stack = jnp.concatenate([_pad_row(vf.T), _pad_row(vb.T)], axis=0).astype(jnp.float32)

    # Inputs: word_ids reshaped so the last two block dims cover full array dims
    # (keeps the (8,128) BlockSpec rule satisfied for block_b < B); token
    # embeddings cast to the MXU operand dtype (halves DMA on the bf16 path).
    wid3 = word_ids.astype(jnp.int32).reshape(G, block_b, T)
    tok = token_embeddings.astype(cdt)

    if flat_out:
        P = _round_up(W * W, 128)
        out_shape = jax.ShapeDtypeStruct((G, block_b, P), jnp.float32)
        out_specs = pl.BlockSpec((1, block_b, P), lambda g: (g, 0, 0))
        out_block_shape = (1, block_b, P)
    else:
        P = W * W
        out_shape = jax.ShapeDtypeStruct((B, W, W), jnp.float32)
        out_specs = pl.BlockSpec((block_b, W, W), lambda g: (g, 0, 0))
        out_block_shape = (block_b, W, W)

    # ---- explicit, generation-aware VMEM budget ----
    est = 0
    est += 2 * _padded_bytes((1, block_b, T), jnp.int32)
    est += 2 * _padded_bytes((block_b, T, H), cdt)
    pbuf = 1 if single_buffer_params else 2
    for arr in (w1_fused, w2_bd, b1_stack, b2_cat, v_stack):
        est += pbuf * _padded_bytes(arr.shape, arr.dtype)
    est += 2 * _padded_bytes(out_block_shape, jnp.float32)
    est += _padded_bytes((block_b * W, 4 * Hp), jnp.float32)           # h_all
    est += 4 * _padded_bytes((block_b * W, Hp), jnp.float32)           # hi/hj splits
    est += 2 * _padded_bytes((block_b * W, T), jnp.float32)            # pooling temps
    est += 2 * _padded_bytes((block_b * W, H), jnp.float32)            # sums / word_emb
    est += 2 * _padded_bytes((block_b * tile_i * W, Hp), jnp.float32)  # h1f / h1b
    est += _padded_bytes((block_b * tile_i * W, 2 * Hp), cdt)          # lhs2
    est += _padded_bytes((block_b * tile_i * W, 2 * Hp), jnp.float32)  # h2
    vmem_limit = int(min(max(int(est * 1.5) + (4 << 20), 24 << 20), vmem_ceiling))

    kernel = functools.partial(entity_matrix_kernel, max_words=W, tile_i=tile_i,
                               hp=Hp, flat_out=flat_out)

    def _make_in_specs(single_buffer):
        # Grid-invariant weights: constant index_map; single-buffered when supported.
        kw = dict(pipeline_mode=pl.Buffered(1)) if single_buffer else {}
        return [
            pl.BlockSpec((1, block_b, T), lambda g: (g, 0, 0)),        # word ids block
            pl.BlockSpec((block_b, T, H), lambda g: (g, 0, 0)),        # token embeddings block
            pl.BlockSpec(w1_fused.shape, lambda g: (0, 0), **kw),
            pl.BlockSpec(w2_bd.shape, lambda g: (0, 0), **kw),
            pl.BlockSpec(b1_stack.shape, lambda g: (0, 0), **kw),
            pl.BlockSpec(b2_cat.shape, lambda g: (0, 0), **kw),
            pl.BlockSpec(v_stack.shape, lambda g: (0, 0), **kw),
        ]

    def _run(single_buffer):
        return pl.pallas_call(
            kernel,
            out_shape=out_shape,
            grid_spec=pltpu.PrefetchScalarGridSpec(
                num_scalar_prefetch=0,
                grid=(G,),
                in_specs=_make_in_specs(single_buffer),
                out_specs=out_specs,
            ),
            compiler_params=pltpu.CompilerParams(
                dimension_semantics=("parallel",),
                vmem_limit_bytes=vmem_limit),
        )(wid3, tok, w1_fused, w2_bd, b1_stack, b2_cat, v_stack)

    if single_buffer_params:
        # Try single-buffered (pl.Buffered(1)) grid-invariant weights; if this
        # JAX/Mosaic version rejects the pipeline mode, retry with default
        # double-buffering.  Genuine kernel/shape bugs are NOT masked: the
        # fallback is otherwise identical, so they reproduce and re-raise there.
        try:
            out = _run(True)
        except Exception:
            out = _run(False)
    else:
        out = _run(False)

    if flat_out:
        out = out.reshape(B, P)[:, :W * W].reshape(B, W, W)
    return out


def reference_forward(word_ids, tok, params, W):
    """Pure-JAX reference (mirrors the PyTorch module semantics)."""
    (w1a_f, w1b_f, b1_f, w2_f, b2_f, vf,
     w1a_b, w1b_b, b1_b, w2_b, b2_b, vb) = params
    B, T, H = tok.shape
    onehot = ((word_ids[:, :, None] == jnp.arange(W)[None, None, :])
              & (word_ids[:, :, None] >= 0)).astype(jnp.float32)        # [B, T, W]
    sums = jnp.einsum('btw,bth->bwh', onehot, tok)
    counts = onehot.sum(axis=1)[..., None]
    wemb = sums / jnp.maximum(counts, 1.0)                              # [B, W, H]
    i_emb = jnp.broadcast_to(wemb[:, :, None, :], (B, W, W, H))
    j_emb = jnp.broadcast_to(wemb[:, None, :, :], (B, W, W, H))
    pair = jnp.concatenate([i_emb, j_emb], axis=-1)                     # [B, W, W, 2H]

    def mlp(w1a, w1b, b1, w2, b2, v):
        w1 = jnp.concatenate([w1a, w1b], axis=0)                        # [2H, H]
        h1 = jax.nn.relu(pair @ w1 + b1[0])
        h2 = jax.nn.relu(h1 @ w2 + b2[0])
        return h2 @ v[:, 0]                                             # [B, W, W]

    lf = mlp(w1a_f, w1b_f, b1_f, w2_f, b2_f, vf)
    lb = mlp(w1a_b, w1b_b, b1_b, w2_b, b2_b, vb)
    row = jnp.arange(W)[:, None]
    col = jnp.arange(W)[None, :]
    return jnp.where(row <= col, lf, 0.0) + jnp.where(row > col, lb, 0.0)


if __name__ == "__main__":
    B, T, H, W = 2, 16, 32, 8   # batch, tokens, hidden_dim, max_words

    key = jax.random.PRNGKey(0)
    keys = jax.random.split(key, 16)

    # token embeddings stand in for BERT's last_hidden_state
    token_embeddings = jax.random.normal(keys[0], (B, T, H), dtype=jnp.float32)

    # word_ids: -1 == None (special tokens / padding)
    word_ids = jnp.array(
        [[-1, 0, 0, 1, 2, 2, 2, 3, 4, 5, 5, 6, 7, 7, -1, -1],
         [-1, 0, 1, 1, 2, 3, 3, 3, 4, -1, -1, -1, -1, -1, -1, -1]],
        dtype=jnp.int32)

    # deterministic synthetic parameters (nn.Linear(2H,H), nn.Linear(H,H), v)
    def make_branch(ks):
        w1a = 0.1 * jax.random.normal(ks[0], (H, H), dtype=jnp.float32)
        w1b = 0.1 * jax.random.normal(ks[1], (H, H), dtype=jnp.float32)
        b1 = 0.1 * jax.random.normal(ks[2], (1, H), dtype=jnp.float32)
        w2 = 0.1 * jax.random.normal(ks[3], (H, H), dtype=jnp.float32)
        b2 = 0.1 * jax.random.normal(ks[4], (1, H), dtype=jnp.float32)
        v = jax.random.normal(ks[5], (H, 1), dtype=jnp.float32)
        return (w1a, w1b, b1, w2, b2, v)

    params = make_branch(keys[1:7]) + make_branch(keys[7:13])

    ref = reference_forward(word_ids, token_embeddings, params, W)

    # f32 MXU-operand path (strict check)
    out = jax.block_until_ready(
        entity_matrix_predictor(word_ids, token_embeddings, params, W))
    assert out.shape == (B, W, W)
    assert jnp.allclose(out, ref, atol=1e-3, rtol=1e-3), "f32 path mismatch vs reference"

    # bf16 MXU-operand path (all generations); f32 accumulation, loose check.
    out_bf16 = jax.block_until_ready(
        entity_matrix_predictor(word_ids, token_embeddings, params, W, use_bf16=True))
    assert out_bf16.shape == (B, W, W)
    assert jnp.allclose(out_bf16, ref, atol=1.5e-1, rtol=1e-1), "bf16 path mismatch vs reference"

    print("KERNEL_OK")
</pallas_src>

<mosaic_0001>
module attributes {stable_mosaic.version = 11 : i64} {
  func.func @entity_matrix_kernel(%arg0: i32, %arg1: memref<1x1x16xi32, #tpu.memory_space<vmem>>, %arg2: memref<1x16x32xf32, #tpu.memory_space<vmem>>, %arg3: memref<32x512xf32, #tpu.memory_space<vmem>>, %arg4: memref<256x256xf32, #tpu.memory_space<vmem>>, %arg5: memref<2x128xf32, #tpu.memory_space<vmem>>, %arg6: memref<1x256xf32, #tpu.memory_space<vmem>>, %arg7: memref<2x128xf32, #tpu.memory_space<vmem>>, %arg8: memref<1x1x128xf32, #tpu.memory_space<vmem>>) attributes {dimension_semantics = [#tpu.dimension_semantics<parallel>], iteration_bounds = array<i64: 2>, scalar_prefetch = 0 : i64, scratch_operands = 0 : i64, tpu.core_type = #tpu.core_type<tc>, window_params = [{transform_indices = @transform_0, window_bounds = array<i64: 1, 1, 16>}, {transform_indices = @transform_1, window_bounds = array<i64: 1, 16, 32>}, {pipeline_mode = #tpu.pipeline_mode<synchronous>, transform_indices = @transform_2, window_bounds = array<i64: 32, 512>}, {pipeline_mode = #tpu.pipeline_mode<synchronous>, transform_indices = @transform_3, window_bounds = array<i64: 256, 256>}, {pipeline_mode = #tpu.pipeline_mode<synchronous>, transform_indices = @transform_4, window_bounds = array<i64: 2, 128>}, {pipeline_mode = #tpu.pipeline_mode<synchronous>, transform_indices = @transform_5, window_bounds = array<i64: 1, 256>}, {pipeline_mode = #tpu.pipeline_mode<synchronous>, transform_indices = @transform_6, window_bounds = array<i64: 2, 128>}, {transform_indices = @transform_7, window_bounds = array<i64: 1, 1, 128>}]} {
    %c0 = arith.constant 0 : index
    %c0_0 = arith.constant 0 : index
    %c0_1 = arith.constant 0 : index
    %0 = vector.load %arg1[%c0, %c0_0, %c0_1] : memref<1x1x16xi32, #tpu.memory_space<vmem>>, vector<1x1x16xi32>
    %1 = vector.shape_cast %0 : vector<1x1x16xi32> to vector<1x16xi32>
    %2 = tpu.iota {dimensions = array<i32: 1>} : vector<1x8x16xi32>
    %3 = vector.shape_cast %1 : vector<1x16xi32> to vector<1x1x16xi32>
    %4 = vector.broadcast %3 : vector<1x1x16xi32> to vector<1x8x16xi32>
    %5 = arith.cmpi eq, %2, %4 : vector<1x8x16xi32>
    %6 = vector.shape_cast %1 : vector<1x16xi32> to vector<1x1x16xi32>
    %c0_i32 = arith.constant 0 : i32
    %7 = vector.broadcast %c0_i32 : i32 to vector<1x1x16xi32>
    %8 = arith.cmpi sge, %6, %7 : vector<1x1x16xi32>
    %9 = vector.broadcast %8 : vector<1x1x16xi1> to vector<1x8x16xi1>
    %10 = arith.andi %5, %9 : vector<1x8x16xi1>
    %11 = arith.extui %10 : vector<1x8x16xi1> to vector<1x8x16xi32>
    %12 = arith.sitofp %11 : vector<1x8x16xi32> to vector<1x8x16xf32>
    %c0_2 = arith.constant 0 : index
    %c0_3 = arith.constant 0 : index
    %c0_4 = arith.constant 0 : index
    %13 = vector.load %arg2[%c0_2, %c0_3, %c0_4] : memref<1x16x32xf32, #tpu.memory_space<vmem>>, vector<1x16x32xf32>
    "tpu.trace_start"() <{level = 10 : i32, message = "bwt,bth->bwh"}> : () -> ()
    %cst = arith.constant dense<0.000000e+00> : vector<1x8x32xf32>
    %14 = tpu.matmul %12, %13, %cst {dimension_numbers = #tpu.dot_dimension_numbers<[2], [1], [1], [2], [0, 0, 0, 1, 1, 2], [0], [0]>} : vector<1x8x16xf32>, vector<1x16x32xf32>, vector<1x8x32xf32> -> vector<1x8x32xf32>
    "tpu.trace_stop"() : () -> ()
    %15 = arith.extui %10 : vector<1x8x16xi1> to vector<1x8x16xi32>
    %16 = arith.sitofp %15 : vector<1x8x16xi32> to vector<1x8x16xf32>
    %cst_5 = arith.constant dense<0.000000e+00> : vector<1x8xf32>
    %17 = vector.multi_reduction <add>, %16, %cst_5 [2] : vector<1x8x16xf32> to vector<1x8xf32>
    %18 = vector.shape_cast %17 : vector<1x8xf32> to vector<1x8x1xf32>
    %cst_6 = arith.constant 1.000000e+00 : f32
    %19 = vector.broadcast %cst_6 : f32 to vector<1x8x1xf32>
    %20 = arith.maximumf %18, %19 : vector<1x8x1xf32>
    %21 = vector.broadcast %20 : vector<1x8x1xf32> to vector<1x8x32xf32>
    %22 = arith.divf %14, %21 : vector<1x8x32xf32>
    %23 = vector.shape_cast %22 : vector<1x8x32xf32> to vector<8x32xf32>
    %c0_7 = arith.constant 0 : index
    %c0_8 = arith.constant 0 : index
    %24 = vector.load %arg3[%c0_7, %c0_8] : memref<32x512xf32, #tpu.memory_space<vmem>>, vector<32x512xf32>
    %cst_9 = arith.constant dense<0.000000e+00> : vector<8x512xf32>
    %25 = tpu.matmul %23, %24, %cst_9 {dimension_numbers = #tpu.dot_dimension_numbers<[1], [0], [0], [1], [0, 0, 1, 1], [], []>} : vector<8x32xf32>, vector<32x512xf32>, vector<8x512xf32> -> vector<8x512xf32>
    %26 = vector.extract_strided_slice %25 {offsets = [0, 0], sizes = [8, 128], strides = [1, 1]} : vector<8x512xf32> to vector<8x128xf32>
    %27 = vector.shape_cast %26 : vector<8x128xf32> to vector<1x8x128xf32>
    %28 = vector.extract_strided_slice %25 {offsets = [0, 128], sizes = [8, 128], strides = [1, 1]} : vector<8x512xf32> to vector<8x128xf32>
    %29 = vector.shape_cast %28 : vector<8x128xf32> to vector<1x8x128xf32>
    %30 = vector.extract_strided_slice %25 {offsets = [0, 256], sizes = [8, 128], strides = [1, 1]} : vector<8x512xf32> to vector<8x128xf32>
    %31 = vector.shape_cast %30 : vector<8x128xf32> to vector<1x8x128xf32>
    %32 = vector.extract_strided_slice %25 {offsets = [0, 384], sizes = [8, 128], strides = [1, 1]} : vector<8x512xf32> to vector<8x128xf32>
    %33 = vector.shape_cast %32 : vector<8x128xf32> to vector<1x8x128xf32>
    %c0_10 = arith.constant 0 : index
    %c0_11 = arith.constant 0 : index
    %34 = vector.load %arg5[%c0_10, %c0_11] : memref<2x128xf32, #tpu.memory_space<vmem>>, vector<1x128xf32>
    %35 = vector.shape_cast %34 : vector<1x128xf32> to vector<1x1x128xf32>
    %36 = vector.broadcast %35 : vector<1x1x128xf32> to vector<1x8x128xf32>
    %37 = arith.addf %29, %36 : vector<1x8x128xf32>
    %c1 = arith.constant 1 : index
    %c0_12 = arith.constant 0 : index
    %38 = vector.load %arg5[%c1, %c0_12] : memref<2x128xf32, #tpu.memory_space<vmem>>, vector<1x128xf32>
    %39 = vector.shape_cast %38 : vector<1x128xf32> to vector<1x1x128xf32>
    %40 = vector.broadcast %39 : vector<1x1x128xf32> to vector<1x8x128xf32>
    %41 = arith.addf %33, %40 : vector<1x8x128xf32>
    %c0_13 = arith.constant 0 : index
    %c0_14 = arith.constant 0 : index
    %42 = vector.load %arg6[%c0_13, %c0_14] : memref<1x256xf32, #tpu.memory_space<vmem>>, vector<1x256xf32>
    %c0_15 = arith.constant 0 : index
    %c0_16 = arith.constant 0 : index
    %43 = vector.load %arg7[%c0_15, %c0_16] : memref<2x128xf32, #tpu.memory_space<vmem>>, vector<1x128xf32>
    %44 = vector.shape_cast %43 : vector<1x128xf32> to vector<1x1x1x128xf32>
    %c1_17 = arith.constant 1 : index
    %c0_18 = arith.constant 0 : index
    %45 = vector.load %arg7[%c1_17, %c0_18] : memref<2x128xf32, #tpu.memory_space<vmem>>, vector<1x128xf32>
    %46 = vector.shape_cast %45 : vector<1x128xf32> to vector<1x1x1x128xf32>
    %47 = tpu.iota {dimensions = array<i32: 1>} : vector<1x8x8xi32>
    %48 = tpu.iota {dimensions = array<i32: 2>} : vector<1x8x8xi32>
    %49 = vector.shape_cast %27 : vector<1x8x128xf32> to vector<1x8x1x128xf32>
    %50 = vector.shape_cast %37 : vector<1x8x128xf32> to vector<1x1x8x128xf32>
    %51 = vector.broadcast %49 : vector<1x8x1x128xf32> to vector<1x8x8x128xf32>
    %52 = vector.broadcast %50 : vector<1x1x8x128xf32> to vector<1x8x8x128xf32>
    %53 = arith.addf %51, %52 : vector<1x8x8x128xf32>
    %cst_19 = arith.constant 0.000000e+00 : f32
    %54 = vector.broadcast %cst_19 : f32 to vector<1x8x8x128xf32>
    %55 = arith.maximumf %53, %54 : vector<1x8x8x128xf32>
    %56 = vector.shape_cast %31 : vector<1x8x128xf32> to vector<1x8x1x128xf32>
    %57 = vector.shape_cast %41 : vector<1x8x128xf32> to vector<1x1x8x128xf32>
    %58 = vector.broadcast %56 : vector<1x8x1x128xf32> to vector<1x8x8x128xf32>
    %59 = vector.broadcast %57 : vector<1x1x8x128xf32> to vector<1x8x8x128xf32>
    %60 = arith.addf %58, %59 : vector<1x8x8x128xf32>
    %cst_20 = arith.constant 0.000000e+00 : f32
    %61 = vector.broadcast %cst_20 : f32 to vector<1x8x8x128xf32>
    %62 = arith.maximumf %60, %61 : vector<1x8x8x128xf32>
    %63 = vector.shape_cast %55 : vector<1x8x8x128xf32> to vector<64x128xf32>
    %64 = vector.shape_cast %62 : vector<1x8x8x128xf32> to vector<64x128xf32>
    %65 = tpu.concatenate %63, %64 in 1 : vector<64x128xf32>, vector<64x128xf32> -> vector<64x256xf32>
    %c0_21 = arith.constant 0 : index
    %c0_22 = arith.constant 0 : index
    %66 = vector.load %arg4[%c0_21, %c0_22] : memref<256x256xf32, #tpu.memory_space<vmem>>, vector<256x256xf32>
    %cst_23 = arith.constant dense<0.000000e+00> : vector<64x256xf32>
    %67 = tpu.matmul %65, %66, %cst_23 {dimension_numbers = #tpu.dot_dimension_numbers<[1], [0], [0], [1], [0, 0, 1, 1], [], []>} : vector<64x256xf32>, vector<256x256xf32>, vector<64x256xf32> -> vector<64x256xf32>
    %68 = vector.broadcast %42 : vector<1x256xf32> to vector<64x256xf32>
    %69 = arith.addf %67, %68 : vector<64x256xf32>
    %cst_24 = arith.constant 0.000000e+00 : f32
    %70 = vector.broadcast %cst_24 : f32 to vector<64x256xf32>
    %71 = arith.maximumf %69, %70 : vector<64x256xf32>
    %72 = vector.shape_cast %71 : vector<64x256xf32> to vector<1x8x8x256xf32>
    %73 = vector.extract_strided_slice %72 {offsets = [0, 0, 0, 0], sizes = [1, 8, 8, 128], strides = [1, 1, 1, 1]} : vector<1x8x8x256xf32> to vector<1x8x8x128xf32>
    %74 = vector.broadcast %44 : vector<1x1x1x128xf32> to vector<1x8x8x128xf32>
    %75 = arith.mulf %73, %74 : vector<1x8x8x128xf32>
    %cst_25 = arith.constant dense<0.000000e+00> : vector<1x8x8xf32>
    %76 = vector.multi_reduction <add>, %75, %cst_25 [3] : vector<1x8x8x128xf32> to vector<1x8x8xf32>
    %77 = vector.extract_strided_slice %72 {offsets = [0, 0, 0, 128], sizes = [1, 8, 8, 128], strides = [1, 1, 1, 1]} : vector<1x8x8x256xf32> to vector<1x8x8x128xf32>
    %78 = vector.broadcast %46 : vector<1x1x1x128xf32> to vector<1x8x8x128xf32>
    %79 = arith.mulf %77, %78 : vector<1x8x8x128xf32>
    %cst_26 = arith.constant dense<0.000000e+00> : vector<1x8x8xf32>
    %80 = vector.multi_reduction <add>, %79, %cst_26 [3] : vector<1x8x8x128xf32> to vector<1x8x8xf32>
    %c0_i32_27 = arith.constant 0 : i32
    %81 = vector.broadcast %c0_i32_27 : i32 to vector<1x8x8xi32>
    %82 = arith.addi %81, %47 : vector<1x8x8xi32>
    %83 = arith.cmpi sle, %82, %48 : vector<1x8x8xi32>
    %84 = arith.select %83, %76, %80 : vector<1x8x8xi1>, vector<1x8x8xf32>
    %85 = vector.shape_cast %84 : vector<1x8x8xf32> to vector<1x1x64xf32>
    %cst_28 = arith.constant 0.000000e+00 : f32
    %86 = vector.broadcast %cst_28 : f32 to vector<1x1x64xf32>
    %87 = tpu.concatenate %85, %86 in 2 : vector<1x1x64xf32>, vector<1x1x64xf32> -> vector<1x1x128xf32>
    %c0_29 = arith.constant 0 : index
    %c0_30 = arith.constant 0 : index
    %c0_31 = arith.constant 0 : index
    %88 = vector.load %arg8[%c0_29, %c0_30, %c0_31] : memref<1x1x128xf32, #tpu.memory_space<vmem>>, vector<1x1x128xf32>
    tpu.vector_store %arg8[%c0_29, %c0_30, %c0_31], %87 {strides = array<i32>} : memref<1x1x128xf32, #tpu.memory_space<vmem>>, vector<1x1x128xf32>,
    return
  }
  func.func @transform_0(%arg0: i32) -> (i32, i32, i32) {
    %c0_i32 = arith.constant 0 : i32
    %c0_i32_0 = arith.constant 0 : i32
    %c0_i32_1 = arith.constant 0 : i32
    return %arg0, %c0_i32, %c0_i32_0 : i32, i32, i32
  }
  func.func @transform_1(%arg0: i32) -> (i32, i32, i32) {
    %c0_i32 = arith.constant 0 : i32
    %c0_i32_0 = arith.constant 0 : i32
    %c0_i32_1 = arith.constant 0 : i32
    return %arg0, %c0_i32, %c0_i32_0 : i32, i32, i32
  }
  func.func @transform_2(%arg0: i32) -> (i32, i32) {
    %c0_i32 = arith.constant 0 : i32
    %c0_i32_0 = arith.constant 0 : i32
    %c0_i32_1 = arith.constant 0 : i32
    return %c0_i32, %c0_i32_0 : i32, i32
  }
  func.func @transform_3(%arg0: i32) -> (i32, i32) {
    %c0_i32 = arith.constant 0 : i32
    %c0_i32_0 = arith.constant 0 : i32
    %c0_i32_1 = arith.constant 0 : i32
    return %c0_i32, %c0_i32_0 : i32, i32
  }
  func.func @transform_4(%arg0: i32) -> (i32, i32) {
    %c0_i32 = arith.constant 0 : i32
    %c0_i32_0 = arith.constant 0 : i32
    %c0_i32_1 = arith.constant 0 : i32
    return %c0_i32, %c0_i32_0 : i32, i32
  }
  func.func @transform_5(%arg0: i32) -> (i32, i32) {
    %c0_i32 = arith.constant 0 : i32
    %c0_i32_0 = arith.constant 0 : i32
    %c0_i32_1 = arith.constant 0 : i32
    return %c0_i32, %c0_i32_0 : i32, i32
  }
  func.func @transform_6(%arg0: i32) -> (i32, i32) {
    %c0_i32 = arith.constant 0 : i32
    %c0_i32_0 = arith.constant 0 : i32
    %c0_i32_1 = arith.constant 0 : i32
    return %c0_i32, %c0_i32_0 : i32, i32
  }
  func.func @transform_7(%arg0: i32) -> (i32, i32, i32) {
    %c0_i32 = arith.constant 0 : i32
    %c0_i32_0 = arith.constant 0 : i32
    %c0_i32_1 = arith.constant 0 : i32
    return %arg0, %c0_i32, %c0_i32_0 : i32, i32, i32
  }
}

module attributes {stable_mosaic.version = 11 : i64} {
  func.func @entity_matrix_kernel(%arg0: i32, %arg1: memref<1x1x16xi32, #tpu.memory_space<vmem>>, %arg2: memref<1x16x32xf32, #tpu.memory_space<vmem>>, %arg3: memref<32x512xf32, #tpu.memory_space<vmem>>, %arg4: memref<256x256xf32, #tpu.memory_space<vmem>>, %arg5: memref<2x128xf32, #tpu.memory_space<vmem>>, %arg6: memref<1x256xf32, #tpu.memory_space<vmem>>, %arg7: memref<2x128xf32, #tpu.memory_space<vmem>>, %arg8: memref<1x1x128xf32, #tpu.memory_space<vmem>>) attributes {dimension_semantics = [#tpu.dimension_semantics<parallel>], iteration_bounds = array<i64: 2>, scalar_prefetch = 0 : i64, scratch_operands = 0 : i64, tpu.core_type = #tpu.core_type<tc>, window_params = [{transform_indices = @transform_0, window_bounds = array<i64: 1, 1, 16>}, {transform_indices = @transform_1, window_bounds = array<i64: 1, 16, 32>}, {pipeline_mode = #tpu.pipeline_mode<synchronous>, transform_indices = @transform_2, window_bounds = array<i64: 32, 512>}, {pipeline_mode = #tpu.pipeline_mode<synchronous>, transform_indices = @transform_3, window_bounds = array<i64: 256, 256>}, {pipeline_mode = #tpu.pipeline_mode<synchronous>, transform_indices = @transform_4, window_bounds = array<i64: 2, 128>}, {pipeline_mode = #tpu.pipeline_mode<synchronous>, transform_indices = @transform_5, window_bounds = array<i64: 1, 256>}, {pipeline_mode = #tpu.pipeline_mode<synchronous>, transform_indices = @transform_6, window_bounds = array<i64: 2, 128>}, {transform_indices = @transform_7, window_bounds = array<i64: 1, 1, 128>}]} {
    %c0 = arith.constant 0 : index
    %c0_0 = arith.constant 0 : index
    %c0_1 = arith.constant 0 : index
    %0 = vector.load %arg1[%c0, %c0_0, %c0_1] : memref<1x1x16xi32, #tpu.memory_space<vmem>>, vector<1x1x16xi32>
    %1 = vector.shape_cast %0 : vector<1x1x16xi32> to vector<1x16xi32>
    %2 = tpu.iota {dimensions = array<i32: 1>} : vector<1x8x16xi32>
    %3 = vector.shape_cast %1 : vector<1x16xi32> to vector<1x1x16xi32>
    %4 = vector.broadcast %3 : vector<1x1x16xi32> to vector<1x8x16xi32>
    %5 = arith.cmpi eq, %2, %4 : vector<1x8x16xi32>
    %6 = vector.shape_cast %1 : vector<1x16xi32> to vector<1x1x16xi32>
    %c0_i32 = arith.constant 0 : i32
    %7 = vector.broadcast %c0_i32 : i32 to vector<1x1x16xi32>
    %8 = arith.cmpi sge, %6, %7 : vector<1x1x16xi32>
    %9 = vector.broadcast %8 : vector<1x1x16xi1> to vector<1x8x16xi1>
    %10 = arith.andi %5, %9 : vector<1x8x16xi1>
    %11 = arith.extui %10 : vector<1x8x16xi1> to vector<1x8x16xi32>
    %12 = arith.sitofp %11 : vector<1x8x16xi32> to vector<1x8x16xf32>
    %c0_2 = arith.constant 0 : index
    %c0_3 = arith.constant 0 : index
    %c0_4 = arith.constant 0 : index
    %13 = vector.load %arg2[%c0_2, %c0_3, %c0_4] : memref<1x16x32xf32, #tpu.memory_space<vmem>>, vector<1x16x32xf32>
    "tpu.trace_start"() <{level = 10 : i32, message = "bwt,bth->bwh"}> : () -> ()
    %cst = arith.constant dense<0.000000e+00> : vector<1x8x32xf32>
    %14 = tpu.matmul %12, %13, %cst {dimension_numbers = #tpu.dot_dimension_numbers<[2], [1], [1], [2], [0, 0, 0, 1, 1, 2], [0], [0]>} : vector<1x8x16xf32>, vector<1x16x32xf32>, vector<1x8x32xf32> -> vector<1x8x32xf32>
    "tpu.trace_stop"() : () -> ()
    %15 = arith.extui %10 : vector<1x8x16xi1> to vector<1x8x16xi32>
    %16 = arith.sitofp %15 : vector<1x8x16xi32> to vector<1x8x16xf32>
    %cst_5 = arith.constant dense<0.000000e+00> : vector<1x8xf32>
    %17 = vector.multi_reduction <add>, %16, %cst_5 [2] : vector<1x8x16xf32> to vector<1x8xf32>
    %18 = vector.shape_cast %17 : vector<1x8xf32> to vector<1x8x1xf32>
    %cst_6 = arith.constant 1.000000e+00 : f32
    %19 = vector.broadcast %cst_6 : f32 to vector<1x8x1xf32>
    %20 = arith.maximumf %18, %19 : vector<1x8x1xf32>
    %21 = vector.broadcast %20 : vector<1x8x1xf32> to vector<1x8x32xf32>
    %22 = arith.divf %14, %21 : vector<1x8x32xf32>
    %23 = vector.shape_cast %22 : vector<1x8x32xf32> to vector<8x32xf32>
    %c0_7 = arith.constant 0 : index
    %c0_8 = arith.constant 0 : index
    %24 = vector.load %arg3[%c0_7, %c0_8] : memref<32x512xf32, #tpu.memory_space<vmem>>, vector<32x512xf32>
    %cst_9 = arith.constant dense<0.000000e+00> : vector<8x512xf32>
    %25 = tpu.matmul %23, %24, %cst_9 {dimension_numbers = #tpu.dot_dimension_numbers<[1], [0], [0], [1], [0, 0, 1, 1], [], []>} : vector<8x32xf32>, vector<32x512xf32>, vector<8x512xf32> -> vector<8x512xf32>
    %26 = vector.extract_strided_slice %25 {offsets = [0, 0], sizes = [8, 128], strides = [1, 1]} : vector<8x512xf32> to vector<8x128xf32>
    %27 = vector.shape_cast %26 : vector<8x128xf32> to vector<1x8x128xf32>
    %28 = vector.extract_strided_slice %25 {offsets = [0, 128], sizes = [8, 128], strides = [1, 1]} : vector<8x512xf32> to vector<8x128xf32>
    %29 = vector.shape_cast %28 : vector<8x128xf32> to vector<1x8x128xf32>
    %30 = vector.extract_strided_slice %25 {offsets = [0, 256], sizes = [8, 128], strides = [1, 1]} : vector<8x512xf32> to vector<8x128xf32>
    %31 = vector.shape_cast %30 : vector<8x128xf32> to vector<1x8x128xf32>
    %32 = vector.extract_strided_slice %25 {offsets = [0, 384], sizes = [8, 128], strides = [1, 1]} : vector<8x512xf32> to vector<8x128xf32>
    %33 = vector.shape_cast %32 : vector<8x128xf32> to vector<1x8x128xf32>
    %c0_10 = arith.constant 0 : index
    %c0_11 = arith.constant 0 : index
    %34 = vector.load %arg5[%c0_10, %c0_11] : memref<2x128xf32, #tpu.memory_space<vmem>>, vector<1x128xf32>
    %35 = vector.shape_cast %34 : vector<1x128xf32> to vector<1x1x128xf32>
    %36 = vector.broadcast %35 : vector<1x1x128xf32> to vector<1x8x128xf32>
    %37 = arith.addf %29, %36 : vector<1x8x128xf32>
    %c1 = arith.constant 1 : index
    %c0_12 = arith.constant 0 : index
    %38 = vector.load %arg5[%c1, %c0_12] : memref<2x128xf32, #tpu.memory_space<vmem>>, vector<1x128xf32>
    %39 = vector.shape_cast %38 : vector<1x128xf32> to vector<1x1x128xf32>
    %40 = vector.broadcast %39 : vector<1x1x128xf32> to vector<1x8x128xf32>
    %41 = arith.addf %33, %40 : vector<1x8x128xf32>
    %c0_13 = arith.constant 0 : index
    %c0_14 = arith.constant 0 : index
    %42 = vector.load %arg6[%c0_13, %c0_14] : memref<1x256xf32, #tpu.memory_space<vmem>>, vector<1x256xf32>
    %c0_15 = arith.constant 0 : index
    %c0_16 = arith.constant 0 : index
    %43 = vector.load %arg7[%c0_15, %c0_16] : memref<2x128xf32, #tpu.memory_space<vmem>>, vector<1x128xf32>
    %44 = vector.shape_cast %43 : vector<1x128xf32> to vector<1x1x1x128xf32>
    %c1_17 = arith.constant 1 : index
    %c0_18 = arith.constant 0 : index
    %45 = vector.load %arg7[%c1_17, %c0_18] : memref<2x128xf32, #tpu.memory_space<vmem>>, vector<1x128xf32>
    %46 = vector.shape_cast %45 : vector<1x128xf32> to vector<1x1x1x128xf32>
    %47 = tpu.iota {dimensions = array<i32: 1>} : vector<1x8x8xi32>
    %48 = tpu.iota {dimensions = array<i32: 2>} : vector<1x8x8xi32>
    %49 = vector.shape_cast %27 : vector<1x8x128xf32> to vector<1x8x1x128xf32>
    %50 = vector.shape_cast %37 : vector<1x8x128xf32> to vector<1x1x8x128xf32>
    %51 = vector.broadcast %49 : vector<1x8x1x128xf32> to vector<1x8x8x128xf32>
    %52 = vector.broadcast %50 : vector<1x1x8x128xf32> to vector<1x8x8x128xf32>
    %53 = arith.addf %51, %52 : vector<1x8x8x128xf32>
    %cst_19 = arith.constant 0.000000e+00 : f32
    %54 = vector.broadcast %cst_19 : f32 to vector<1x8x8x128xf32>
    %55 = arith.maximumf %53, %54 : vector<1x8x8x128xf32>
    %56 = vector.shape_cast %31 : vector<1x8x128xf32> to vector<1x8x1x128xf32>
    %57 = vector.shape_cast %41 : vector<1x8x128xf32> to vector<1x1x8x128xf32>
    %58 = vector.broadcast %56 : vector<1x8x1x128xf32> to vector<1x8x8x128xf32>
    %59 = vector.broadcast %57 : vector<1x1x8x128xf32> to vector<1x8x8x128xf32>
    %60 = arith.addf %58, %59 : vector<1x8x8x128xf32>
    %cst_20 = arith.constant 0.000000e+00 : f32
    %61 = vector.broadcast %cst_20 : f32 to vector<1x8x8x128xf32>
    %62 = arith.maximumf %60, %61 : vector<1x8x8x128xf32>
    %63 = vector.shape_cast %55 : vector<1x8x8x128xf32> to vector<64x128xf32>
    %64 = vector.shape_cast %62 : vector<1x8x8x128xf32> to vector<64x128xf32>
    %65 = tpu.concatenate %63, %64 in 1 : vector<64x128xf32>, vector<64x128xf32> -> vector<64x256xf32>
    %c0_21 = arith.constant 0 : index
    %c0_22 = arith.constant 0 : index
    %66 = vector.load %arg4[%c0_21, %c0_22] : memref<256x256xf32, #tpu.memory_space<vmem>>, vector<256x256xf32>
    %cst_23 = arith.constant dense<0.000000e+00> : vector<64x256xf32>
    %67 = tpu.matmul %65, %66, %cst_23 {dimension_numbers = #tpu.dot_dimension_numbers<[1], [0], [0], [1], [0, 0, 1, 1], [], []>} : vector<64x256xf32>, vector<256x256xf32>, vector<64x256xf32> -> vector<64x256xf32>
    %68 = vector.broadcast %42 : vector<1x256xf32> to vector<64x256xf32>
    %69 = arith.addf %67, %68 : vector<64x256xf32>
    %cst_24 = arith.constant 0.000000e+00 : f32
    %70 = vector.broadcast %cst_24 : f32 to vector<64x256xf32>
    %71 = arith.maximumf %69, %70 : vector<64x256xf32>
    %72 = vector.shape_cast %71 : vector<64x256xf32> to vector<1x8x8x256xf32>
    %73 = vector.extract_strided_slice %72 {offsets = [0, 0, 0, 0], sizes = [1, 8, 8, 128], strides = [1, 1, 1, 1]} : vector<1x8x8x256xf32> to vector<1x8x8x128xf32>
    %74 = vector.broadcast %44 : vector<1x1x1x128xf32> to vector<1x8x8x128xf32>
    %75 = arith.mulf %73, %74 : vector<1x8x8x128xf32>
    %cst_25 = arith.constant dense<0.000000e+00> : vector<1x8x8xf32>
    %76 = vector.multi_reduction <add>, %75, %cst_25 [3] : vector<1x8x8x128xf32> to vector<1x8x8xf32>
    %77 = vector.extract_strided_slice %72 {offsets = [0, 0, 0, 128], sizes = [1, 8, 8, 128], strides = [1, 1, 1, 1]} : vector<1x8x8x256xf32> to vector<1x8x8x128xf32>
    %78 = vector.broadcast %46 : vector<1x1x1x128xf32> to vector<1x8x8x128xf32>
    %79 = arith.mulf %77, %78 : vector<1x8x8x128xf32>
    %cst_26 = arith.constant dense<0.000000e+00> : vector<1x8x8xf32>
    %80 = vector.multi_reduction <add>, %79, %cst_26 [3] : vector<1x8x8x128xf32> to vector<1x8x8xf32>
    %c0_i32_27 = arith.constant 0 : i32
    %81 = vector.broadcast %c0_i32_27 : i32 to vector<1x8x8xi32>
    %82 = arith.addi %81, %47 : vector<1x8x8xi32>
    %83 = arith.cmpi sle, %82, %48 : vector<1x8x8xi32>
    %84 = arith.select %83, %76, %80 : vector<1x8x8xi1>, vector<1x8x8xf32>
    %85 = vector.shape_cast %84 : vector<1x8x8xf32> to vector<1x1x64xf32>
    %cst_28 = arith.constant 0.000000e+00 : f32
    %86 = vector.broadcast %cst_28 : f32 to vector<1x1x64xf32>
    %87 = tpu.concatenate %85, %86 in 2 : vector<1x1x64xf32>, vector<1x1x64xf32> -> vector<1x1x128xf32>
    %c0_29 = arith.constant 0 : index
    %c0_30 = arith.constant 0 : index
    %c0_31 = arith.constant 0 : index
    %88 = vector.load %arg8[%c0_29, %c0_30, %c0_31] : memref<1x1x128xf32, #tpu.memory_space<vmem>>, vector<1x1x128xf32>
    tpu.vector_store %arg8[%c0_29, %c0_30, %c0_31], %87 {strides = array<i32>} : memref<1x1x128xf32, #tpu.memory_space<vmem>>, vector<1x1x128xf32>,
    return
  }
  func.func @transform_0(%arg0: i32) -> (i32, i32, i32) {
    %c0_i32 = arith.constant 0 : i32
    %c0_i32_0 = arith.constant 0 : i32
    %c0_i32_1 = arith.constant 0 : i32
    return %arg0, %c0_i32, %c0_i32_0 : i32, i32, i32
  }
  func.func @transform_1(%arg0: i32) -> (i32, i32, i32) {
    %c0_i32 = arith.constant 0 : i32
    %c0_i32_0 = arith.constant 0 : i32
    %c0_i32_1 = arith.constant 0 : i32
    return %arg0, %c0_i32, %c0_i32_0 : i32, i32, i32
  }
  func.func @transform_2(%arg0: i32) -> (i32, i32) {
    %c0_i32 = arith.constant 0 : i32
    %c0_i32_0 = arith.constant 0 : i32
    %c0_i32_1 = arith.constant 0 : i32
    return %c0_i32, %c0_i32_0 : i32, i32
  }
  func.func @transform_3(%arg0: i32) -> (i32, i32) {
    %c0_i32 = arith.constant 0 : i32
    %c0_i32_0 = arith.constant 0 : i32
    %c0_i32_1 = arith.constant 0 : i32
    return %c0_i32, %c0_i32_0 : i32, i32
  }
  func.func @transform_4(%arg0: i32) -> (i32, i32) {
    %c0_i32 = arith.constant 0 : i32
    %c0_i32_0 = arith.constant 0 : i32
    %c0_i32_1 = arith.constant 0 : i32
    return %c0_i32, %c0_i32_0 : i32, i32
  }
  func.func @transform_5(%arg0: i32) -> (i32, i32) {
    %c0_i32 = arith.constant 0 : i32
    %c0_i32_0 = arith.constant 0 : i32
    %c0_i32_1 = arith.constant 0 : i32
    return %c0_i32, %c0_i32_0 : i32, i32
  }
  func.func @transform_6(%arg0: i32) -> (i32, i32) {
    %c0_i32 = arith.constant 0 : i32
    %c0_i32_0 = arith.constant 0 : i32
    %c0_i32_1 = arith.constant 0 : i32
    return %c0_i32, %c0_i32_0 : i32, i32
  }
  func.func @transform_7(%arg0: i32) -> (i32, i32, i32) {
    %c0_i32 = arith.constant 0 : i32
    %c0_i32_0 = arith.constant 0 : i32
    %c0_i32_1 = arith.constant 0 : i32
    return %arg0, %c0_i32, %c0_i32_0 : i32, i32, i32
  }
}

</mosaic_0001>

<llo_original>
// kernel: tpu_custom_call.1
$region0: #{tpu_custom_call.1}
  #allocation0 [shape = 'u32[]', space=smem, size = 0x4, offset = 0x4, fixed_abs, tag = 'smem constant byte address 0x4 - core index']
  #allocation1 [shape = 'u32[144,128]{1,0:T(1,128)}', space=vmem, size = 0x12000, scoped, tag = 'internal scratch']
  %s0 = inlined_call_operand.hbm [shape: s32[2,1,16], index: 0, kind: input, shape index: {}]
  %s1 = inlined_call_operand.hbm [shape: f32[2,16,32], index: 1, kind: input, shape index: {}]
  %s2 = inlined_call_operand.hbm [shape: f32[32,512], index: 2, kind: input, shape index: {}]
  %s3 = inlined_call_operand.hbm [shape: f32[256,256], index: 3, kind: input, shape index: {}]
  %s4 = inlined_call_operand.vmem [shape: f32[2,128], index: 4, kind: input, shape index: {}]
  %s5 = inlined_call_operand.vmem [shape: f32[1,256], index: 5, kind: input, shape index: {}]
  %s6 = inlined_call_operand.vmem [shape: f32[2,128], index: 6, kind: input, shape index: {}]
  %s7 = inlined_call_operand.hbm [shape: f32[2,1,128], index: 7, kind: output, shape index: {}]
  %s8 = sld [smem:[#allocation0]]
  $region77: #{tpu_custom_call.1} parent=0
    _
  %s10 = ssub.s32 1, %s8
  %s11 = scalar_select 0, %s10, %s8
  $region1: #{tpu_custom_call.1} parent=0
    #allocation2 [shape = 'u8[1024]{0}', space=vmem, size = 0x400, scoped, tag = 'input window, operand 0']
    #allocation3 [shape = 's32[2]{0}', space=sflag, size = 0x8, scoped, tag = 'scoped memory for tpu_custom_call.1']
    #allocation4 [shape = 's32[2]{0}', space=sflag, size = 0x8, scoped, tag = 'scoped memory for tpu_custom_call.1']
    #allocation5 [shape = 'u8[16384]{0}', space=vmem, size = 0x4000, scoped, tag = 'input window, operand 1']
    #allocation6 [shape = 's32[2]{0}', space=sflag, size = 0x8, scoped, tag = 'scoped memory for tpu_custom_call.1']
    #allocation7 [shape = 'u8[65536]{0}', space=vmem, size = 0x10000, scoped, tag = 'input window, operand 2, single buffered']
    #allocation8 [shape = 'u8[262144]{0}', space=vmem, size = 0x40000, scoped, tag = 'input window, operand 3, single buffered']
    #allocation9 [shape = 's32[1]{0}', space=sflag, size = 0x4, scoped, tag = 'scoped memory for tpu_custom_call.1']
    #allocation10 [shape = 'u8[1024]{0}', space=vmem, size = 0x400, scoped, tag = 'output window, operand 0']
    %12 = vsyncpa [#allocation3], 0
    %s13 = scalar_lea.sflag [#allocation3], 1
    %14 = vsyncpa %s13, 0
    %15 = vsyncpa [#allocation6], 0
    %s16 = scalar_lea.sflag [#allocation6], 1
    %17 = vsyncpa %s16, 0
    %18 = vsyncpa [#allocation9], 0
    %19 = vsyncpa [#allocation4], 0
    %s20 = scalar_lea.sflag [#allocation4], 1
    %21 = vsyncpa %s20, 0
    loop: start=0, step=1, limit=4
    $region2: #{tpu_custom_call.1} parent=1 // loop_pre_header
      _
    $region3: #{tpu_custom_call.1} parent=1 // loop_header
      %s23 = sphi 0, %s27
      %p24 = scmp.ge.s32.totalorder %s23, 4
      %s33 = sphi 0, %s35
      %s36 = sphi 0, %s33
      %s37 = sphi 0, %s36
      %s53 = sphi 0, %s37
      %s59 = sphi 0, %s61
      %s62 = sphi 0, %s59
      %s63 = sphi 0, %s62
      %s79 = sphi 0, %s63
      %s83 = sphi 0, %s83
      %s85 = sphi 0, %s83
      %s86 = sphi 0, %s85
      %s100 = sphi 0, %s86
      %s104 = sphi 0, %s104
      %s106 = sphi 0, %s104
      %s107 = sphi 0, %s106
      %s121 = sphi 0, %s107
      %s125 = sphi 0, %s125
      %s127 = sphi 0, %s125
      %s128 = sphi 0, %s127
      %s142 = sphi 0, %s128
      %s146 = sphi 0, %s146
      %s148 = sphi 0, %s146
      %s149 = sphi 0, %s148
      %s163 = sphi 0, %s149
      %s167 = sphi 0, %s167
      %s169 = sphi 0, %s167
      %s170 = sphi 0, %s169
      %s184 = sphi 0, %s170
      %s190 = sphi 0, %s192
      %s193 = sphi 0, %s190
      %s194 = sphi 0, %s193
      %s210 = sphi 0, %s194
    $region4: #{tpu_custom_call.1} parent=1 // loop_header_branch
      %26 = sbr.rel (%p24) target = $region8
    $region5: #{tpu_custom_call.1} parent=1 // loop_body
      %s28 = ssub.s32 %s23, 1
      %s29 = ssub.s32 %s23, 2
      %s30 = sadd.s32 %s23, 1
      %s31 = ssub.s32 %s23, %s30
      %p32 = scmp.eq.s32.totalorder %s31, 0
      %s34 = sadd.s32 %s33, 1
      %s35 = scalar_select %p32, %s33, %s34
      %p38 = pneg %p32
      %p39 = scmp.eq.s32.totalorder %s23, 1
      %p40 = por %p38, %p39
      %p41 = scmp.ne.s32.totalorder %s33, %s36
      %p42 = scmp.eq.s32.totalorder %s23, 0
      %p43 = por %p41, %p42
      %p44 = scmp.ne.s32.totalorder %s33, %s36
      %p45 = scmp.eq.s32.totalorder %s28, 1
      %p46 = por %p44, %p45
      %p47 = scmp.ne.s32.totalorder %s36, %s37
      %p48 = scmp.eq.s32.totalorder %s28, 0
      %p49 = por %p47, %p48
      %p50 = scmp.ne.s32.totalorder %s36, %s37
      %p51 = scmp.eq.s32.totalorder %s29, 1
      %p52 = por %p50, %p51
      %p54 = scmp.ne.s32.totalorder %s37, %s53
      %p55 = scmp.eq.s32.totalorder %s29, 0
      %p56 = por %p54, %p55
      %s57 = ssub.s32 %s23, %s30
      %p58 = scmp.eq.s32.totalorder %s57, 0
      %s60 = sadd.s32 %s59, 1
      %s61 = scalar_select %p58, %s59, %s60
      %p64 = pneg %p58
      %p65 = scmp.eq.s32.totalorder %s23, 1
      %p66 = por %p64, %p65
      %p67 = scmp.ne.s32.totalorder %s59, %s62
      %p68 = scmp.eq.s32.totalorder %s23, 0
      %p69 = por %p67, %p68
      %p70 = scmp.ne.s32.totalorder %s59, %s62
      %p71 = scmp.eq.s32.totalorder %s28, 1
      %p72 = por %p70, %p71
      %p73 = scmp.ne.s32.totalorder %s62, %s63
      %p74 = scmp.eq.s32.totalorder %s28, 0
      %p75 = por %p73, %p74
      %p76 = scmp.ne.s32.totalorder %s62, %s63
      %p77 = scmp.eq.s32.totalorder %s29, 1
      %p78 = por %p76, %p77
      %p80 = scmp.ne.s32.totalorder %s63, %s79
      %p81 = scmp.eq.s32.totalorder %s29, 0
      %p82 = por %p80, %p81
      %s84 = sadd.s32 %s83, 1
      %p87 = scmp.eq.s32.totalorder %s23, 1
      %p88 = scmp.ne.s32.totalorder %s83, %s85
      %p89 = scmp.eq.s32.totalorder %s23, 0
      %p90 = por %p88, %p89
      %p91 = scmp.ne.s32.totalorder %s83, %s85
      %p92 = scmp.eq.s32.totalorder %s28, 1
      %p93 = por %p91, %p92
      %p94 = scmp.ne.s32.totalorder %s85, %s86
      %p95 = scmp.eq.s32.totalorder %s28, 0
      %p96 = por %p94, %p95
      %p97 = scmp.ne.s32.totalorder %s85, %s86
      %p98 = scmp.eq.s32.totalorder %s29, 1
      %p99 = por %p97, %p98
      %p101 = scmp.ne.s32.totalorder %s86, %s100
      %p102 = scmp.eq.s32.totalorder %s29, 0
      %p103 = por %p101, %p102
      %s105 = sadd.s32 %s104, 1
      %p108 = scmp.eq.s32.totalorder %s23, 1
      %p109 = scmp.ne.s32.totalorder %s104, %s106
      %p110 = scmp.eq.s32.totalorder %s23, 0
      %p111 = por %p109, %p110
      %p112 = scmp.ne.s32.totalorder %s104, %s106
      %p113 = scmp.eq.s32.totalorder %s28, 1
      %p114 = por %p112, %p113
      %p115 = scmp.ne.s32.totalorder %s106, %s107
      %p116 = scmp.eq.s32.totalorder %s28, 0
      %p117 = por %p115, %p116
      %p118 = scmp.ne.s32.totalorder %s106, %s107
      %p119 = scmp.eq.s32.totalorder %s29, 1
      %p120 = por %p118, %p119
      %p122 = scmp.ne.s32.totalorder %s107, %s121
      %p123 = scmp.eq.s32.totalorder %s29, 0
      %p124 = por %p122, %p123
      %s126 = sadd.s32 %s125, 1
      %p129 = scmp.eq.s32.totalorder %s23, 1
      %p130 = scmp.ne.s32.totalorder %s125, %s127
      %p131 = scmp.eq.s32.totalorder %s23, 0
      %p132 = por %p130, %p131
      %p133 = scmp.ne.s32.totalorder %s125, %s127
      %p134 = scmp.eq.s32.totalorder %s28, 1
      %p135 = por %p133, %p134
      %p136 = scmp.ne.s32.totalorder %s127, %s128
      %p137 = scmp.eq.s32.totalorder %s28, 0
      %p138 = por %p136, %p137
      %p139 = scmp.ne.s32.totalorder %s127, %s128
      %p140 = scmp.eq.s32.totalorder %s29, 1
      %p141 = por %p139, %p140
      %p143 = scmp.ne.s32.totalorder %s128, %s142
      %p144 = scmp.eq.s32.totalorder %s29, 0
      %p145 = por %p143, %p144
      %s147 = sadd.s32 %s146, 1
      %p150 = scmp.eq.s32.totalorder %s23, 1
      %p151 = scmp.ne.s32.totalorder %s146, %s148
      %p152 = scmp.eq.s32.totalorder %s23, 0
      %p153 = por %p151, %p152
      %p154 = scmp.ne.s32.totalorder %s146, %s148
      %p155 = scmp.eq.s32.totalorder %s28, 1
      %p156 = por %p154, %p155
      %p157 = scmp.ne.s32.totalorder %s148, %s149
      %p158 = scmp.eq.s32.totalorder %s28, 0
      %p159 = por %p157, %p158
      %p160 = scmp.ne.s32.totalorder %s148, %s149
      %p161 = scmp.eq.s32.totalorder %s29, 1
      %p162 = por %p160, %p161
      %p164 = scmp.ne.s32.totalorder %s149, %s163
      %p165 = scmp.eq.s32.totalorder %s29, 0
      %p166 = por %p164, %p165
      %s168 = sadd.s32 %s167, 1
      %p171 = scmp.eq.s32.totalorder %s23, 1
      %p172 = scmp.ne.s32.totalorder %s167, %s169
      %p173 = scmp.eq.s32.totalorder %s23, 0
      %p174 = por %p172, %p173
      %p175 = scmp.ne.s32.totalorder %s167, %s169
      %p176 = scmp.eq.s32.totalorder %s28, 1
      %p177 = por %p175, %p176
      %p178 = scmp.ne.s32.totalorder %s169, %s170
      %p179 = scmp.eq.s32.totalorder %s28, 0
      %p180 = por %p178, %p179
      %p181 = scmp.ne.s32.totalorder %s169, %s170
      %p182 = scmp.eq.s32.totalorder %s29, 1
      %p183 = por %p181, %p182
      %p185 = scmp.ne.s32.totalorder %s170, %s184
      %p186 = scmp.eq.s32.totalorder %s29, 0
      %p187 = por %p185, %p186
      %s188 = ssub.s32 %s23, %s30
      %p189 = scmp.eq.s32.totalorder %s188, 0
      %s191 = sadd.s32 %s190, 1
      %s192 = scalar_select %p189, %s190, %s191
      %p195 = pneg %p189
      %p196 = scmp.eq.s32.totalorder %s23, 1
      %p197 = por %p195, %p196
      %p198 = scmp.ne.s32.totalorder %s190, %s193
      %p199 = scmp.eq.s32.totalorder %s23, 0
      %p200 = por %p198, %p199
      %p201 = scmp.ne.s32.totalorder %s190, %s193
      %p202 = scmp.eq.s32.totalorder %s28, 1
      %p203 = por %p201, %p202
      %p204 = scmp.ne.s32.totalorder %s193, %s194
      %p205 = scmp.eq.s32.totalorder %s28, 0
      %p206 = por %p204, %p205
      %p207 = scmp.ne.s32.totalorder %s193, %s194
      %p208 = scmp.eq.s32.totalorder %s29, 1
      %p209 = por %p207, %p208
      %p211 = scmp.ne.s32.totalorder %s194, %s210
      %p212 = scmp.eq.s32.totalorder %s29, 0
      %p213 = por %p211, %p212
      %p214 = scmp.le.s32.totalorder 1, %s23
      %p215 = scmp.lt.s32.totalorder %s23, 3
      %p216 = pnand %p214, %p215
      %p217 = pneg %p216
      // Predicated region
      $region9: #{tpu_custom_call.1} parent=5 // pred_check
        _
      $region10: #{tpu_custom_call.1} parent=5 // pred_check_branch
        %219 = sbr.rel (%p216) target = $region12
      $region11: #{tpu_custom_call.1} parent=5 // pred_region
        %s220 = ssub.s32 %s23, 1
        // Predicated region
        $region13: #{tpu_custom_call.1} parent=11 // pred_check
          %p221 = pneg %p96
        $region14: #{tpu_custom_call.1} parent=11 // pred_check_branch
          %223 = sbr.rel (%p221) target = $region16
        $region15: #{tpu_custom_call.1} parent=11 // pred_region
          %s225 = ssub.s32 2048, 2048
          %226 = vsyncadd [#allocation6], %s225
          %s227 = sshll.u32 [#allocation7], 4
          %s228 = int_to_ptr.vmem [resolvable:$true] %s227
          %233 = dma.hbm_to_vmem [thread:$0]  %s2, 2048, %s228, [#allocation6], 512, 512, 32
        $region16: #{tpu_custom_call.1} parent=11 // pred_fallthru
          _
        // Predicated region
        $region17: #{tpu_custom_call.1} parent=11 // pred_check
          %p234 = pneg %p117
        $region18: #{tpu_custom_call.1} parent=11 // pred_check_branch
          %236 = sbr.rel (%p234) target = $region20
        $region19: #{tpu_custom_call.1} parent=11 // pred_region
          %s238 = ssub.s32 8192, 8192
          %239 = vsyncadd [#allocation9], %s238
          %s240 = sshll.u32 [#allocation8], 4
          %s241 = int_to_ptr.vmem [resolvable:$true] %s240
          %246 = dma.hbm_to_vmem [thread:$0]  %s3, 8192, %s241, [#allocation9], 256, 256, 16
        $region20: #{tpu_custom_call.1} parent=11 // pred_fallthru
          _
        // Predicated region
        $region21: #{tpu_custom_call.1} parent=11 // pred_check
          %p247 = pneg %p138
        $region22: #{tpu_custom_call.1} parent=11 // pred_check_branch
          %249 = sbr.rel (%p247) target = $region24
        $region23: #{tpu_custom_call.1} parent=11 // pred_region
          _
        $region24: #{tpu_custom_call.1} parent=11 // pred_fallthru
          _
        // Predicated region
        $region25: #{tpu_custom_call.1} parent=11 // pred_check
          %p250 = pneg %p159
        $region26: #{tpu_custom_call.1} parent=11 // pred_check_branch
          %252 = sbr.rel (%p250) target = $region28
        $region27: #{tpu_custom_call.1} parent=11 // pred_region
          _
        $region28: #{tpu_custom_call.1} parent=11 // pred_fallthru
          _
        // Predicated region
        $region29: #{tpu_custom_call.1} parent=11 // pred_check
          %p253 = pneg %p180
        $region30: #{tpu_custom_call.1} parent=11 // pred_check_branch
          %255 = sbr.rel (%p253) target = $region32
        $region31: #{tpu_custom_call.1} parent=11 // pred_region
          _
        $region32: #{tpu_custom_call.1} parent=11 // pred_fallthru
          _
      $region12: #{tpu_custom_call.1} parent=5 // pred_fallthru
        _
      %p256 = scmp.lt.s32.totalorder %s23, 2
      // Predicated region
      $region33: #{tpu_custom_call.1} parent=5 // pred_check
        %p257 = pneg %p256
      $region34: #{tpu_custom_call.1} parent=5 // pred_check_branch
        %259 = sbr.rel (%p257) target = $region36
      $region35: #{tpu_custom_call.1} parent=5 // pred_region
        // Predicated region
        $region37: #{tpu_custom_call.1} parent=35 // pred_check
          %p260 = pneg %p43
        $region38: #{tpu_custom_call.1} parent=35 // pred_check_branch
          %262 = sbr.rel (%p260) target = $region40
        $region39: #{tpu_custom_call.1} parent=35 // pred_region
          %s263 = sand.u32 %s33, 1
          %s264 = scalar_lea.sflag [#allocation3], %s263
          %s265 = sand.u32 %s33, 1
          %s266 = scalar_lea.vmem [#allocation2], %s265
          %s268 = ssub.s32 16, 16
          %269 = vsyncadd %s264, %s268
          %s270 = smul.addr %s23, 16
          %s271 = scalar_lea.hbm %s0, %s270
          %s273 = sshll.u32 %s266, 4
          %s274 = int_to_ptr.vmem [resolvable:$true] %s273
          %276 = dma.hbm_to_vmem [thread:$0]  %s271, 16, %s274, %s264
        $region40: #{tpu_custom_call.1} parent=35 // pred_fallthru
          _
        // Predicated region
        $region41: #{tpu_custom_call.1} parent=35 // pred_check
          %p277 = pneg %p69
        $region42: #{tpu_custom_call.1} parent=35 // pred_check_branch
          %279 = sbr.rel (%p277) target = $region44
        $region43: #{tpu_custom_call.1} parent=35 // pred_region
          %s280 = sand.u32 %s23, 1
          %s281 = scalar_lea.sflag [#allocation6], %s280
          %s282 = sand.u32 %s59, 1
          %s283 = smul.addr %s282, 16
          %s284 = scalar_lea.vmem [#allocation5], %s283
          %s286 = ssub.s32 256, 256
          %287 = vsyncadd %s281, %s286
          %s288 = smul.addr %s23, 2
          %s289 = smul.addr %s288, 128
          %s290 = scalar_lea.hbm %s1, %s289
          %s291 = sshll.u32 %s284, 4
          %s292 = int_to_ptr.vmem [resolvable:$true] %s291
          %297 = dma.hbm_to_vmem [thread:$0]  %s290, 256, %s292, %s281, 128, 128, 8
        $region44: #{tpu_custom_call.1} parent=35 // pred_fallthru
          _
      $region36: #{tpu_custom_call.1} parent=5 // pred_fallthru
        _
      %p298 = scmp.le.s32.totalorder 1, %s23
      %p299 = scmp.lt.s32.totalorder %s23, 3
      %p300 = pnand %p298, %p299
      %p301 = pneg %p300
      // Predicated region
      $region45: #{tpu_custom_call.1} parent=5 // pred_check
        _
      $region46: #{tpu_custom_call.1} parent=5 // pred_check_branch
        %303 = sbr.rel (%p300) target = $region48
      $region47: #{tpu_custom_call.1} parent=5 // pred_region
        %s304 = ssub.s32 %s23, 1
        %s305 = sand.u32 %s36, 1
        %s306 = scalar_lea.sflag [#allocation3], %s305
        %s307 = sand.u32 %s36, 1
        %s308 = scalar_lea.vmem [#allocation2], %s307
        // Predicated region
        $region49: #{tpu_custom_call.1} parent=47 // pred_check
          %p309 = pneg %p49
        $region50: #{tpu_custom_call.1} parent=47 // pred_check_branch
          %311 = sbr.rel (%p309) target = $region52
        $region51: #{tpu_custom_call.1} parent=47 // pred_region
          %312 = dma.done %s306, 16
        $region52: #{tpu_custom_call.1} parent=47 // pred_fallthru
          _
        %s313 = sand.u32 %s28, 1
        %s314 = scalar_lea.sflag [#allocation6], %s313
        %s315 = sand.u32 %s62, 1
        %s316 = smul.addr %s315, 16
        %s317 = scalar_lea.vmem [#allocation5], %s316
        // Predicated region
        $region53: #{tpu_custom_call.1} parent=47 // pred_check
          %p318 = pneg %p75
        $region54: #{tpu_custom_call.1} parent=47 // pred_check_branch
          %320 = sbr.rel (%p318) target = $region56
        $region55: #{tpu_custom_call.1} parent=47 // pred_region
          %321 = dma.done %s314, 256
        $region56: #{tpu_custom_call.1} parent=47 // pred_fallthru
          _
        // Predicated region
        $region57: #{tpu_custom_call.1} parent=47 // pred_check
          %p322 = pneg %p96
        $region58: #{tpu_custom_call.1} parent=47 // pred_check_branch
          %324 = sbr.rel (%p322) target = $region60
        $region59: #{tpu_custom_call.1} parent=47 // pred_region
          %325 = dma.done [#allocation6], 2048
        $region60: #{tpu_custom_call.1} parent=47 // pred_fallthru
          _
        // Predicated region
        $region61: #{tpu_custom_call.1} parent=47 // pred_check
          %p326 = pneg %p117
        $region62: #{tpu_custom_call.1} parent=47 // pred_check_branch
          %328 = sbr.rel (%p326) target = $region64
        $region63: #{tpu_custom_call.1} parent=47 // pred_region
          %329 = dma.done [#allocation9], 8192
        $region64: #{tpu_custom_call.1} parent=47 // pred_fallthru
          _
        %s330 = sand.u32 %s36, 1
        %s331 = scalar_lea.sflag [#allocation3], %s330
        %s332 = sand.u32 %s36, 1
        %s333 = scalar_lea.vmem [#allocation2], %s332
        %p334 = pneg %p49
        %p335 = pneg %p46
        %s336 = sand.u32 %s28, 1
        %s337 = scalar_lea.sflag [#allocation6], %s336
        %s338 = sand.u32 %s62, 1
        %s339 = smul.addr %s338, 16
        %s340 = scalar_lea.vmem [#allocation5], %s339
        %p341 = pneg %p75
        %p342 = pneg %p72
        %p343 = pneg %p96
        %p344 = pneg %p93
        %p345 = pneg %p117
        %p346 = pneg %p114
        %p347 = pneg %p138
        %p348 = pneg %p135
        %p349 = pneg %p159
        %p350 = pneg %p156
        %p351 = pneg %p180
        %p352 = pneg %p177
        %p353 = pneg %p206
        %p354 = pneg %p203
        %s355 = sand.u32 %s193, 1
        %s356 = scalar_lea.sflag [#allocation4], %s355
        %s357 = sand.u32 %s193, 1
        %s358 = scalar_lea.vmem [#allocation10], %s357
        %v359 = vld [vmem:[%s308] sm:$0x1]
        %v360 = vlaneseq
        %v361 = vshrl.u32 %v360, 7
        %v362 = vlaneseq
        %v363 = vshrl.u32 %v362, 7
        %v364 = vsub.s32 0, %v363
        %v365 = vrot.slane %v359, %v364
        %vm366 = vcmp.eq.s32.totalorder %v361, %v365
        %vm367 = vcmp.ge.s32.totalorder %v359, 0
        %v368 = vsel %vm367, 1, 0
        %v369 = vlaneseq
        %v370 = vshrl.u32 %v369, 7
        %v371 = vsub.s32 0, %v370
        %v372 = vrot.slane %v368, %v371
        %vm373 = vcmp.eq.s32.totalorder %v372, 1
        %vm374 = vmand %vm366, %vm373
        %v375 = vsel %vm374, 1, 0
        %v376 = vcvt.s32.f32 %v375
        %v377 = vld [vmem:[%s317] sm:$0xff]
        %v378 = vld [vmem:[%s317 + $0x8] sm:$0xff]
        %vm379 = vcmask 130048
        %v381 = vsel %vm379, %v376, 0
        %383 = vmatprep.subr.mxu0 0.0
        %384 = vmatpush1.msra.mxu0 0.0
        %385 = vmatprep.subr.mxu0 0.0
        %386 = vmatpush1.msra.mxu0 0.0
        %387 = vmatprep.subr.mxu0 0.0
        %388 = vmatpush1.msra.mxu0 0.0
        %389 = vmatprep.subr.mxu0 0.0
        %390 = vmatpush1.msra.mxu0 0.0
        %391 = vmatprep.subr.mxu0 0.0
        %392 = vmatpush1.msra.mxu0 0.0
        %393 = vmatprep.subr.mxu0 0.0
        %394 = vmatpush1.msra.mxu0 0.0
        %395 = vmatprep.subr.mxu0 0.0
        %396 = vmatpush1.msra.mxu0 0.0
        %397 = vmatprep.subr.mxu0 0.0
        %398 = vmatpush1.msra.mxu0 0.0
        %399 = vmatprep.subr.mxu0 0.0
        %400 = vmatpush1.msra.mxu0 0.0
        %401 = vmatprep.subr.mxu0 0.0
        %402 = vmatpush1.msra.mxu0 0.0
        %403 = vmatprep.subr.mxu0 0.0
        %404 = vmatpush1.msra.mxu0 0.0
        %405 = vmatprep.subr.mxu0 0.0
        %406 = vmatpush1.msra.mxu0 0.0
        %407 = vmatprep.subr.mxu0 0.0
        %408 = vmatpush1.msra.mxu0 0.0
        %409 = vmatprep.subr.mxu0 0.0
        %410 = vmatpush1.msra.mxu0 0.0
        %411 = vmatprep.subr.mxu0 0.0
        %412 = vmatpush1.msra.mxu0 %v378
        %413 = vmatprep.subr.mxu0 0.0
        %414 = vmatpush1.msra.mxu0 %v377
        %415 = vmatprep.subr.mxu0 0.0
        %416 = vmatpush2.msra.mxu0 0.0
        %417 = vmatprep.subr.mxu0 0.0
        %418 = vmatpush2.msra.mxu0 0.0
        %419 = vmatprep.subr.mxu0 0.0
        %420 = vmatpush2.msra.mxu0 0.0
        %421 = vmatprep.subr.mxu0 0.0
        %422 = vmatpush2.msra.mxu0 0.0
        %423 = vmatprep.subr.mxu0 0.0
        %424 = vmatpush2.msra.mxu0 0.0
        %425 = vmatprep.subr.mxu0 0.0
        %426 = vmatpush2.msra.mxu0 0.0
        %427 = vmatprep.subr.mxu0 0.0
        %428 = vmatpush2.msra.mxu0 0.0
        %429 = vmatprep.subr.mxu0 0.0
        %430 = vmatpush2.msra.mxu0 0.0
        %431 = vmatprep.subr.mxu0 0.0
        %432 = vmatpush2.msra.mxu0 0.0
        %433 = vmatprep.subr.mxu0 0.0
        %434 = vmatpush2.msra.mxu0 0.0
        %435 = vmatprep.subr.mxu0 0.0
        %436 = vmatpush2.msra.mxu0 0.0
        %437 = vmatprep.subr.mxu0 0.0
        %438 = vmatpush2.msra.mxu0 0.0
        %439 = vmatprep.subr.mxu0 0.0
        %440 = vmatpush2.msra.mxu0 0.0
        %441 = vmatprep.subr.mxu0 0.0
        %442 = vmatpush2.msra.mxu0 0.0
        %443 = vmatprep.subr.mxu0 0.0
        %444 = vmatpush2.msra.mxu0 0.0
        %445 = vmatprep.subr.mxu0 0.0
        %446 = vmatpush2.msra.mxu0 0.0
        %447 = vmatprep.mubr.f32.mxu0 0.0
        %448 = vmatmul.mubr.f32.gmra.mxu0 %v381
        %v449 = vpop.f32.mrf.mxu0
        %v450 = vadd.f32 0.0, %v449
        %v451 = vpop.f32.mrf.mxu0
        %452 = vdwg.mxu0
        %v453 = vsel %vm379, %v376, 0.0
        %454 = vadd.xlane.f32.xlu0 %v453
        %v455 = vpop.xlane.xlu0 %454
        %v456 = vmax.f32 %v455, 1.0
        %v457 = vrcp.pop %v456
        %v458 = vmul.f32 %v450, %v457
        %v459 = vld [vmem:[#allocation7] sm:$0xff]
        %v460 = vld [vmem:[#allocation7 + $0x8] sm:$0xff]
        %v461 = vld [vmem:[#allocation7 + $0x10] sm:$0xff]
        %v462 = vld [vmem:[#allocation7 + $0x18] sm:$0xff]
        %v463 = vld [vmem:[#allocation7 + $0x20] sm:$0xff]
        %v464 = vld [vmem:[#allocation7 + $0x28] sm:$0xff]
        %v465 = vld [vmem:[#allocation7 + $0x30] sm:$0xff]
        %v466 = vld [vmem:[#allocation7 + $0x38] sm:$0xff]
        %v467 = vld [vmem:[#allocation7 + $0x40] sm:$0xff]
        %v468 = vld [vmem:[#allocation7 + $0x48] sm:$0xff]
        %v469 = vld [vmem:[#allocation7 + $0x50] sm:$0xff]
        %v470 = vld [vmem:[#allocation7 + $0x58] sm:$0xff]
        %v471 = vld [vmem:[#allocation7 + $0x60] sm:$0xff]
        %v472 = vld [vmem:[#allocation7 + $0x68] sm:$0xff]
        %v473 = vld [vmem:[#allocation7 + $0x70] sm:$0xff]
        %v474 = vld [vmem:[#allocation7 + $0x78] sm:$0xff]
        %vm475 = vcmask 261120
        %v477 = vsel %vm475, %v458, 0
        %479 = vmatprep.subr.mxu0 0.0
        %480 = vmatpush1.msra.mxu0 0.0
        %481 = vmatprep.subr.mxu0 0.0
        %482 = vmatpush1.msra.mxu0 0.0
        %483 = vmatprep.subr.mxu0 0.0
        %484 = vmatpush1.msra.mxu0 0.0
        %485 = vmatprep.subr.mxu0 0.0
        %486 = vmatpush1.msra.mxu0 0.0
        %487 = vmatprep.subr.mxu0 0.0
        %488 = vmatpush1.msra.mxu0 0.0
        %489 = vmatprep.subr.mxu0 0.0
        %490 = vmatpush1.msra.mxu0 0.0
        %491 = vmatprep.subr.mxu0 0.0
        %492 = vmatpush1.msra.mxu0 0.0
        %493 = vmatprep.subr.mxu0 0.0
        %494 = vmatpush1.msra.mxu0 0.0
        %495 = vmatprep.subr.mxu0 0.0
        %496 = vmatpush1.msra.mxu0 0.0
        %497 = vmatprep.subr.mxu0 0.0
        %498 = vmatpush1.msra.mxu0 0.0
        %499 = vmatprep.subr.mxu0 0.0
        %500 = vmatpush1.msra.mxu0 0.0
        %501 = vmatprep.subr.mxu0 0.0
        %502 = vmatpush1.msra.mxu0 0.0
        %503 = vmatprep.subr.mxu0 %v472
        %504 = vmatpush1.msra.mxu0 %v471
        %505 = vmatprep.subr.mxu0 %v468
        %506 = vmatpush1.msra.mxu0 %v467
        %507 = vmatprep.subr.mxu0 %v464
        %508 = vmatpush1.msra.mxu0 %v463
        %509 = vmatprep.subr.mxu0 %v460
        %510 = vmatpush1.msra.mxu0 %v459
        %511 = vmatprep.subr.mxu0 0.0
        %512 = vmatpush2.msra.mxu0 0.0
        %513 = vmatprep.subr.mxu0 0.0
        %514 = vmatpush2.msra.mxu0 0.0
        %515 = vmatprep.subr.mxu0 0.0
        %516 = vmatpush2.msra.mxu0 0.0
        %517 = vmatprep.subr.mxu0 0.0
        %518 = vmatpush2.msra.mxu0 0.0
        %519 = vmatprep.subr.mxu0 0.0
        %520 = vmatpush2.msra.mxu0 0.0
        %521 = vmatprep.subr.mxu0 0.0
        %522 = vmatpush2.msra.mxu0 0.0
        %523 = vmatprep.subr.mxu0 0.0
        %524 = vmatpush2.msra.mxu0 0.0
        %525 = vmatprep.subr.mxu0 0.0
        %526 = vmatpush2.msra.mxu0 0.0
        %527 = vmatprep.subr.mxu0 0.0
        %528 = vmatpush2.msra.mxu0 0.0
        %529 = vmatprep.subr.mxu0 0.0
        %530 = vmatpush2.msra.mxu0 0.0
        %531 = vmatprep.subr.mxu0 0.0
        %532 = vmatpush2.msra.mxu0 0.0
        %533 = vmatprep.subr.mxu0 0.0
        %534 = vmatpush2.msra.mxu0 0.0
        %535 = vmatprep.subr.mxu0 0.0
        %536 = vmatpush2.msra.mxu0 0.0
        %537 = vmatprep.subr.mxu0 0.0
        %538 = vmatpush2.msra.mxu0 0.0
        %539 = vmatprep.subr.mxu0 0.0
        %540 = vmatpush2.msra.mxu0 0.0
        %541 = vmatprep.subr.mxu0 0.0
        %542 = vmatpush2.msra.mxu0 0.0
        %543 = vmatprep.mubr.f32.mxu0 0.0
        %544 = vmatmul.mubr.f32.gmra.mxu0 %v477
        %v545 = vpop.f32.mrf.mxu0
        %v546 = vadd.f32 0.0, %v545
        %v547 = vpop.f32.mrf.mxu0
        %v548 = vadd.f32 0.0, %v547
        %549 = vdwg.mxu0
        %550 = vmatprep.subr.mxu0 0.0
        %551 = vmatpush1.msra.mxu0 0.0
        %552 = vmatprep.subr.mxu0 0.0
        %553 = vmatpush1.msra.mxu0 0.0
        %554 = vmatprep.subr.mxu0 0.0
        %555 = vmatpush1.msra.mxu0 0.0
        %556 = vmatprep.subr.mxu0 0.0
        %557 = vmatpush1.msra.mxu0 0.0
        %558 = vmatprep.subr.mxu0 0.0
        %559 = vmatpush1.msra.mxu0 0.0
        %560 = vmatprep.subr.mxu0 0.0
        %561 = vmatpush1.msra.mxu0 0.0
        %562 = vmatprep.subr.mxu0 0.0
        %563 = vmatpush1.msra.mxu0 0.0
        %564 = vmatprep.subr.mxu0 0.0
        %565 = vmatpush1.msra.mxu0 0.0
        %566 = vmatprep.subr.mxu0 0.0
        %567 = vmatpush1.msra.mxu0 0.0
        %568 = vmatprep.subr.mxu0 0.0
        %569 = vmatpush1.msra.mxu0 0.0
        %570 = vmatprep.subr.mxu0 0.0
        %571 = vmatpush1.msra.mxu0 0.0
        %572 = vmatprep.subr.mxu0 0.0
        %573 = vmatpush1.msra.mxu0 0.0
        %574 = vmatprep.subr.mxu0 %v474
        %575 = vmatpush1.msra.mxu0 %v473
        %576 = vmatprep.subr.mxu0 %v470
        %577 = vmatpush1.msra.mxu0 %v469
        %578 = vmatprep.subr.mxu0 %v466
        %579 = vmatpush1.msra.mxu0 %v465
        %580 = vmatprep.subr.mxu0 %v462
        %581 = vmatpush1.msra.mxu0 %v461
        %582 = vmatprep.subr.mxu0 0.0
        %583 = vmatpush2.msra.mxu0 0.0
        %584 = vmatprep.subr.mxu0 0.0
        %585 = vmatpush2.msra.mxu0 0.0
        %586 = vmatprep.subr.mxu0 0.0
        %587 = vmatpush2.msra.mxu0 0.0
        %588 = vmatprep.subr.mxu0 0.0
        %589 = vmatpush2.msra.mxu0 0.0
        %590 = vmatprep.subr.mxu0 0.0
        %591 = vmatpush2.msra.mxu0 0.0
        %592 = vmatprep.subr.mxu0 0.0
        %593 = vmatpush2.msra.mxu0 0.0
        %594 = vmatprep.subr.mxu0 0.0
        %595 = vmatpush2.msra.mxu0 0.0
        %596 = vmatprep.subr.mxu0 0.0
        %597 = vmatpush2.msra.mxu0 0.0
        %598 = vmatprep.subr.mxu0 0.0
        %599 = vmatpush2.msra.mxu0 0.0
        %600 = vmatprep.subr.mxu0 0.0
        %601 = vmatpush2.msra.mxu0 0.0
        %602 = vmatprep.subr.mxu0 0.0
        %603 = vmatpush2.msra.mxu0 0.0
        %604 = vmatprep.subr.mxu0 0.0
        %605 = vmatpush2.msra.mxu0 0.0
        %606 = vmatprep.subr.mxu0 0.0
        %607 = vmatpush2.msra.mxu0 0.0
        %608 = vmatprep.subr.mxu0 0.0
        %609 = vmatpush2.msra.mxu0 0.0
        %610 = vmatprep.subr.mxu0 0.0
        %611 = vmatpush2.msra.mxu0 0.0
        %612 = vmatprep.subr.mxu0 0.0
        %613 = vmatpush2.msra.mxu0 0.0
        %614 = vmatprep.mubr.f32.mxu0 0.0
        %615 = vmatmul.mubr.f32.gmra.mxu0 %v477
        %v616 = vpop.f32.mrf.mxu0
        %v617 = vadd.f32 0.0, %v616
        %v618 = vpop.f32.mrf.mxu0
        %v619 = vadd.f32 0.0, %v618
        %620 = vdwg.mxu0
        %v621 = vld [vmem:[%s4] sm:$0x1]
        %v622 = vlaneseq
        %v623 = vshrl.u32 %v622, 7
        %v624 = vsub.s32 0, %v623
        %v625 = vrot.slane %v621, %v624
        %v626 = vadd.f32 %v548, %v625
        %v627 = vld [vmem:[%s4 + $0x1] sm:$0x1]
        %v628 = vlaneseq
        %v629 = vshrl.u32 %v628, 7
        %v630 = vsub.s32 0, %v629
        %v631 = vrot.slane %v627, %v630
        %v632 = vadd.f32 %v619, %v631
        %v633 = vld [vmem:[%s5] sm:$0x3]
        %v634 = vld [vmem:[%s6] sm:$0x1]
        %v635 = vld [vmem:[%s6 + $0x1] sm:$0x1]
        %v636 = vlaneseq
        %v637 = vand.u32 %v636, 127
        %v639 = vcombine.high %v546, %v546
        %v641 = vunpack.c.l.s4 1966171168
        %v642 = vunpack.c.0.s8 %v641
        %v643 = vlaneseq
        %v644 = vshrl.u32 %v643, 7
        %v645 = vsub.s32 %v642, %v644
        %v646 = vrot.slane %v546, %v645
        %v648 = vunpack.c.l.s4 1966171168
        %v649 = vunpack.c.0.s8 %v648
        %v650 = vlaneseq
        %v651 = vshrl.u32 %v650, 7
        %v652 = vsub.s32 %v649, %v651
        %v653 = vrot.slane %v639, %v652
        %v654 = vcombine.high %v646, %v646
        %v655 = vcombine.high %v653, %v653
        %v657 = vunpack.c.l.s4 1966171168
        %v658 = vunpack.c.0.s8 %v657
        %v659 = vlaneseq
        %v660 = vshrl.u32 %v659, 7
        %v661 = vsub.s32 %v658, %v660
        %v662 = vrot.slane %v646, %v661
        %v664 = vunpack.c.l.s4 1966171168
        %v665 = vunpack.c.0.s8 %v664
        %v666 = vlaneseq
        %v667 = vshrl.u32 %v666, 7
        %v668 = vsub.s32 %v665, %v667
        %v669 = vrot.slane %v653, %v668
        %v671 = vunpack.c.l.s4 1966171168
        %v672 = vunpack.c.0.s8 %v671
        %v673 = vlaneseq
        %v674 = vshrl.u32 %v673, 7
        %v675 = vsub.s32 %v672, %v674
        %v676 = vrot.slane %v654, %v675
        %v678 = vunpack.c.l.s4 1966171168
        %v679 = vunpack.c.0.s8 %v678
        %v680 = vlaneseq
        %v681 = vshrl.u32 %v680, 7
        %v682 = vsub.s32 %v679, %v681
        %v683 = vrot.slane %v655, %v682
        %v684 = vcombine.high %v662, %v662
        %v685 = vcombine.high %v669, %v669
        %v686 = vcombine.high %v676, %v676
        %v687 = vcombine.high %v683, %v683
        %v688 = vlaneseq
        %v689 = vshrl.u32 %v688, 7
        %v690 = vsub.s32 0, %v689
        %v691 = vrot.slane %v662, %v690
        %v692 = vlaneseq
        %v693 = vshrl.u32 %v692, 7
        %v694 = vsub.s32 0, %v693
        %v695 = vrot.slane %v676, %v694
        %v696 = vlaneseq
        %v697 = vshrl.u32 %v696, 7
        %v698 = vsub.s32 0, %v697
        %v699 = vrot.slane %v684, %v698
        %v700 = vlaneseq
        %v701 = vshrl.u32 %v700, 7
        %v702 = vsub.s32 0, %v701
        %v703 = vrot.slane %v686, %v702
        %v704 = vlaneseq
        %v705 = vshrl.u32 %v704, 7
        %v706 = vsub.s32 0, %v705
        %v707 = vrot.slane %v669, %v706
        %v708 = vlaneseq
        %v709 = vshrl.u32 %v708, 7
        %v710 = vsub.s32 0, %v709
        %v711 = vrot.slane %v683, %v710
        %v712 = vlaneseq
        %v713 = vshrl.u32 %v712, 7
        %v714 = vsub.s32 0, %v713
        %v715 = vrot.slane %v685, %v714
        %v716 = vlaneseq
        %v717 = vshrl.u32 %v716, 7
        %v718 = vsub.s32 0, %v717
        %v719 = vrot.slane %v687, %v718
        %v728 = vadd.f32 %v691, %v626
        %v729 = vadd.f32 %v695, %v626
        %v730 = vadd.f32 %v699, %v626
        %v731 = vadd.f32 %v703, %v626
        %v732 = vadd.f32 %v707, %v626
        %v733 = vadd.f32 %v711, %v626
        %v734 = vadd.f32 %v715, %v626
        %v735 = vadd.f32 %v719, %v626
        %v736 = vmax.f32 %v728, 0.0
        %v737 = vmax.f32 %v729, 0.0
        %v738 = vmax.f32 %v730, 0.0
        %v739 = vmax.f32 %v731, 0.0
        %v740 = vmax.f32 %v732, 0.0
        %v741 = vmax.f32 %v733, 0.0
        %v742 = vmax.f32 %v734, 0.0
        %v743 = vmax.f32 %v735, 0.0
        %v745 = vcombine.high %v617, %v617
        %v747 = vunpack.c.l.s4 1966171168
        %v748 = vunpack.c.0.s8 %v747
        %v749 = vlaneseq
        %v750 = vshrl.u32 %v749, 7
        %v751 = vsub.s32 %v748, %v750
        %v752 = vrot.slane %v617, %v751
        %v754 = vunpack.c.l.s4 1966171168
        %v755 = vunpack.c.0.s8 %v754
        %v756 = vlaneseq
        %v757 = vshrl.u32 %v756, 7
        %v758 = vsub.s32 %v755, %v757
        %v759 = vrot.slane %v745, %v758
        %v760 = vcombine.high %v752, %v752
        %v761 = vcombine.high %v759, %v759
        %v763 = vunpack.c.l.s4 1966171168
        %v764 = vunpack.c.0.s8 %v763
        %v765 = vlaneseq
        %v766 = vshrl.u32 %v765, 7
        %v767 = vsub.s32 %v764, %v766
        %v768 = vrot.slane %v752, %v767
        %v770 = vunpack.c.l.s4 1966171168
        %v771 = vunpack.c.0.s8 %v770
        %v772 = vlaneseq
        %v773 = vshrl.u32 %v772, 7
        %v774 = vsub.s32 %v771, %v773
        %v775 = vrot.slane %v759, %v774
        %v777 = vunpack.c.l.s4 1966171168
        %v778 = vunpack.c.0.s8 %v777
        %v779 = vlaneseq
        %v780 = vshrl.u32 %v779, 7
        %v781 = vsub.s32 %v778, %v780
        %v782 = vrot.slane %v760, %v781
        %v784 = vunpack.c.l.s4 1966171168
        %v785 = vunpack.c.0.s8 %v784
        %v786 = vlaneseq
        %v787 = vshrl.u32 %v786, 7
        %v788 = vsub.s32 %v785, %v787
        %v789 = vrot.slane %v761, %v788
        %v790 = vcombine.high %v768, %v768
        %v791 = vcombine.high %v775, %v775
        %v792 = vcombine.high %v782, %v782
        %v793 = vcombine.high %v789, %v789
        %v794 = vlaneseq
        %v795 = vshrl.u32 %v794, 7
        %v796 = vsub.s32 0, %v795
        %v797 = vrot.slane %v768, %v796
        %v798 = vlaneseq
        %v799 = vshrl.u32 %v798, 7
        %v800 = vsub.s32 0, %v799
        %v801 = vrot.slane %v782, %v800
        %v802 = vlaneseq
        %v803 = vshrl.u32 %v802, 7
        %v804 = vsub.s32 0, %v803
        %v805 = vrot.slane %v790, %v804
        %v806 = vlaneseq
        %v807 = vshrl.u32 %v806, 7
        %v808 = vsub.s32 0, %v807
        %v809 = vrot.slane %v792, %v808
        %v810 = vlaneseq
        %v811 = vshrl.u32 %v810, 7
        %v812 = vsub.s32 0, %v811
        %v813 = vrot.slane %v775, %v812
        %v814 = vlaneseq
        %v815 = vshrl.u32 %v814, 7
        %v816 = vsub.s32 0, %v815
        %v817 = vrot.slane %v789, %v816
        %v818 = vlaneseq
        %v819 = vshrl.u32 %v818, 7
        %v820 = vsub.s32 0, %v819
        %v821 = vrot.slane %v791, %v820
        %v822 = vlaneseq
        %v823 = vshrl.u32 %v822, 7
        %v824 = vsub.s32 0, %v823
        %v825 = vrot.slane %v793, %v824
        %v834 = vadd.f32 %v797, %v632
        %v835 = vadd.f32 %v801, %v632
        %v836 = vadd.f32 %v805, %v632
        %v837 = vadd.f32 %v809, %v632
        %v838 = vadd.f32 %v813, %v632
        %v839 = vadd.f32 %v817, %v632
        %v840 = vadd.f32 %v821, %v632
        %v841 = vadd.f32 %v825, %v632
        %v842 = vmax.f32 %v834, 0.0
        %v843 = vmax.f32 %v835, 0.0
        %v844 = vmax.f32 %v836, 0.0
        %v845 = vmax.f32 %v837, 0.0
        %v846 = vmax.f32 %v838, 0.0
        %v847 = vmax.f32 %v839, 0.0
        %v848 = vmax.f32 %v840, 0.0
        %v849 = vmax.f32 %v841, 0.0
        %v850 = vld [vmem:[#allocation8] sm:$0xff]
        %v851 = vld [vmem:[#allocation8 + $0x8] sm:$0xff]
        %v852 = vld [vmem:[#allocation8 + $0x10] sm:$0xff]
        %v853 = vld [vmem:[#allocation8 + $0x18] sm:$0xff]
        %v854 = vld [vmem:[#allocation8 + $0x20] sm:$0xff]
        %v855 = vld [vmem:[#allocation8 + $0x28] sm:$0xff]
        %v856 = vld [vmem:[#allocation8 + $0x30] sm:$0xff]
        %v857 = vld [vmem:[#allocation8 + $0x38] sm:$0xff]
        %v858 = vld [vmem:[#allocation8 + $0x40] sm:$0xff]
        %v859 = vld [vmem:[#allocation8 + $0x48] sm:$0xff]
        %v860 = vld [vmem:[#allocation8 + $0x50] sm:$0xff]
        %v861 = vld [vmem:[#allocation8 + $0x58] sm:$0xff]
        %v862 = vld [vmem:[#allocation8 + $0x60] sm:$0xff]
        %v863 = vld [vmem:[#allocation8 + $0x68] sm:$0xff]
        %v864 = vld [vmem:[#allocation8 + $0x70] sm:$0xff]
        %v865 = vld [vmem:[#allocation8 + $0x78] sm:$0xff]
        %v866 = vld [vmem:[#allocation8 + $0x80] sm:$0xff]
        %v867 = vld [vmem:[#allocation8 + $0x88] sm:$0xff]
        %v868 = vld [vmem:[#allocation8 + $0x90] sm:$0xff]
        %v869 = vld [vmem:[#allocation8 + $0x98] sm:$0xff]
        %v870 = vld [vmem:[#allocation8 + $0xa0] sm:$0xff]
        %v871 = vld [vmem:[#allocation8 + $0xa8] sm:$0xff]
        %v872 = vld [vmem:[#allocation8 + $0xb0] sm:$0xff]
        %v873 = vld [vmem:[#allocation8 + $0xb8] sm:$0xff]
        %v874 = vld [vmem:[#allocation8 + $0xc0] sm:$0xff]
        %v875 = vld [vmem:[#allocation8 + $0xc8] sm:$0xff]
        %v876 = vld [vmem:[#allocation8 + $0xd0] sm:$0xff]
        %v877 = vld [vmem:[#allocation8 + $0xd8] sm:$0xff]
        %v878 = vld [vmem:[#allocation8 + $0xe0] sm:$0xff]
        %v879 = vld [vmem:[#allocation8 + $0xe8] sm:$0xff]
        %v880 = vld [vmem:[#allocation8 + $0xf0] sm:$0xff]
        %v881 = vld [vmem:[#allocation8 + $0xf8] sm:$0xff]
        %v882 = vld [vmem:[#allocation8 + $0x100] sm:$0xff]
        %v883 = vld [vmem:[#allocation8 + $0x108] sm:$0xff]
        %v884 = vld [vmem:[#allocation8 + $0x110] sm:$0xff]
        %v885 = vld [vmem:[#allocation8 + $0x118] sm:$0xff]
        %v886 = vld [vmem:[#allocation8 + $0x120] sm:$0xff]
        %v887 = vld [vmem:[#allocation8 + $0x128] sm:$0xff]
        %v888 = vld [vmem:[#allocation8 + $0x130] sm:$0xff]
        %v889 = vld [vmem:[#allocation8 + $0x138] sm:$0xff]
        %v890 = vld [vmem:[#allocation8 + $0x140] sm:$0xff]
        %v891 = vld [vmem:[#allocation8 + $0x148] sm:$0xff]
        %v892 = vld [vmem:[#allocation8 + $0x150] sm:$0xff]
        %v893 = vld [vmem:[#allocation8 + $0x158] sm:$0xff]
        %v894 = vld [vmem:[#allocation8 + $0x160] sm:$0xff]
        %v895 = vld [vmem:[#allocation8 + $0x168] sm:$0xff]
        %v896 = vld [vmem:[#allocation8 + $0x170] sm:$0xff]
        %v897 = vld [vmem:[#allocation8 + $0x178] sm:$0xff]
        %v898 = vld [vmem:[#allocation8 + $0x180] sm:$0xff]
        %v899 = vld [vmem:[#allocation8 + $0x188] sm:$0xff]
        %v900 = vld [vmem:[#allocation8 + $0x190] sm:$0xff]
        %v901 = vld [vmem:[#allocation8 + $0x198] sm:$0xff]
        %v902 = vld [vmem:[#allocation8 + $0x1a0] sm:$0xff]
        %v903 = vld [vmem:[#allocation8 + $0x1a8] sm:$0xff]
        %v904 = vld [vmem:[#allocation8 + $0x1b0] sm:$0xff]
        %v905 = vld [vmem:[#allocation8 + $0x1b8] sm:$0xff]
        %v906 = vld [vmem:[#allocation8 + $0x1c0] sm:$0xff]
        %v907 = vld [vmem:[#allocation8 + $0x1c8] sm:$0xff]
        %v908 = vld [vmem:[#allocation8 + $0x1d0] sm:$0xff]
        %v909 = vld [vmem:[#allocation8 + $0x1d8] sm:$0xff]
        %v910 = vld [vmem:[#allocation8 + $0x1e0] sm:$0xff]
        %v911 = vld [vmem:[#allocation8 + $0x1e8] sm:$0xff]
        %v912 = vld [vmem:[#allocation8 + $0x1f0] sm:$0xff]
        %v913 = vld [vmem:[#allocation8 + $0x1f8] sm:$0xff]
        %v915 = vlaneseq
        %v916 = vshrl.u32 %v915, 7
        %v917 = vsub.s32 0, %v916
        %v918 = vrot.slane %v633, %v917
        %v919 = vlaneseq
        %v920 = vshrl.u32 %v919, 7
        %v921 = vsub.s32 1, %v920
        %v922 = vrot.slane %v633, %v921
        %925 = vmatprep.subr.mxu0 %v881
        %926 = vmatpush1.msra.mxu0 %v880
        %927 = vmatprep.subr.mxu0 %v879
        %928 = vmatpush1.msra.mxu0 %v878
        %929 = vmatprep.subr.mxu0 %v877
        %930 = vmatpush1.msra.mxu0 %v876
        %931 = vmatprep.subr.mxu0 %v875
        %932 = vmatpush1.msra.mxu0 %v874
        %933 = vmatprep.subr.mxu0 %v873
        %934 = vmatpush1.msra.mxu0 %v872
        %935 = vmatprep.subr.mxu0 %v871
        %936 = vmatpush1.msra.mxu0 %v870
        %937 = vmatprep.subr.mxu0 %v869
        %938 = vmatpush1.msra.mxu0 %v868
        %939 = vmatprep.subr.mxu0 %v867
        %940 = vmatpush1.msra.mxu0 %v866
        %941 = vmatprep.subr.mxu0 %v865
        %942 = vmatpush1.msra.mxu0 %v864
        %943 = vmatprep.subr.mxu0 %v863
        %944 = vmatpush1.msra.mxu0 %v862
        %945 = vmatprep.subr.mxu0 %v861
        %946 = vmatpush1.msra.mxu0 %v860
        %947 = vmatprep.subr.mxu0 %v859
        %948 = vmatpush1.msra.mxu0 %v858
        %949 = vmatprep.subr.mxu0 %v857
        %950 = vmatpush1.msra.mxu0 %v856
        %951 = vmatprep.subr.mxu0 %v855
        %952 = vmatpush1.msra.mxu0 %v854
        %953 = vmatprep.subr.mxu0 %v853
        %954 = vmatpush1.msra.mxu0 %v852
        %955 = vmatprep.subr.mxu0 %v851
        %956 = vmatpush1.msra.mxu0 %v850
        %957 = vmatprep.subr.mxu0 %v913
        %958 = vmatpush2.msra.mxu0 %v912
        %959 = vmatprep.subr.mxu0 %v911
        %960 = vmatpush2.msra.mxu0 %v910
        %961 = vmatprep.subr.mxu0 %v909
        %962 = vmatpush2.msra.mxu0 %v908
        %963 = vmatprep.subr.mxu0 %v907
        %964 = vmatpush2.msra.mxu0 %v906
        %965 = vmatprep.subr.mxu0 %v905
        %966 = vmatpush2.msra.mxu0 %v904
        %967 = vmatprep.subr.mxu0 %v903
        %968 = vmatpush2.msra.mxu0 %v902
        %969 = vmatprep.subr.mxu0 %v901
        %970 = vmatpush2.msra.mxu0 %v900
        %971 = vmatprep.subr.mxu0 %v899
        %972 = vmatpush2.msra.mxu0 %v898
        %973 = vmatprep.subr.mxu0 %v897
        %974 = vmatpush2.msra.mxu0 %v896
        %975 = vmatprep.subr.mxu0 %v895
        %976 = vmatpush2.msra.mxu0 %v894
        %977 = vmatprep.subr.mxu0 %v893
        %978 = vmatpush2.msra.mxu0 %v892
        %979 = vmatprep.subr.mxu0 %v891
        %980 = vmatpush2.msra.mxu0 %v890
        %981 = vmatprep.subr.mxu0 %v889
        %982 = vmatpush2.msra.mxu0 %v888
        %983 = vmatprep.subr.mxu0 %v887
        %984 = vmatpush2.msra.mxu0 %v886
        %985 = vmatprep.subr.mxu0 %v885
        %986 = vmatpush2.msra.mxu0 %v884
        %987 = vmatprep.subr.mxu0 %v883
        %988 = vmatpush2.msra.mxu0 %v882
        %989 = vmatprep.mubr.f32.mxu0 %v842
        %990 = vmatmul.mubr.f32.gmra.mxu0 %v736
        %v991 = vpop.f32.mrf.mxu0
        %v992 = vadd.f32 %v918, %v991
        %v993 = vpop.f32.mrf.mxu0
        %v994 = vadd.f32 %v922, %v993
        %995 = vmatprep.mubr.f32.mxu0 %v843
        %996 = vmatmul.mubr.f32.gmra.mxu0 %v737
        %v997 = vpop.f32.mrf.mxu0
        %v998 = vadd.f32 %v918, %v997
        %v999 = vpop.f32.mrf.mxu0
        %v1000 = vadd.f32 %v922, %v999
        %1001 = vmatprep.mubr.f32.mxu0 %v844
        %1002 = vmatmul.mubr.f32.gmra.mxu0 %v738
        %v1003 = vpop.f32.mrf.mxu0
        %v1004 = vadd.f32 %v918, %v1003
        %v1005 = vpop.f32.mrf.mxu0
        %v1006 = vadd.f32 %v922, %v1005
        %1007 = vmatprep.mubr.f32.mxu0 %v845
        %1008 = vmatmul.mubr.f32.gmra.mxu0 %v739
        %v1009 = vpop.f32.mrf.mxu0
        %v1010 = vadd.f32 %v918, %v1009
        %v1011 = vpop.f32.mrf.mxu0
        %v1012 = vadd.f32 %v922, %v1011
        %1013 = vmatprep.mubr.f32.mxu0 %v846
        %1014 = vmatmul.mubr.f32.gmra.mxu0 %v740
        %v1015 = vpop.f32.mrf.mxu0
        %v1016 = vadd.f32 %v918, %v1015
        %v1017 = vpop.f32.mrf.mxu0
        %v1018 = vadd.f32 %v922, %v1017
        %1019 = vmatprep.mubr.f32.mxu0 %v847
        %1020 = vmatmul.mubr.f32.gmra.mxu0 %v741
        %v1021 = vpop.f32.mrf.mxu0
        %v1022 = vadd.f32 %v918, %v1021
        %v1023 = vpop.f32.mrf.mxu0
        %v1024 = vadd.f32 %v922, %v1023
        %1025 = vmatprep.mubr.f32.mxu0 %v848
        %1026 = vmatmul.mubr.f32.gmra.mxu0 %v742
        %v1027 = vpop.f32.mrf.mxu0
        %v1028 = vadd.f32 %v918, %v1027
        %v1029 = vpop.f32.mrf.mxu0
        %v1030 = vadd.f32 %v922, %v1029
        %1031 = vmatprep.mubr.f32.mxu0 %v849
        %1032 = vmatmul.mubr.f32.gmra.mxu0 %v743
        %v1033 = vpop.f32.mrf.mxu0
        %v1034 = vadd.f32 %v918, %v1033
        %v1035 = vpop.f32.mrf.mxu0
        %v1036 = vadd.f32 %v922, %v1035
        %1037 = vdwg.mxu0
        %v1038 = vmax.f32 %v992, 0.0
        %v1039 = vmax.f32 %v994, 0.0
        %v1040 = vmax.f32 %v998, 0.0
        %v1041 = vmax.f32 %v1000, 0.0
        %v1042 = vmax.f32 %v1004, 0.0
        %v1043 = vmax.f32 %v1006, 0.0
        %v1044 = vmax.f32 %v1010, 0.0
        %v1045 = vmax.f32 %v1012, 0.0
        %v1046 = vmax.f32 %v1016, 0.0
        %v1047 = vmax.f32 %v1018, 0.0
        %v1048 = vmax.f32 %v1022, 0.0
        %v1049 = vmax.f32 %v1024, 0.0
        %v1050 = vmax.f32 %v1028, 0.0
        %v1051 = vmax.f32 %v1030, 0.0
        %v1052 = vmax.f32 %v1034, 0.0
        %v1053 = vmax.f32 %v1036, 0.0
        %v1054 = vlaneseq
        %v1055 = vshrl.u32 %v1054, 7
        %v1056 = vsub.s32 0, %v1055
        %v1057 = vrot.slane %v634, %v1056
        %v1058 = vmul.f32 %v1038, %v1057
        %v1059 = vmul.f32 %v1040, %v1057
        %v1060 = vmul.f32 %v1042, %v1057
        %v1061 = vmul.f32 %v1044, %v1057
        %v1062 = vmul.f32 %v1046, %v1057
        %v1063 = vmul.f32 %v1048, %v1057
        %v1064 = vmul.f32 %v1050, %v1057
        %v1065 = vmul.f32 %v1052, %v1057
        %1066 = vadd.xlane.f32.xlu0 %v1058
        %v1067 = vpop.xlane.xlu0 %1066
        %1068 = vadd.xlane.f32.xlu0 %v1059
        %v1069 = vpop.xlane.xlu0 %1068
        %1070 = vadd.xlane.f32.xlu0 %v1060
        %v1071 = vpop.xlane.xlu0 %1070
        %1072 = vadd.xlane.f32.xlu0 %v1061
        %v1073 = vpop.xlane.xlu0 %1072
        %1074 = vadd.xlane.f32.xlu0 %v1062
        %v1075 = vpop.xlane.xlu0 %1074
        %1076 = vadd.xlane.f32.xlu0 %v1063
        %v1077 = vpop.xlane.xlu0 %1076
        %1078 = vadd.xlane.f32.xlu0 %v1064
        %v1079 = vpop.xlane.xlu0 %1078
        %1080 = vadd.xlane.f32.xlu0 %v1065
        %v1081 = vpop.xlane.xlu0 %1080
        %v1082 = vlaneseq
        %v1083 = vshrl.u32 %v1082, 7
        %v1084 = vsub.s32 0, %v1083
        %v1085 = vrot.slane %v635, %v1084
        %v1086 = vmul.f32 %v1039, %v1085
        %v1087 = vmul.f32 %v1041, %v1085
        %v1088 = vmul.f32 %v1043, %v1085
        %v1089 = vmul.f32 %v1045, %v1085
        %v1090 = vmul.f32 %v1047, %v1085
        %v1091 = vmul.f32 %v1049, %v1085
        %v1092 = vmul.f32 %v1051, %v1085
        %v1093 = vmul.f32 %v1053, %v1085
        %1094 = vadd.xlane.f32.xlu0 %v1086
        %v1095 = vpop.xlane.xlu0 %1094
        %1096 = vadd.xlane.f32.xlu0 %v1087
        %v1097 = vpop.xlane.xlu0 %1096
        %1098 = vadd.xlane.f32.xlu0 %v1088
        %v1099 = vpop.xlane.xlu0 %1098
        %1100 = vadd.xlane.f32.xlu0 %v1089
        %v1101 = vpop.xlane.xlu0 %1100
        %1102 = vadd.xlane.f32.xlu0 %v1090
        %v1103 = vpop.xlane.xlu0 %1102
        %1104 = vadd.xlane.f32.xlu0 %v1091
        %v1105 = vpop.xlane.xlu0 %1104
        %1106 = vadd.xlane.f32.xlu0 %v1092
        %v1107 = vpop.xlane.xlu0 %1106
        %1108 = vadd.xlane.f32.xlu0 %v1093
        %v1109 = vpop.xlane.xlu0 %1108
        %vm1110 = vcmp.le.s32.totalorder %v361, %v637
        %v1119 = vlaneseq
        %v1120 = vshrl.u32 %v1119, 7
        %v1121 = vsub.s32 %v637, %v1120
        %v1122 = vrot.slane %v1067, %v1121
        %v1123 = vlaneseq
        %v1124 = vshrl.u32 %v1123, 7
        %v1125 = vsub.s32 %v637, %v1124
        %v1126 = vrot.slane %v1069, %v1125
        %v1127 = vlaneseq
        %v1128 = vshrl.u32 %v1127, 7
        %v1129 = vsub.s32 %v637, %v1128
        %v1130 = vrot.slane %v1071, %v1129
        %v1131 = vlaneseq
        %v1132 = vshrl.u32 %v1131, 7
        %v1133 = vsub.s32 %v637, %v1132
        %v1134 = vrot.slane %v1073, %v1133
        %v1135 = vlaneseq
        %v1136 = vshrl.u32 %v1135, 7
        %v1137 = vsub.s32 %v637, %v1136
        %v1138 = vrot.slane %v1075, %v1137
        %v1139 = vlaneseq
        %v1140 = vshrl.u32 %v1139, 7
        %v1141 = vsub.s32 %v637, %v1140
        %v1142 = vrot.slane %v1077, %v1141
        %v1143 = vlaneseq
        %v1144 = vshrl.u32 %v1143, 7
        %v1145 = vsub.s32 %v637, %v1144
        %v1146 = vrot.slane %v1079, %v1145
        %v1147 = vlaneseq
        %v1148 = vshrl.u32 %v1147, 7
        %v1149 = vsub.s32 %v637, %v1148
        %v1150 = vrot.slane %v1081, %v1149
        %vm1151 = vcmask 1041409
        %v1152 = vsel %vm1151, %v1126, %v1122
        %vm1153 = vcmask 1042434
        %v1154 = vsel %vm1153, %v1130, %v1152
        %vm1155 = vcmask 1043459
        %v1156 = vsel %vm1155, %v1134, %v1154
        %vm1157 = vcmask 1044484
        %v1158 = vsel %vm1157, %v1138, %v1156
        %vm1159 = vcmask 1045509
        %v1160 = vsel %vm1159, %v1142, %v1158
        %vm1161 = vcmask 1046534
        %v1162 = vsel %vm1161, %v1146, %v1160
        %vm1163 = vcmask 1047559
        %v1164 = vsel %vm1163, %v1150, %v1162
        %v1174 = vlaneseq
        %v1175 = vshrl.u32 %v1174, 7
        %v1176 = vsub.s32 %v637, %v1175
        %v1177 = vrot.slane %v1095, %v1176
        %v1178 = vlaneseq
        %v1179 = vshrl.u32 %v1178, 7
        %v1180 = vsub.s32 %v637, %v1179
        %v1181 = vrot.slane %v1097, %v1180
        %v1182 = vlaneseq
        %v1183 = vshrl.u32 %v1182, 7
        %v1184 = vsub.s32 %v637, %v1183
        %v1185 = vrot.slane %v1099, %v1184
        %v1186 = vlaneseq
        %v1187 = vshrl.u32 %v1186, 7
        %v1188 = vsub.s32 %v637, %v1187
        %v1189 = vrot.slane %v1101, %v1188
        %v1190 = vlaneseq
        %v1191 = vshrl.u32 %v1190, 7
        %v1192 = vsub.s32 %v637, %v1191
        %v1193 = vrot.slane %v1103, %v1192
        %v1194 = vlaneseq
        %v1195 = vshrl.u32 %v1194, 7
        %v1196 = vsub.s32 %v637, %v1195
        %v1197 = vrot.slane %v1105, %v1196
        %v1198 = vlaneseq
        %v1199 = vshrl.u32 %v1198, 7
        %v1200 = vsub.s32 %v637, %v1199
        %v1201 = vrot.slane %v1107, %v1200
        %v1202 = vlaneseq
        %v1203 = vshrl.u32 %v1202, 7
        %v1204 = vsub.s32 %v637, %v1203
        %v1205 = vrot.slane %v1109, %v1204
        %v1206 = vsel %vm1151, %v1181, %v1177
        %v1207 = vsel %vm1153, %v1185, %v1206
        %v1208 = vsel %vm1155, %v1189, %v1207
        %v1209 = vsel %vm1157, %v1193, %v1208
        %v1210 = vsel %vm1159, %v1197, %v1209
        %v1211 = vsel %vm1161, %v1201, %v1210
        %v1212 = vsel %vm1163, %v1205, %v1211
        %v1214 = vsel %vm1110, %v1164, %v1212
        %v1215 = vcombine.high %v1214, 0.0
        %v1217 = vunpack.c.l.s4 1983009808
        %v1218 = vunpack.c.0.s8 %v1217
        %v1219 = vlaneseq
        %v1220 = vshrl.u32 %v1219, 7
        %v1221 = vsub.s32 %v1218, %v1220
        %v1222 = vrot.slane %v1214, %v1221
        %v1224 = vunpack.c.l.s4 1983009808
        %v1225 = vunpack.c.0.s8 %v1224
        %v1226 = vlaneseq
        %v1227 = vshrl.u32 %v1226, 7
        %v1228 = vsub.s32 %v1225, %v1227
        %v1229 = vrot.slane %v1215, %v1228
        %v1230 = vcombine.high %v1222, 0.0
        %v1232 = vunpack.c.l.s4 1934713408
        %v1233 = vunpack.c.0.s8 %v1232
        %v1234 = vlaneseq
        %v1235 = vshrl.u32 %v1234, 7
        %v1236 = vsub.s32 %v1233, %v1235
        %v1237 = vrot.slane %v1222, %v1236
        %v1239 = vunpack.c.l.s4 1934713408
        %v1240 = vunpack.c.0.s8 %v1239
        %v1241 = vlaneseq
        %v1242 = vshrl.u32 %v1241, 7
        %v1243 = vsub.s32 %v1240, %v1242
        %v1244 = vrot.slane %v1230, %v1243
        %v1245 = vcombine.high %v1229, 0.0
        %v1247 = vunpack.c.l.s4 1934713408
        %v1248 = vunpack.c.0.s8 %v1247
        %v1249 = vlaneseq
        %v1250 = vshrl.u32 %v1249, 7
        %v1251 = vsub.s32 %v1248, %v1250
        %v1252 = vrot.slane %v1229, %v1251
        %v1254 = vunpack.c.l.s4 1934713408
        %v1255 = vunpack.c.0.s8 %v1254
        %v1256 = vlaneseq
        %v1257 = vshrl.u32 %v1256, 7
        %v1258 = vsub.s32 %v1255, %v1257
        %v1259 = vrot.slane %v1245, %v1258
        %v1260 = vcombine.high %v1237, 0.0
        %v1261 = vcombine.high %v1244, 0.0
        %v1262 = vcombine.high %v1252, 0.0
        %v1263 = vcombine.high %v1259, 0.0
        %1265 = vrot.lane.b32.xlu0 %v1260, 8
        %v1266 = vpop.permute.xlu0 %1265
        %1269 = vrot.lane.b32.xlu0 %v1244, 16
        %v1270 = vpop.permute.xlu0 %1269
        %1273 = vrot.lane.b32.xlu0 %v1261, 24
        %v1274 = vpop.permute.xlu0 %1273
        %1277 = vrot.lane.b32.xlu0 %v1252, 32
        %v1278 = vpop.permute.xlu0 %1277
        %1281 = vrot.lane.b32.xlu0 %v1262, 40
        %v1282 = vpop.permute.xlu0 %1281
        %1285 = vrot.lane.b32.xlu0 %v1259, 48
        %v1286 = vpop.permute.xlu0 %1285
        %1289 = vrot.lane.b32.xlu0 %v1263, 56
        %v1290 = vpop.permute.xlu0 %1289
        %vm1292 = vcmask 64512
        %v1293 = vsel %vm1292, %v1237, %v1266
        %v1294 = vsel %vm379, %v1293, %v1270
        %vm1295 = vcmask 195584
        %v1296 = vsel %vm1295, %v1294, %v1274
        %v1297 = vsel %vm475, %v1296, %v1278
        %vm1298 = vcmask 326656
        %v1299 = vsel %vm1298, %v1297, %v1282
        %vm1300 = vcmask 392192
        %v1301 = vsel %vm1300, %v1299, %v1286
        %vm1302 = vcmask 457728
        %v1303 = vsel %vm1302, %v1301, %v1290
        %vm1304 = vcmask 523264
        %v1305 = vsel %vm1304, %v1303, 0.0
        %1306 = vst [vmem:[%s358] sm:$0x1] %v1305
        %s1307 = sand.u32 %s193, 1
        %s1308 = scalar_lea.sflag [#allocation4], %s1307
        %s1309 = sand.u32 %s193, 1
        %s1310 = scalar_lea.vmem [#allocation10], %s1309
        // Predicated region
        $region65: #{tpu_custom_call.1} parent=47 // pred_check
          %p1311 = pneg %p203
        $region66: #{tpu_custom_call.1} parent=47 // pred_check_branch
          %1313 = sbr.rel (%p1311) target = $region68
        $region67: #{tpu_custom_call.1} parent=47 // pred_region
          %s1315 = ssub.s32 16, 16
          %1316 = vsyncadd %s1308, %s1315
          %s1317 = smul.addr %s28, 16
          %s1318 = scalar_lea.hbm %s7, %s1317
          %s1320 = sshll.u32 %s1310, 4
          %s1321 = int_to_ptr.vmem [resolvable:$true] %s1320
          %1323 = dma.vmem_to_hbm [thread:$0]  %s1321, 16, %s1318, %s1308
        $region68: #{tpu_custom_call.1} parent=47 // pred_fallthru
          _
      $region48: #{tpu_custom_call.1} parent=5 // pred_fallthru
        _
      %p1324 = scmp.le.s32.totalorder 2, %s23
      // Predicated region
      $region69: #{tpu_custom_call.1} parent=5 // pred_check
        %p1325 = pneg %p1324
      $region70: #{tpu_custom_call.1} parent=5 // pred_check_branch
        %1327 = sbr.rel (%p1325) target = $region72
      $region71: #{tpu_custom_call.1} parent=5 // pred_region
        %s1328 = ssub.s32 %s23, 2
        // Predicated region
        $region73: #{tpu_custom_call.1} parent=71 // pred_check
          %p1329 = pneg %p209
        $region74: #{tpu_custom_call.1} parent=71 // pred_check_branch
          %1331 = sbr.rel (%p1329) target = $region76
        $region75: #{tpu_custom_call.1} parent=71 // pred_region
          %s1332 = sand.u32 %s194, 1
          %s1333 = scalar_lea.sflag [#allocation4], %s1332
          %s1334 = sand.u32 %s194, 1
          %s1335 = scalar_lea.vmem [#allocation10], %s1334
          %1336 = dma.done %s1333, 16
        $region76: #{tpu_custom_call.1} parent=71 // pred_fallthru
          _
      $region72: #{tpu_custom_call.1} parent=5 // pred_fallthru
        _
    $region6: #{tpu_custom_call.1} parent=1 // loop_footer
      %s27 = sadd.s32 1, %s23
    $region7: #{tpu_custom_call.1} parent=1 // loop_footer_branch
      %22 = sbr.rel target = $region3
    $region8: #{tpu_custom_call.1} parent=1 // loop_exit
      _
    %1337 = vsyncpa [#allocation3], 1
    %s1338 = scalar_lea.sflag [#allocation3], 1
    %1339 = vsyncpa %s1338, 1
    %1340 = vsyncpa [#allocation6], 1
    %s1341 = scalar_lea.sflag [#allocation6], 1
    %1342 = vsyncpa %s1341, 1
    %1343 = vsyncpa [#allocation9], 1
    %1344 = vsyncpa [#allocation4], 1
    %s1345 = scalar_lea.sflag [#allocation4], 1
    %1346 = vsyncpa %s1345, 1

// kernel: tpu_custom_call.1
$region0: #{tpu_custom_call.1}
  #allocation0 [shape = 'u32[]', space=smem, size = 0x4, offset = 0x4, fixed_abs, tag = 'smem constant byte address 0x4 - core index']
  #allocation1 [shape = 'u32[144,128]{1,0:T(1,128)}', space=vmem, size = 0x12000, scoped, tag = 'internal scratch']
  %s0 = inlined_call_operand.hbm [shape: s32[2,1,16], index: 0, kind: input, shape index: {}]
  %s1 = inlined_call_operand.hbm [shape: f32[2,16,32], index: 1, kind: input, shape index: {}]
  %s2 = inlined_call_operand.hbm [shape: f32[32,512], index: 2, kind: input, shape index: {}]
  %s3 = inlined_call_operand.hbm [shape: f32[256,256], index: 3, kind: input, shape index: {}]
  %s4 = inlined_call_operand.vmem [shape: f32[2,128], index: 4, kind: input, shape index: {}]
  %s5 = inlined_call_operand.vmem [shape: f32[1,256], index: 5, kind: input, shape index: {}]
  %s6 = inlined_call_operand.vmem [shape: f32[2,128], index: 6, kind: input, shape index: {}]
  %s7 = inlined_call_operand.hbm [shape: f32[2,1,128], index: 7, kind: output, shape index: {}]
  %s8 = sld [smem:[#allocation0]]
  $region77: #{tpu_custom_call.1} parent=0
    _
  %s10 = ssub.s32 1, %s8
  %s11 = scalar_select 0, %s10, %s8
  $region1: #{tpu_custom_call.1} parent=0
    #allocation2 [shape = 'u8[1024]{0}', space=vmem, size = 0x400, scoped, tag = 'input window, operand 0']
    #allocation3 [shape = 's32[2]{0}', space=sflag, size = 0x8, scoped, tag = 'scoped memory for tpu_custom_call.1']
    #allocation4 [shape = 's32[2]{0}', space=sflag, size = 0x8, scoped, tag = 'scoped memory for tpu_custom_call.1']
    #allocation5 [shape = 'u8[16384]{0}', space=vmem, size = 0x4000, scoped, tag = 'input window, operand 1']
    #allocation6 [shape = 's32[2]{0}', space=sflag, size = 0x8, scoped, tag = 'scoped memory for tpu_custom_call.1']
    #allocation7 [shape = 'u8[65536]{0}', space=vmem, size = 0x10000, scoped, tag = 'input window, operand 2, single buffered']
    #allocation8 [shape = 'u8[262144]{0}', space=vmem, size = 0x40000, scoped, tag = 'input window, operand 3, single buffered']
    #allocation9 [shape = 's32[1]{0}', space=sflag, size = 0x4, scoped, tag = 'scoped memory for tpu_custom_call.1']
    #allocation10 [shape = 'u8[1024]{0}', space=vmem, size = 0x400, scoped, tag = 'output window, operand 0']
    %12 = vsyncpa [#allocation3], 0
    %s13 = scalar_lea.sflag [#allocation3], 1
    %14 = vsyncpa %s13, 0
    %15 = vsyncpa [#allocation6], 0
    %s16 = scalar_lea.sflag [#allocation6], 1
    %17 = vsyncpa %s16, 0
    %18 = vsyncpa [#allocation9], 0
    %19 = vsyncpa [#allocation4], 0
    %s20 = scalar_lea.sflag [#allocation4], 1
    %21 = vsyncpa %s20, 0
    loop: start=0, step=1, limit=4
    $region2: #{tpu_custom_call.1} parent=1 // loop_pre_header
      _
    $region3: #{tpu_custom_call.1} parent=1 // loop_header
      %s23 = sphi 0, %s27
      %p24 = scmp.ge.s32.totalorder %s23, 4
      %s33 = sphi 0, %s35
      %s36 = sphi 0, %s33
      %s37 = sphi 0, %s36
      %s53 = sphi 0, %s37
      %s59 = sphi 0, %s61
      %s62 = sphi 0, %s59
      %s63 = sphi 0, %s62
      %s79 = sphi 0, %s63
      %s83 = sphi 0, %s83
      %s85 = sphi 0, %s83
      %s86 = sphi 0, %s85
      %s100 = sphi 0, %s86
      %s104 = sphi 0, %s104
      %s106 = sphi 0, %s104
      %s107 = sphi 0, %s106
      %s121 = sphi 0, %s107
      %s125 = sphi 0, %s125
      %s127 = sphi 0, %s125
      %s128 = sphi 0, %s127
      %s142 = sphi 0, %s128
      %s146 = sphi 0, %s146
      %s148 = sphi 0, %s146
      %s149 = sphi 0, %s148
      %s163 = sphi 0, %s149
      %s167 = sphi 0, %s167
      %s169 = sphi 0, %s167
      %s170 = sphi 0, %s169
      %s184 = sphi 0, %s170
      %s190 = sphi 0, %s192
      %s193 = sphi 0, %s190
      %s194 = sphi 0, %s193
      %s210 = sphi 0, %s194
    $region4: #{tpu_custom_call.1} parent=1 // loop_header_branch
      %26 = sbr.rel (%p24) target = $region8
    $region5: #{tpu_custom_call.1} parent=1 // loop_body
      %s28 = ssub.s32 %s23, 1
      %s29 = ssub.s32 %s23, 2
      %s30 = sadd.s32 %s23, 1
      %s31 = ssub.s32 %s23, %s30
      %p32 = scmp.eq.s32.totalorder %s31, 0
      %s34 = sadd.s32 %s33, 1
      %s35 = scalar_select %p32, %s33, %s34
      %p38 = pneg %p32
      %p39 = scmp.eq.s32.totalorder %s23, 1
      %p40 = por %p38, %p39
      %p41 = scmp.ne.s32.totalorder %s33, %s36
      %p42 = scmp.eq.s32.totalorder %s23, 0
      %p43 = por %p41, %p42
      %p44 = scmp.ne.s32.totalorder %s33, %s36
      %p45 = scmp.eq.s32.totalorder %s28, 1
      %p46 = por %p44, %p45
      %p47 = scmp.ne.s32.totalorder %s36, %s37
      %p48 = scmp.eq.s32.totalorder %s28, 0
      %p49 = por %p47, %p48
      %p50 = scmp.ne.s32.totalorder %s36, %s37
      %p51 = scmp.eq.s32.totalorder %s29, 1
      %p52 = por %p50, %p51
      %p54 = scmp.ne.s32.totalorder %s37, %s53
      %p55 = scmp.eq.s32.totalorder %s29, 0
      %p56 = por %p54, %p55
      %s57 = ssub.s32 %s23, %s30
      %p58 = scmp.eq.s32.totalorder %s57, 0
      %s60 = sadd.s32 %s59, 1
      %s61 = scalar_select %p58, %s59, %s60
      %p64 = pneg %p58
      %p65 = scmp.eq.s32.totalorder %s23, 1
      %p66 = por %p64, %p65
      %p67 = scmp.ne.s32.totalorder %s59, %s62
      %p68 = scmp.eq.s32.totalorder %s23, 0
      %p69 = por %p67, %p68
      %p70 = scmp.ne.s32.totalorder %s59, %s62
      %p71 = scmp.eq.s32.totalorder %s28, 1
      %p72 = por %p70, %p71
      %p73 = scmp.ne.s32.totalorder %s62, %s63
      %p74 = scmp.eq.s32.totalorder %s28, 0
      %p75 = por %p73, %p74
      %p76 = scmp.ne.s32.totalorder %s62, %s63
      %p77 = scmp.eq.s32.totalorder %s29, 1
      %p78 = por %p76, %p77
      %p80 = scmp.ne.s32.totalorder %s63, %s79
      %p81 = scmp.eq.s32.totalorder %s29, 0
      %p82 = por %p80, %p81
      %s84 = sadd.s32 %s83, 1
      %p87 = scmp.eq.s32.totalorder %s23, 1
      %p88 = scmp.ne.s32.totalorder %s83, %s85
      %p89 = scmp.eq.s32.totalorder %s23, 0
      %p90 = por %p88, %p89
      %p91 = scmp.ne.s32.totalorder %s83, %s85
      %p92 = scmp.eq.s32.totalorder %s28, 1
      %p93 = por %p91, %p92
      %p94 = scmp.ne.s32.totalorder %s85, %s86
      %p95 = scmp.eq.s32.totalorder %s28, 0
      %p96 = por %p94, %p95
      %p97 = scmp.ne.s32.totalorder %s85, %s86
      %p98 = scmp.eq.s32.totalorder %s29, 1
      %p99 = por %p97, %p98
      %p101 = scmp.ne.s32.totalorder %s86, %s100
      %p102 = scmp.eq.s32.totalorder %s29, 0
      %p103 = por %p101, %p102
      %s105 = sadd.s32 %s104, 1
      %p108 = scmp.eq.s32.totalorder %s23, 1
      %p109 = scmp.ne.s32.totalorder %s104, %s106
      %p110 = scmp.eq.s32.totalorder %s23, 0
      %p111 = por %p109, %p110
      %p112 = scmp.ne.s32.totalorder %s104, %s106
      %p113 = scmp.eq.s32.totalorder %s28, 1
      %p114 = por %p112, %p113
      %p115 = scmp.ne.s32.totalorder %s106, %s107
      %p116 = scmp.eq.s32.totalorder %s28, 0
      %p117 = por %p115, %p116
      %p118 = scmp.ne.s32.totalorder %s106, %s107
      %p119 = scmp.eq.s32.totalorder %s29, 1
      %p120 = por %p118, %p119
      %p122 = scmp.ne.s32.totalorder %s107, %s121
      %p123 = scmp.eq.s32.totalorder %s29, 0
      %p124 = por %p122, %p123
      %s126 = sadd.s32 %s125, 1
      %p129 = scmp.eq.s32.totalorder %s23, 1
      %p130 = scmp.ne.s32.totalorder %s125, %s127
      %p131 = scmp.eq.s32.totalorder %s23, 0
      %p132 = por %p130, %p131
      %p133 = scmp.ne.s32.totalorder %s125, %s127
      %p134 = scmp.eq.s32.totalorder %s28, 1
      %p135 = por %p133, %p134
      %p136 = scmp.ne.s32.totalorder %s127, %s128
      %p137 = scmp.eq.s32.totalorder %s28, 0
      %p138 = por %p136, %p137
      %p139 = scmp.ne.s32.totalorder %s127, %s128
      %p140 = scmp.eq.s32.totalorder %s29, 1
      %p141 = por %p139, %p140
      %p143 = scmp.ne.s32.totalorder %s128, %s142
      %p144 = scmp.eq.s32.totalorder %s29, 0
      %p145 = por %p143, %p144
      %s147 = sadd.s32 %s146, 1
      %p150 = scmp.eq.s32.totalorder %s23, 1
      %p151 = scmp.ne.s32.totalorder %s146, %s148
      %p152 = scmp.eq.s32.totalorder %s23, 0
      %p153 = por %p151, %p152
      %p154 = scmp.ne.s32.totalorder %s146, %s148
      %p155 = scmp.eq.s32.totalorder %s28, 1
      %p156 = por %p154, %p155
      %p157 = scmp.ne.s32.totalorder %s148, %s149
      %p158 = scmp.eq.s32.totalorder %s28, 0
      %p159 = por %p157, %p158
      %p160 = scmp.ne.s32.totalorder %s148, %s149
      %p161 = scmp.eq.s32.totalorder %s29, 1
      %p162 = por %p160, %p161
      %p164 = scmp.ne.s32.totalorder %s149, %s163
      %p165 = scmp.eq.s32.totalorder %s29, 0
      %p166 = por %p164, %p165
      %s168 = sadd.s32 %s167, 1
      %p171 = scmp.eq.s32.totalorder %s23, 1
      %p172 = scmp.ne.s32.totalorder %s167, %s169
      %p173 = scmp.eq.s32.totalorder %s23, 0
      %p174 = por %p172, %p173
      %p175 = scmp.ne.s32.totalorder %s167, %s169
      %p176 = scmp.eq.s32.totalorder %s28, 1
      %p177 = por %p175, %p176
      %p178 = scmp.ne.s32.totalorder %s169, %s170
      %p179 = scmp.eq.s32.totalorder %s28, 0
      %p180 = por %p178, %p179
      %p181 = scmp.ne.s32.totalorder %s169, %s170
      %p182 = scmp.eq.s32.totalorder %s29, 1
      %p183 = por %p181, %p182
      %p185 = scmp.ne.s32.totalorder %s170, %s184
      %p186 = scmp.eq.s32.totalorder %s29, 0
      %p187 = por %p185, %p186
      %s188 = ssub.s32 %s23, %s30
      %p189 = scmp.eq.s32.totalorder %s188, 0
      %s191 = sadd.s32 %s190, 1
      %s192 = scalar_select %p189, %s190, %s191
      %p195 = pneg %p189
      %p196 = scmp.eq.s32.totalorder %s23, 1
      %p197 = por %p195, %p196
      %p198 = scmp.ne.s32.totalorder %s190, %s193
      %p199 = scmp.eq.s32.totalorder %s23, 0
      %p200 = por %p198, %p199
      %p201 = scmp.ne.s32.totalorder %s190, %s193
      %p202 = scmp.eq.s32.totalorder %s28, 1
      %p203 = por %p201, %p202
      %p204 = scmp.ne.s32.totalorder %s193, %s194
      %p205 = scmp.eq.s32.totalorder %s28, 0
      %p206 = por %p204, %p205
      %p207 = scmp.ne.s32.totalorder %s193, %s194
      %p208 = scmp.eq.s32.totalorder %s29, 1
      %p209 = por %p207, %p208
      %p211 = scmp.ne.s32.totalorder %s194, %s210
      %p212 = scmp.eq.s32.totalorder %s29, 0
      %p213 = por %p211, %p212
      %p214 = scmp.le.s32.totalorder 1, %s23
      %p215 = scmp.lt.s32.totalorder %s23, 3
      %p216 = pnand %p214, %p215
      %p217 = pneg %p216
      // Predicated region
      $region9: #{tpu_custom_call.1} parent=5 // pred_check
        _
      $region10: #{tpu_custom_call.1} parent=5 // pred_check_branch
        %219 = sbr.rel (%p216) target = $region12
      $region11: #{tpu_custom_call.1} parent=5 // pred_region
        %s220 = ssub.s32 %s23, 1
        // Predicated region
        $region13: #{tpu_custom_call.1} parent=11 // pred_check
          %p221 = pneg %p96
        $region14: #{tpu_custom_call.1} parent=11 // pred_check_branch
          %223 = sbr.rel (%p221) target = $region16
        $region15: #{tpu_custom_call.1} parent=11 // pred_region
          %s225 = ssub.s32 2048, 2048
          %226 = vsyncadd [#allocation6], %s225
          %s227 = sshll.u32 [#allocation7], 4
          %s228 = int_to_ptr.vmem [resolvable:$true] %s227
          %233 = dma.hbm_to_vmem [thread:$0]  %s2, 2048, %s228, [#allocation6], 512, 512, 32
        $region16: #{tpu_custom_call.1} parent=11 // pred_fallthru
          _
        // Predicated region
        $region17: #{tpu_custom_call.1} parent=11 // pred_check
          %p234 = pneg %p117
        $region18: #{tpu_custom_call.1} parent=11 // pred_check_branch
          %236 = sbr.rel (%p234) target = $region20
        $region19: #{tpu_custom_call.1} parent=11 // pred_region
          %s238 = ssub.s32 8192, 8192
          %239 = vsyncadd [#allocation9], %s238
          %s240 = sshll.u32 [#allocation8], 4
          %s241 = int_to_ptr.vmem [resolvable:$true] %s240
          %246 = dma.hbm_to_vmem [thread:$0]  %s3, 8192, %s241, [#allocation9], 256, 256, 16
        $region20: #{tpu_custom_call.1} parent=11 // pred_fallthru
          _
        // Predicated region
        $region21: #{tpu_custom_call.1} parent=11 // pred_check
          %p247 = pneg %p138
        $region22: #{tpu_custom_call.1} parent=11 // pred_check_branch
          %249 = sbr.rel (%p247) target = $region24
        $region23: #{tpu_custom_call.1} parent=11 // pred_region
          _
        $region24: #{tpu_custom_call.1} parent=11 // pred_fallthru
          _
        // Predicated region
        $region25: #{tpu_custom_call.1} parent=11 // pred_check
          %p250 = pneg %p159
        $region26: #{tpu_custom_call.1} parent=11 // pred_check_branch
          %252 = sbr.rel (%p250) target = $region28
        $region27: #{tpu_custom_call.1} parent=11 // pred_region
          _
        $region28: #{tpu_custom_call.1} parent=11 // pred_fallthru
          _
        // Predicated region
        $region29: #{tpu_custom_call.1} parent=11 // pred_check
          %p253 = pneg %p180
        $region30: #{tpu_custom_call.1} parent=11 // pred_check_branch
          %255 = sbr.rel (%p253) target = $region32
        $region31: #{tpu_custom_call.1} parent=11 // pred_region
          _
        $region32: #{tpu_custom_call.1} parent=11 // pred_fallthru
          _
      $region12: #{tpu_custom_call.1} parent=5 // pred_fallthru
        _
      %p256 = scmp.lt.s32.totalorder %s23, 2
      // Predicated region
      $region33: #{tpu_custom_call.1} parent=5 // pred_check
        %p257 = pneg %p256
      $region34: #{tpu_custom_call.1} parent=5 // pred_check_branch
        %259 = sbr.rel (%p257) target = $region36
      $region35: #{tpu_custom_call.1} parent=5 // pred_region
        // Predicated region
        $region37: #{tpu_custom_call.1} parent=35 // pred_check
          %p260 = pneg %p43
        $region38: #{tpu_custom_call.1} parent=35 // pred_check_branch
          %262 = sbr.rel (%p260) target = $region40
        $region39: #{tpu_custom_call.1} parent=35 // pred_region
          %s263 = sand.u32 %s33, 1
          %s264 = scalar_lea.sflag [#allocation3], %s263
          %s265 = sand.u32 %s33, 1
          %s266 = scalar_lea.vmem [#allocation2], %s265
          %s268 = ssub.s32 16, 16
          %269 = vsyncadd %s264, %s268
          %s270 = smul.addr %s23, 16
          %s271 = scalar_lea.hbm %s0, %s270
          %s273 = sshll.u32 %s266, 4
          %s274 = int_to_ptr.vmem [resolvable:$true] %s273
          %276 = dma.hbm_to_vmem [thread:$0]  %s271, 16, %s274, %s264
        $region40: #{tpu_custom_call.1} parent=35 // pred_fallthru
          _
        // Predicated region
        $region41: #{tpu_custom_call.1} parent=35 // pred_check
          %p277 = pneg %p69
        $region42: #{tpu_custom_call.1} parent=35 // pred_check_branch
          %279 = sbr.rel (%p277) target = $region44
        $region43: #{tpu_custom_call.1} parent=35 // pred_region
          %s280 = sand.u32 %s23, 1
          %s281 = scalar_lea.sflag [#allocation6], %s280
          %s282 = sand.u32 %s59, 1
          %s283 = smul.addr %s282, 16
          %s284 = scalar_lea.vmem [#allocation5], %s283
          %s286 = ssub.s32 256, 256
          %287 = vsyncadd %s281, %s286
          %s288 = smul.addr %s23, 2
          %s289 = smul.addr %s288, 128
          %s290 = scalar_lea.hbm %s1, %s289
          %s291 = sshll.u32 %s284, 4
          %s292 = int_to_ptr.vmem [resolvable:$true] %s291
          %297 = dma.hbm_to_vmem [thread:$0]  %s290, 256, %s292, %s281, 128, 128, 8
        $region44: #{tpu_custom_call.1} parent=35 // pred_fallthru
          _
      $region36: #{tpu_custom_call.1} parent=5 // pred_fallthru
        _
      %p298 = scmp.le.s32.totalorder 1, %s23
      %p299 = scmp.lt.s32.totalorder %s23, 3
      %p300 = pnand %p298, %p299
      %p301 = pneg %p300
      // Predicated region
      $region45: #{tpu_custom_call.1} parent=5 // pred_check
        _
      $region46: #{tpu_custom_call.1} parent=5 // pred_check_branch
        %303 = sbr.rel (%p300) target = $region48
      $region47: #{tpu_custom_call.1} parent=5 // pred_region
        %s304 = ssub.s32 %s23, 1
        %s305 = sand.u32 %s36, 1
        %s306 = scalar_lea.sflag [#allocation3], %s305
        %s307 = sand.u32 %s36, 1
        %s308 = scalar_lea.vmem [#allocation2], %s307
        // Predicated region
        $region49: #{tpu_custom_call.1} parent=47 // pred_check
          %p309 = pneg %p49
        $region50: #{tpu_custom_call.1} parent=47 // pred_check_branch
          %311 = sbr.rel (%p309) target = $region52
        $region51: #{tpu_custom_call.1} parent=47 // pred_region
          %312 = dma.done %s306, 16
        $region52: #{tpu_custom_call.1} parent=47 // pred_fallthru
          _
        %s313 = sand.u32 %s28, 1
        %s314 = scalar_lea.sflag [#allocation6], %s313
        %s315 = sand.u32 %s62, 1
        %s316 = smul.addr %s315, 16
        %s317 = scalar_lea.vmem [#allocation5], %s316
        // Predicated region
        $region53: #{tpu_custom_call.1} parent=47 // pred_check
          %p318 = pneg %p75
        $region54: #{tpu_custom_call.1} parent=47 // pred_check_branch
          %320 = sbr.rel (%p318) target = $region56
        $region55: #{tpu_custom_call.1} parent=47 // pred_region
          %321 = dma.done %s314, 256
        $region56: #{tpu_custom_call.1} parent=47 // pred_fallthru
          _
        // Predicated region
        $region57: #{tpu_custom_call.1} parent=47 // pred_check
          %p322 = pneg %p96
        $region58: #{tpu_custom_call.1} parent=47 // pred_check_branch
          %324 = sbr.rel (%p322) target = $region60
        $region59: #{tpu_custom_call.1} parent=47 // pred_region
          %325 = dma.done [#allocation6], 2048
        $region60: #{tpu_custom_call.1} parent=47 // pred_fallthru
          _
        // Predicated region
        $region61: #{tpu_custom_call.1} parent=47 // pred_check
          %p326 = pneg %p117
        $region62: #{tpu_custom_call.1} parent=47 // pred_check_branch
          %328 = sbr.rel (%p326) target = $region64
        $region63: #{tpu_custom_call.1} parent=47 // pred_region
          %329 = dma.done [#allocation9], 8192
        $region64: #{tpu_custom_call.1} parent=47 // pred_fallthru
          _
        %s330 = sand.u32 %s36, 1
        %s331 = scalar_lea.sflag [#allocation3], %s330
        %s332 = sand.u32 %s36, 1
        %s333 = scalar_lea.vmem [#allocation2], %s332
        %p334 = pneg %p49
        %p335 = pneg %p46
        %s336 = sand.u32 %s28, 1
        %s337 = scalar_lea.sflag [#allocation6], %s336
        %s338 = sand.u32 %s62, 1
        %s339 = smul.addr %s338, 16
        %s340 = scalar_lea.vmem [#allocation5], %s339
        %p341 = pneg %p75
        %p342 = pneg %p72
        %p343 = pneg %p96
        %p344 = pneg %p93
        %p345 = pneg %p117
        %p346 = pneg %p114
        %p347 = pneg %p138
        %p348 = pneg %p135
        %p349 = pneg %p159
        %p350 = pneg %p156
        %p351 = pneg %p180
        %p352 = pneg %p177
        %p353 = pneg %p206
        %p354 = pneg %p203
        %s355 = sand.u32 %s193, 1
        %s356 = scalar_lea.sflag [#allocation4], %s355
        %s357 = sand.u32 %s193, 1
        %s358 = scalar_lea.vmem [#allocation10], %s357
        %v359 = vld [vmem:[%s308] sm:$0x1]
        %v360 = vlaneseq
        %v361 = vshrl.u32 %v360, 7
        %v362 = vlaneseq
        %v363 = vshrl.u32 %v362, 7
        %v364 = vsub.s32 0, %v363
        %v365 = vrot.slane %v359, %v364
        %vm366 = vcmp.eq.s32.totalorder %v361, %v365
        %vm367 = vcmp.ge.s32.totalorder %v359, 0
        %v368 = vsel %vm367, 1, 0
        %v369 = vlaneseq
        %v370 = vshrl.u32 %v369, 7
        %v371 = vsub.s32 0, %v370
        %v372 = vrot.slane %v368, %v371
        %vm373 = vcmp.eq.s32.totalorder %v372, 1
        %vm374 = vmand %vm366, %vm373
        %v375 = vsel %vm374, 1, 0
        %v376 = vcvt.s32.f32 %v375
        %v377 = vld [vmem:[%s317] sm:$0xff]
        %v378 = vld [vmem:[%s317 + $0x8] sm:$0xff]
        %vm379 = vcmask 130048
        %v381 = vsel %vm379, %v376, 0
        %383 = vmatprep.subr.mxu0 0.0
        %384 = vmatpush1.msra.mxu0 0.0
        %385 = vmatprep.subr.mxu0 0.0
        %386 = vmatpush1.msra.mxu0 0.0
        %387 = vmatprep.subr.mxu0 0.0
        %388 = vmatpush1.msra.mxu0 0.0
        %389 = vmatprep.subr.mxu0 0.0
        %390 = vmatpush1.msra.mxu0 0.0
        %391 = vmatprep.subr.mxu0 0.0
        %392 = vmatpush1.msra.mxu0 0.0
        %393 = vmatprep.subr.mxu0 0.0
        %394 = vmatpush1.msra.mxu0 0.0
        %395 = vmatprep.subr.mxu0 0.0
        %396 = vmatpush1.msra.mxu0 0.0
        %397 = vmatprep.subr.mxu0 0.0
        %398 = vmatpush1.msra.mxu0 0.0
        %399 = vmatprep.subr.mxu0 0.0
        %400 = vmatpush1.msra.mxu0 0.0
        %401 = vmatprep.subr.mxu0 0.0
        %402 = vmatpush1.msra.mxu0 0.0
        %403 = vmatprep.subr.mxu0 0.0
        %404 = vmatpush1.msra.mxu0 0.0
        %405 = vmatprep.subr.mxu0 0.0
        %406 = vmatpush1.msra.mxu0 0.0
        %407 = vmatprep.subr.mxu0 0.0
        %408 = vmatpush1.msra.mxu0 0.0
        %409 = vmatprep.subr.mxu0 0.0
        %410 = vmatpush1.msra.mxu0 0.0
        %411 = vmatprep.subr.mxu0 0.0
        %412 = vmatpush1.msra.mxu0 %v378
        %413 = vmatprep.subr.mxu0 0.0
        %414 = vmatpush1.msra.mxu0 %v377
        %415 = vmatprep.subr.mxu0 0.0
        %416 = vmatpush2.msra.mxu0 0.0
        %417 = vmatprep.subr.mxu0 0.0
        %418 = vmatpush2.msra.mxu0 0.0
        %419 = vmatprep.subr.mxu0 0.0
        %420 = vmatpush2.msra.mxu0 0.0
        %421 = vmatprep.subr.mxu0 0.0
        %422 = vmatpush2.msra.mxu0 0.0
        %423 = vmatprep.subr.mxu0 0.0
        %424 = vmatpush2.msra.mxu0 0.0
        %425 = vmatprep.subr.mxu0 0.0
        %426 = vmatpush2.msra.mxu0 0.0
        %427 = vmatprep.subr.mxu0 0.0
        %428 = vmatpush2.msra.mxu0 0.0
        %429 = vmatprep.subr.mxu0 0.0
        %430 = vmatpush2.msra.mxu0 0.0
        %431 = vmatprep.subr.mxu0 0.0
        %432 = vmatpush2.msra.mxu0 0.0
        %433 = vmatprep.subr.mxu0 0.0
        %434 = vmatpush2.msra.mxu0 0.0
        %435 = vmatprep.subr.mxu0 0.0
        %436 = vmatpush2.msra.mxu0 0.0
        %437 = vmatprep.subr.mxu0 0.0
        %438 = vmatpush2.msra.mxu0 0.0
        %439 = vmatprep.subr.mxu0 0.0
        %440 = vmatpush2.msra.mxu0 0.0
        %441 = vmatprep.subr.mxu0 0.0
        %442 = vmatpush2.msra.mxu0 0.0
        %443 = vmatprep.subr.mxu0 0.0
        %444 = vmatpush2.msra.mxu0 0.0
        %445 = vmatprep.subr.mxu0 0.0
        %446 = vmatpush2.msra.mxu0 0.0
        %447 = vmatprep.mubr.f32.mxu0 0.0
        %448 = vmatmul.mubr.f32.gmra.mxu0 %v381
        %v449 = vpop.f32.mrf.mxu0
        %v450 = vadd.f32 0.0, %v449
        %v451 = vpop.f32.mrf.mxu0
        %452 = vdwg.mxu0
        %v453 = vsel %vm379, %v376, 0.0
        %454 = vadd.xlane.f32.xlu0 %v453
        %v455 = vpop.xlane.xlu0 %454
        %v456 = vmax.f32 %v455, 1.0
        %v457 = vrcp.pop %v456
        %v458 = vmul.f32 %v450, %v457
        %v459 = vld [vmem:[#allocation7] sm:$0xff]
        %v460 = vld [vmem:[#allocation7 + $0x8] sm:$0xff]
        %v461 = vld [vmem:[#allocation7 + $0x10] sm:$0xff]
        %v462 = vld [vmem:[#allocation7 + $0x18] sm:$0xff]
        %v463 = vld [vmem:[#allocation7 + $0x20] sm:$0xff]
        %v464 = vld [vmem:[#allocation7 + $0x28] sm:$0xff]
        %v465 = vld [vmem:[#allocation7 + $0x30] sm:$0xff]
        %v466 = vld [vmem:[#allocation7 + $0x38] sm:$0xff]
        %v467 = vld [vmem:[#allocation7 + $0x40] sm:$0xff]
        %v468 = vld [vmem:[#allocation7 + $0x48] sm:$0xff]
        %v469 = vld [vmem:[#allocation7 + $0x50] sm:$0xff]
        %v470 = vld [vmem:[#allocation7 + $0x58] sm:$0xff]
        %v471 = vld [vmem:[#allocation7 + $0x60] sm:$0xff]
        %v472 = vld [vmem:[#allocation7 + $0x68] sm:$0xff]
        %v473 = vld [vmem:[#allocation7 + $0x70] sm:$0xff]
        %v474 = vld [vmem:[#allocation7 + $0x78] sm:$0xff]
        %vm475 = vcmask 261120
        %v477 = vsel %vm475, %v458, 0
        %479 = vmatprep.subr.mxu0 0.0
        %480 = vmatpush1.msra.mxu0 0.0
        %481 = vmatprep.subr.mxu0 0.0
        %482 = vmatpush1.msra.mxu0 0.0
        %483 = vmatprep.subr.mxu0 0.0
        %484 = vmatpush1.msra.mxu0 0.0
        %485 = vmatprep.subr.mxu0 0.0
        %486 = vmatpush1.msra.mxu0 0.0
        %487 = vmatprep.subr.mxu0 0.0
        %488 = vmatpush1.msra.mxu0 0.0
        %489 = vmatprep.subr.mxu0 0.0
        %490 = vmatpush1.msra.mxu0 0.0
        %491 = vmatprep.subr.mxu0 0.0
        %492 = vmatpush1.msra.mxu0 0.0
        %493 = vmatprep.subr.mxu0 0.0
        %494 = vmatpush1.msra.mxu0 0.0
        %495 = vmatprep.subr.mxu0 0.0
        %496 = vmatpush1.msra.mxu0 0.0
        %497 = vmatprep.subr.mxu0 0.0
        %498 = vmatpush1.msra.mxu0 0.0
        %499 = vmatprep.subr.mxu0 0.0
        %500 = vmatpush1.msra.mxu0 0.0
        %501 = vmatprep.subr.mxu0 0.0
        %502 = vmatpush1.msra.mxu0 0.0
        %503 = vmatprep.subr.mxu0 %v472
        %504 = vmatpush1.msra.mxu0 %v471
        %505 = vmatprep.subr.mxu0 %v468
        %506 = vmatpush1.msra.mxu0 %v467
        %507 = vmatprep.subr.mxu0 %v464
        %508 = vmatpush1.msra.mxu0 %v463
        %509 = vmatprep.subr.mxu0 %v460
        %510 = vmatpush1.msra.mxu0 %v459
        %511 = vmatprep.subr.mxu0 0.0
        %512 = vmatpush2.msra.mxu0 0.0
        %513 = vmatprep.subr.mxu0 0.0
        %514 = vmatpush2.msra.mxu0 0.0
        %515 = vmatprep.subr.mxu0 0.0
        %516 = vmatpush2.msra.mxu0 0.0
        %517 = vmatprep.subr.mxu0 0.0
        %518 = vmatpush2.msra.mxu0 0.0
        %519 = vmatprep.subr.mxu0 0.0
        %520 = vmatpush2.msra.mxu0 0.0
        %521 = vmatprep.subr.mxu0 0.0
        %522 = vmatpush2.msra.mxu0 0.0
        %523 = vmatprep.subr.mxu0 0.0
        %524 = vmatpush2.msra.mxu0 0.0
        %525 = vmatprep.subr.mxu0 0.0
        %526 = vmatpush2.msra.mxu0 0.0
        %527 = vmatprep.subr.mxu0 0.0
        %528 = vmatpush2.msra.mxu0 0.0
        %529 = vmatprep.subr.mxu0 0.0
        %530 = vmatpush2.msra.mxu0 0.0
        %531 = vmatprep.subr.mxu0 0.0
        %532 = vmatpush2.msra.mxu0 0.0
        %533 = vmatprep.subr.mxu0 0.0
        %534 = vmatpush2.msra.mxu0 0.0
        %535 = vmatprep.subr.mxu0 0.0
        %536 = vmatpush2.msra.mxu0 0.0
        %537 = vmatprep.subr.mxu0 0.0
        %538 = vmatpush2.msra.mxu0 0.0
        %539 = vmatprep.subr.mxu0 0.0
        %540 = vmatpush2.msra.mxu0 0.0
        %541 = vmatprep.subr.mxu0 0.0
        %542 = vmatpush2.msra.mxu0 0.0
        %543 = vmatprep.mubr.f32.mxu0 0.0
        %544 = vmatmul.mubr.f32.gmra.mxu0 %v477
        %v545 = vpop.f32.mrf.mxu0
        %v546 = vadd.f32 0.0, %v545
        %v547 = vpop.f32.mrf.mxu0
        %v548 = vadd.f32 0.0, %v547
        %549 = vdwg.mxu0
        %550 = vmatprep.subr.mxu0 0.0
        %551 = vmatpush1.msra.mxu0 0.0
        %552 = vmatprep.subr.mxu0 0.0
        %553 = vmatpush1.msra.mxu0 0.0
        %554 = vmatprep.subr.mxu0 0.0
        %555 = vmatpush1.msra.mxu0 0.0
        %556 = vmatprep.subr.mxu0 0.0
        %557 = vmatpush1.msra.mxu0 0.0
        %558 = vmatprep.subr.mxu0 0.0
        %559 = vmatpush1.msra.mxu0 0.0
        %560 = vmatprep.subr.mxu0 0.0
        %561 = vmatpush1.msra.mxu0 0.0
        %562 = vmatprep.subr.mxu0 0.0
        %563 = vmatpush1.msra.mxu0 0.0
        %564 = vmatprep.subr.mxu0 0.0
        %565 = vmatpush1.msra.mxu0 0.0
        %566 = vmatprep.subr.mxu0 0.0
        %567 = vmatpush1.msra.mxu0 0.0
        %568 = vmatprep.subr.mxu0 0.0
        %569 = vmatpush1.msra.mxu0 0.0
        %570 = vmatprep.subr.mxu0 0.0
        %571 = vmatpush1.msra.mxu0 0.0
        %572 = vmatprep.subr.mxu0 0.0
        %573 = vmatpush1.msra.mxu0 0.0
        %574 = vmatprep.subr.mxu0 %v474
        %575 = vmatpush1.msra.mxu0 %v473
        %576 = vmatprep.subr.mxu0 %v470
        %577 = vmatpush1.msra.mxu0 %v469
        %578 = vmatprep.subr.mxu0 %v466
        %579 = vmatpush1.msra.mxu0 %v465
        %580 = vmatprep.subr.mxu0 %v462
        %581 = vmatpush1.msra.mxu0 %v461
        %582 = vmatprep.subr.mxu0 0.0
        %583 = vmatpush2.msra.mxu0 0.0
        %584 = vmatprep.subr.mxu0 0.0
        %585 = vmatpush2.msra.mxu0 0.0
        %586 = vmatprep.subr.mxu0 0.0
        %587 = vmatpush2.msra.mxu0 0.0
        %588 = vmatprep.subr.mxu0 0.0
        %589 = vmatpush2.msra.mxu0 0.0
        %590 = vmatprep.subr.mxu0 0.0
        %591 = vmatpush2.msra.mxu0 0.0
        %592 = vmatprep.subr.mxu0 0.0
        %593 = vmatpush2.msra.mxu0 0.0
        %594 = vmatprep.subr.mxu0 0.0
        %595 = vmatpush2.msra.mxu0 0.0
        %596 = vmatprep.subr.mxu0 0.0
        %597 = vmatpush2.msra.mxu0 0.0
        %598 = vmatprep.subr.mxu0 0.0
        %599 = vmatpush2.msra.mxu0 0.0
        %600 = vmatprep.subr.mxu0 0.0
        %601 = vmatpush2.msra.mxu0 0.0
        %602 = vmatprep.subr.mxu0 0.0
        %603 = vmatpush2.msra.mxu0 0.0
        %604 = vmatprep.subr.mxu0 0.0
        %605 = vmatpush2.msra.mxu0 0.0
        %606 = vmatprep.subr.mxu0 0.0
        %607 = vmatpush2.msra.mxu0 0.0
        %608 = vmatprep.subr.mxu0 0.0
        %609 = vmatpush2.msra.mxu0 0.0
        %610 = vmatprep.subr.mxu0 0.0
        %611 = vmatpush2.msra.mxu0 0.0
        %612 = vmatprep.subr.mxu0 0.0
        %613 = vmatpush2.msra.mxu0 0.0
        %614 = vmatprep.mubr.f32.mxu0 0.0
        %615 = vmatmul.mubr.f32.gmra.mxu0 %v477
        %v616 = vpop.f32.mrf.mxu0
        %v617 = vadd.f32 0.0, %v616
        %v618 = vpop.f32.mrf.mxu0
        %v619 = vadd.f32 0.0, %v618
        %620 = vdwg.mxu0
        %v621 = vld [vmem:[%s4] sm:$0x1]
        %v622 = vlaneseq
        %v623 = vshrl.u32 %v622, 7
        %v624 = vsub.s32 0, %v623
        %v625 = vrot.slane %v621, %v624
        %v626 = vadd.f32 %v548, %v625
        %v627 = vld [vmem:[%s4 + $0x1] sm:$0x1]
        %v628 = vlaneseq
        %v629 = vshrl.u32 %v628, 7
        %v630 = vsub.s32 0, %v629
        %v631 = vrot.slane %v627, %v630
        %v632 = vadd.f32 %v619, %v631
        %v633 = vld [vmem:[%s5] sm:$0x3]
        %v634 = vld [vmem:[%s6] sm:$0x1]
        %v635 = vld [vmem:[%s6 + $0x1] sm:$0x1]
        %v636 = vlaneseq
        %v637 = vand.u32 %v636, 127
        %v639 = vcombine.high %v546, %v546
        %v641 = vunpack.c.l.s4 1966171168
        %v642 = vunpack.c.0.s8 %v641
        %v643 = vlaneseq
        %v644 = vshrl.u32 %v643, 7
        %v645 = vsub.s32 %v642, %v644
        %v646 = vrot.slane %v546, %v645
        %v648 = vunpack.c.l.s4 1966171168
        %v649 = vunpack.c.0.s8 %v648
        %v650 = vlaneseq
        %v651 = vshrl.u32 %v650, 7
        %v652 = vsub.s32 %v649, %v651
        %v653 = vrot.slane %v639, %v652
        %v654 = vcombine.high %v646, %v646
        %v655 = vcombine.high %v653, %v653
        %v657 = vunpack.c.l.s4 1966171168
        %v658 = vunpack.c.0.s8 %v657
        %v659 = vlaneseq
        %v660 = vshrl.u32 %v659, 7
        %v661 = vsub.s32 %v658, %v660
        %v662 = vrot.slane %v646, %v661
        %v664 = vunpack.c.l.s4 1966171168
        %v665 = vunpack.c.0.s8 %v664
        %v666 = vlaneseq
        %v667 = vshrl.u32 %v666, 7
        %v668 = vsub.s32 %v665, %v667
        %v669 = vrot.slane %v653, %v668
        %v671 = vunpack.c.l.s4 1966171168
        %v672 = vunpack.c.0.s8 %v671
        %v673 = vlaneseq
        %v674 = vshrl.u32 %v673, 7
        %v675 = vsub.s32 %v672, %v674
        %v676 = vrot.slane %v654, %v675
        %v678 = vunpack.c.l.s4 1966171168
        %v679 = vunpack.c.0.s8 %v678
        %v680 = vlaneseq
        %v681 = vshrl.u32 %v680, 7
        %v682 = vsub.s32 %v679, %v681
        %v683 = vrot.slane %v655, %v682
        %v684 = vcombine.high %v662, %v662
        %v685 = vcombine.high %v669, %v669
        %v686 = vcombine.high %v676, %v676
        %v687 = vcombine.high %v683, %v683
        %v688 = vlaneseq
        %v689 = vshrl.u32 %v688, 7
        %v690 = vsub.s32 0, %v689
        %v691 = vrot.slane %v662, %v690
        %v692 = vlaneseq
        %v693 = vshrl.u32 %v692, 7
        %v694 = vsub.s32 0, %v693
        %v695 = vrot.slane %v676, %v694
        %v696 = vlaneseq
        %v697 = vshrl.u32 %v696, 7
        %v698 = vsub.s32 0, %v697
        %v699 = vrot.slane %v684, %v698
        %v700 = vlaneseq
        %v701 = vshrl.u32 %v700, 7
        %v702 = vsub.s32 0, %v701
        %v703 = vrot.slane %v686, %v702
        %v704 = vlaneseq
        %v705 = vshrl.u32 %v704, 7
        %v706 = vsub.s32 0, %v705
        %v707 = vrot.slane %v669, %v706
        %v708 = vlaneseq
        %v709 = vshrl.u32 %v708, 7
        %v710 = vsub.s32 0, %v709
        %v711 = vrot.slane %v683, %v710
        %v712 = vlaneseq
        %v713 = vshrl.u32 %v712, 7
        %v714 = vsub.s32 0, %v713
        %v715 = vrot.slane %v685, %v714
        %v716 = vlaneseq
        %v717 = vshrl.u32 %v716, 7
        %v718 = vsub.s32 0, %v717
        %v719 = vrot.slane %v687, %v718
        %v728 = vadd.f32 %v691, %v626
        %v729 = vadd.f32 %v695, %v626
        %v730 = vadd.f32 %v699, %v626
        %v731 = vadd.f32 %v703, %v626
        %v732 = vadd.f32 %v707, %v626
        %v733 = vadd.f32 %v711, %v626
        %v734 = vadd.f32 %v715, %v626
        %v735 = vadd.f32 %v719, %v626
        %v736 = vmax.f32 %v728, 0.0
        %v737 = vmax.f32 %v729, 0.0
        %v738 = vmax.f32 %v730, 0.0
        %v739 = vmax.f32 %v731, 0.0
        %v740 = vmax.f32 %v732, 0.0
        %v741 = vmax.f32 %v733, 0.0
        %v742 = vmax.f32 %v734, 0.0
        %v743 = vmax.f32 %v735, 0.0
        %v745 = vcombine.high %v617, %v617
        %v747 = vunpack.c.l.s4 1966171168
        %v748 = vunpack.c.0.s8 %v747
        %v749 = vlaneseq
        %v750 = vshrl.u32 %v749, 7
        %v751 = vsub.s32 %v748, %v750
        %v752 = vrot.slane %v617, %v751
        %v754 = vunpack.c.l.s4 1966171168
        %v755 = vunpack.c.0.s8 %v754
        %v756 = vlaneseq
        %v757 = vshrl.u32 %v756, 7
        %v758 = vsub.s32 %v755, %v757
        %v759 = vrot.slane %v745, %v758
        %v760 = vcombine.high %v752, %v752
        %v761 = vcombine.high %v759, %v759
        %v763 = vunpack.c.l.s4 1966171168
        %v764 = vunpack.c.0.s8 %v763
        %v765 = vlaneseq
        %v766 = vshrl.u32 %v765, 7
        %v767 = vsub.s32 %v764, %v766
        %v768 = vrot.slane %v752, %v767
        %v770 = vunpack.c.l.s4 1966171168
        %v771 = vunpack.c.0.s8 %v770
        %v772 = vlaneseq
        %v773 = vshrl.u32 %v772, 7
        %v774 = vsub.s32 %v771, %v773
        %v775 = vrot.slane %v759, %v774
        %v777 = vunpack.c.l.s4 1966171168
        %v778 = vunpack.c.0.s8 %v777
        %v779 = vlaneseq
        %v780 = vshrl.u32 %v779, 7
        %v781 = vsub.s32 %v778, %v780
        %v782 = vrot.slane %v760, %v781
        %v784 = vunpack.c.l.s4 1966171168
        %v785 = vunpack.c.0.s8 %v784
        %v786 = vlaneseq
        %v787 = vshrl.u32 %v786, 7
        %v788 = vsub.s32 %v785, %v787
        %v789 = vrot.slane %v761, %v788
        %v790 = vcombine.high %v768, %v768
        %v791 = vcombine.high %v775, %v775
        %v792 = vcombine.high %v782, %v782
        %v793 = vcombine.high %v789, %v789
        %v794 = vlaneseq
        %v795 = vshrl.u32 %v794, 7
        %v796 = vsub.s32 0, %v795
        %v797 = vrot.slane %v768, %v796
        %v798 = vlaneseq
        %v799 = vshrl.u32 %v798, 7
        %v800 = vsub.s32 0, %v799
        %v801 = vrot.slane %v782, %v800
        %v802 = vlaneseq
        %v803 = vshrl.u32 %v802, 7
        %v804 = vsub.s32 0, %v803
        %v805 = vrot.slane %v790, %v804
        %v806 = vlaneseq
        %v807 = vshrl.u32 %v806, 7
        %v808 = vsub.s32 0, %v807
        %v809 = vrot.slane %v792, %v808
        %v810 = vlaneseq
        %v811 = vshrl.u32 %v810, 7
        %v812 = vsub.s32 0, %v811
        %v813 = vrot.slane %v775, %v812
        %v814 = vlaneseq
        %v815 = vshrl.u32 %v814, 7
        %v816 = vsub.s32 0, %v815
        %v817 = vrot.slane %v789, %v816
        %v818 = vlaneseq
        %v819 = vshrl.u32 %v818, 7
        %v820 = vsub.s32 0, %v819
        %v821 = vrot.slane %v791, %v820
        %v822 = vlaneseq
        %v823 = vshrl.u32 %v822, 7
        %v824 = vsub.s32 0, %v823
        %v825 = vrot.slane %v793, %v824
        %v834 = vadd.f32 %v797, %v632
        %v835 = vadd.f32 %v801, %v632
        %v836 = vadd.f32 %v805, %v632
        %v837 = vadd.f32 %v809, %v632
        %v838 = vadd.f32 %v813, %v632
        %v839 = vadd.f32 %v817, %v632
        %v840 = vadd.f32 %v821, %v632
        %v841 = vadd.f32 %v825, %v632
        %v842 = vmax.f32 %v834, 0.0
        %v843 = vmax.f32 %v835, 0.0
        %v844 = vmax.f32 %v836, 0.0
        %v845 = vmax.f32 %v837, 0.0
        %v846 = vmax.f32 %v838, 0.0
        %v847 = vmax.f32 %v839, 0.0
        %v848 = vmax.f32 %v840, 0.0
        %v849 = vmax.f32 %v841, 0.0
        %v850 = vld [vmem:[#allocation8] sm:$0xff]
        %v851 = vld [vmem:[#allocation8 + $0x8] sm:$0xff]
        %v852 = vld [vmem:[#allocation8 + $0x10] sm:$0xff]
        %v853 = vld [vmem:[#allocation8 + $0x18] sm:$0xff]
        %v854 = vld [vmem:[#allocation8 + $0x20] sm:$0xff]
        %v855 = vld [vmem:[#allocation8 + $0x28] sm:$0xff]
        %v856 = vld [vmem:[#allocation8 + $0x30] sm:$0xff]
        %v857 = vld [vmem:[#allocation8 + $0x38] sm:$0xff]
        %v858 = vld [vmem:[#allocation8 + $0x40] sm:$0xff]
        %v859 = vld [vmem:[#allocation8 + $0x48] sm:$0xff]
        %v860 = vld [vmem:[#allocation8 + $0x50] sm:$0xff]
        %v861 = vld [vmem:[#allocation8 + $0x58] sm:$0xff]
        %v862 = vld [vmem:[#allocation8 + $0x60] sm:$0xff]
        %v863 = vld [vmem:[#allocation8 + $0x68] sm:$0xff]
        %v864 = vld [vmem:[#allocation8 + $0x70] sm:$0xff]
        %v865 = vld [vmem:[#allocation8 + $0x78] sm:$0xff]
        %v866 = vld [vmem:[#allocation8 + $0x80] sm:$0xff]
        %v867 = vld [vmem:[#allocation8 + $0x88] sm:$0xff]
        %v868 = vld [vmem:[#allocation8 + $0x90] sm:$0xff]
        %v869 = vld [vmem:[#allocation8 + $0x98] sm:$0xff]
        %v870 = vld [vmem:[#allocation8 + $0xa0] sm:$0xff]
        %v871 = vld [vmem:[#allocation8 + $0xa8] sm:$0xff]
        %v872 = vld [vmem:[#allocation8 + $0xb0] sm:$0xff]
        %v873 = vld [vmem:[#allocation8 + $0xb8] sm:$0xff]
        %v874 = vld [vmem:[#allocation8 + $0xc0] sm:$0xff]
        %v875 = vld [vmem:[#allocation8 + $0xc8] sm:$0xff]
        %v876 = vld [vmem:[#allocation8 + $0xd0] sm:$0xff]
        %v877 = vld [vmem:[#allocation8 + $0xd8] sm:$0xff]
        %v878 = vld [vmem:[#allocation8 + $0xe0] sm:$0xff]
        %v879 = vld [vmem:[#allocation8 + $0xe8] sm:$0xff]
        %v880 = vld [vmem:[#allocation8 + $0xf0] sm:$0xff]
        %v881 = vld [vmem:[#allocation8 + $0xf8] sm:$0xff]
        %v882 = vld [vmem:[#allocation8 + $0x100] sm:$0xff]
        %v883 = vld [vmem:[#allocation8 + $0x108] sm:$0xff]
        %v884 = vld [vmem:[#allocation8 + $0x110] sm:$0xff]
        %v885 = vld [vmem:[#allocation8 + $0x118] sm:$0xff]
        %v886 = vld [vmem:[#allocation8 + $0x120] sm:$0xff]
        %v887 = vld [vmem:[#allocation8 + $0x128] sm:$0xff]
        %v888 = vld [vmem:[#allocation8 + $0x130] sm:$0xff]
        %v889 = vld [vmem:[#allocation8 + $0x138] sm:$0xff]
        %v890 = vld [vmem:[#allocation8 + $0x140] sm:$0xff]
        %v891 = vld [vmem:[#allocation8 + $0x148] sm:$0xff]
        %v892 = vld [vmem:[#allocation8 + $0x150] sm:$0xff]
        %v893 = vld [vmem:[#allocation8 + $0x158] sm:$0xff]
        %v894 = vld [vmem:[#allocation8 + $0x160] sm:$0xff]
        %v895 = vld [vmem:[#allocation8 + $0x168] sm:$0xff]
        %v896 = vld [vmem:[#allocation8 + $0x170] sm:$0xff]
        %v897 = vld [vmem:[#allocation8 + $0x178] sm:$0xff]
        %v898 = vld [vmem:[#allocation8 + $0x180] sm:$0xff]
        %v899 = vld [vmem:[#allocation8 + $0x188] sm:$0xff]
        %v900 = vld [vmem:[#allocation8 + $0x190] sm:$0xff]
        %v901 = vld [vmem:[#allocation8 + $0x198] sm:$0xff]
        %v902 = vld [vmem:[#allocation8 + $0x1a0] sm:$0xff]
        %v903 = vld [vmem:[#allocation8 + $0x1a8] sm:$0xff]
        %v904 = vld [vmem:[#allocation8 + $0x1b0] sm:$0xff]
        %v905 = vld [vmem:[#allocation8 + $0x1b8] sm:$0xff]
        %v906 = vld [vmem:[#allocation8 + $0x1c0] sm:$0xff]
        %v907 = vld [vmem:[#allocation8 + $0x1c8] sm:$0xff]
        %v908 = vld [vmem:[#allocation8 + $0x1d0] sm:$0xff]
        %v909 = vld [vmem:[#allocation8 + $0x1d8] sm:$0xff]
        %v910 = vld [vmem:[#allocation8 + $0x1e0] sm:$0xff]
        %v911 = vld [vmem:[#allocation8 + $0x1e8] sm:$0xff]
        %v912 = vld [vmem:[#allocation8 + $0x1f0] sm:$0xff]
        %v913 = vld [vmem:[#allocation8 + $0x1f8] sm:$0xff]
        %v915 = vlaneseq
        %v916 = vshrl.u32 %v915, 7
        %v917 = vsub.s32 0, %v916
        %v918 = vrot.slane %v633, %v917
        %v919 = vlaneseq
        %v920 = vshrl.u32 %v919, 7
        %v921 = vsub.s32 1, %v920
        %v922 = vrot.slane %v633, %v921
        %925 = vmatprep.subr.mxu0 %v881
        %926 = vmatpush1.msra.mxu0 %v880
        %927 = vmatprep.subr.mxu0 %v879
        %928 = vmatpush1.msra.mxu0 %v878
        %929 = vmatprep.subr.mxu0 %v877
        %930 = vmatpush1.msra.mxu0 %v876
        %931 = vmatprep.subr.mxu0 %v875
        %932 = vmatpush1.msra.mxu0 %v874
        %933 = vmatprep.subr.mxu0 %v873
        %934 = vmatpush1.msra.mxu0 %v872
        %935 = vmatprep.subr.mxu0 %v871
        %936 = vmatpush1.msra.mxu0 %v870
        %937 = vmatprep.subr.mxu0 %v869
        %938 = vmatpush1.msra.mxu0 %v868
        %939 = vmatprep.subr.mxu0 %v867
        %940 = vmatpush1.msra.mxu0 %v866
        %941 = vmatprep.subr.mxu0 %v865
        %942 = vmatpush1.msra.mxu0 %v864
        %943 = vmatprep.subr.mxu0 %v863
        %944 = vmatpush1.msra.mxu0 %v862
        %945 = vmatprep.subr.mxu0 %v861
        %946 = vmatpush1.msra.mxu0 %v860
        %947 = vmatprep.subr.mxu0 %v859
        %948 = vmatpush1.msra.mxu0 %v858
        %949 = vmatprep.subr.mxu0 %v857
        %950 = vmatpush1.msra.mxu0 %v856
        %951 = vmatprep.subr.mxu0 %v855
        %952 = vmatpush1.msra.mxu0 %v854
        %953 = vmatprep.subr.mxu0 %v853
        %954 = vmatpush1.msra.mxu0 %v852
        %955 = vmatprep.subr.mxu0 %v851
        %956 = vmatpush1.msra.mxu0 %v850
        %957 = vmatprep.subr.mxu0 %v913
        %958 = vmatpush2.msra.mxu0 %v912
        %959 = vmatprep.subr.mxu0 %v911
        %960 = vmatpush2.msra.mxu0 %v910
        %961 = vmatprep.subr.mxu0 %v909
        %962 = vmatpush2.msra.mxu0 %v908
        %963 = vmatprep.subr.mxu0 %v907
        %964 = vmatpush2.msra.mxu0 %v906
        %965 = vmatprep.subr.mxu0 %v905
        %966 = vmatpush2.msra.mxu0 %v904
        %967 = vmatprep.subr.mxu0 %v903
        %968 = vmatpush2.msra.mxu0 %v902
        %969 = vmatprep.subr.mxu0 %v901
        %970 = vmatpush2.msra.mxu0 %v900
        %971 = vmatprep.subr.mxu0 %v899
        %972 = vmatpush2.msra.mxu0 %v898
        %973 = vmatprep.subr.mxu0 %v897
        %974 = vmatpush2.msra.mxu0 %v896
        %975 = vmatprep.subr.mxu0 %v895
        %976 = vmatpush2.msra.mxu0 %v894
        %977 = vmatprep.subr.mxu0 %v893
        %978 = vmatpush2.msra.mxu0 %v892
        %979 = vmatprep.subr.mxu0 %v891
        %980 = vmatpush2.msra.mxu0 %v890
        %981 = vmatprep.subr.mxu0 %v889
        %982 = vmatpush2.msra.mxu0 %v888
        %983 = vmatprep.subr.mxu0 %v887
        %984 = vmatpush2.msra.mxu0 %v886
        %985 = vmatprep.subr.mxu0 %v885
        %986 = vmatpush2.msra.mxu0 %v884
        %987 = vmatprep.subr.mxu0 %v883
        %988 = vmatpush2.msra.mxu0 %v882
        %989 = vmatprep.mubr.f32.mxu0 %v842
        %990 = vmatmul.mubr.f32.gmra.mxu0 %v736
        %v991 = vpop.f32.mrf.mxu0
        %v992 = vadd.f32 %v918, %v991
        %v993 = vpop.f32.mrf.mxu0
        %v994 = vadd.f32 %v922, %v993
        %995 = vmatprep.mubr.f32.mxu0 %v843
        %996 = vmatmul.mubr.f32.gmra.mxu0 %v737
        %v997 = vpop.f32.mrf.mxu0
        %v998 = vadd.f32 %v918, %v997
        %v999 = vpop.f32.mrf.mxu0
        %v1000 = vadd.f32 %v922, %v999
        %1001 = vmatprep.mubr.f32.mxu0 %v844
        %1002 = vmatmul.mubr.f32.gmra.mxu0 %v738
        %v1003 = vpop.f32.mrf.mxu0
        %v1004 = vadd.f32 %v918, %v1003
        %v1005 = vpop.f32.mrf.mxu0
        %v1006 = vadd.f32 %v922, %v1005
        %1007 = vmatprep.mubr.f32.mxu0 %v845
        %1008 = vmatmul.mubr.f32.gmra.mxu0 %v739
        %v1009 = vpop.f32.mrf.mxu0
        %v1010 = vadd.f32 %v918, %v1009
        %v1011 = vpop.f32.mrf.mxu0
        %v1012 = vadd.f32 %v922, %v1011
        %1013 = vmatprep.mubr.f32.mxu0 %v846
        %1014 = vmatmul.mubr.f32.gmra.mxu0 %v740
        %v1015 = vpop.f32.mrf.mxu0
        %v1016 = vadd.f32 %v918, %v1015
        %v1017 = vpop.f32.mrf.mxu0
        %v1018 = vadd.f32 %v922, %v1017
        %1019 = vmatprep.mubr.f32.mxu0 %v847
        %1020 = vmatmul.mubr.f32.gmra.mxu0 %v741
        %v1021 = vpop.f32.mrf.mxu0
        %v1022 = vadd.f32 %v918, %v1021
        %v1023 = vpop.f32.mrf.mxu0
        %v1024 = vadd.f32 %v922, %v1023
        %1025 = vmatprep.mubr.f32.mxu0 %v848
        %1026 = vmatmul.mubr.f32.gmra.mxu0 %v742
        %v1027 = vpop.f32.mrf.mxu0
        %v1028 = vadd.f32 %v918, %v1027
        %v1029 = vpop.f32.mrf.mxu0
        %v1030 = vadd.f32 %v922, %v1029
        %1031 = vmatprep.mubr.f32.mxu0 %v849
        %1032 = vmatmul.mubr.f32.gmra.mxu0 %v743
        %v1033 = vpop.f32.mrf.mxu0
        %v1034 = vadd.f32 %v918, %v1033
        %v1035 = vpop.f32.mrf.mxu0
        %v1036 = vadd.f32 %v922, %v1035
        %1037 = vdwg.mxu0
        %v1038 = vmax.f32 %v992, 0.0
        %v1039 = vmax.f32 %v994, 0.0
        %v1040 = vmax.f32 %v998, 0.0
        %v1041 = vmax.f32 %v1000, 0.0
        %v1042 = vmax.f32 %v1004, 0.0
        %v1043 = vmax.f32 %v1006, 0.0
        %v1044 = vmax.f32 %v1010, 0.0
        %v1045 = vmax.f32 %v1012, 0.0
        %v1046 = vmax.f32 %v1016, 0.0
        %v1047 = vmax.f32 %v1018, 0.0
        %v1048 = vmax.f32 %v1022, 0.0
        %v1049 = vmax.f32 %v1024, 0.0
        %v1050 = vmax.f32 %v1028, 0.0
        %v1051 = vmax.f32 %v1030, 0.0
        %v1052 = vmax.f32 %v1034, 0.0
        %v1053 = vmax.f32 %v1036, 0.0
        %v1054 = vlaneseq
        %v1055 = vshrl.u32 %v1054, 7
        %v1056 = vsub.s32 0, %v1055
        %v1057 = vrot.slane %v634, %v1056
        %v1058 = vmul.f32 %v1038, %v1057
        %v1059 = vmul.f32 %v1040, %v1057
        %v1060 = vmul.f32 %v1042, %v1057
        %v1061 = vmul.f32 %v1044, %v1057
        %v1062 = vmul.f32 %v1046, %v1057
        %v1063 = vmul.f32 %v1048, %v1057
        %v1064 = vmul.f32 %v1050, %v1057
        %v1065 = vmul.f32 %v1052, %v1057
        %1066 = vadd.xlane.f32.xlu0 %v1058
        %v1067 = vpop.xlane.xlu0 %1066
        %1068 = vadd.xlane.f32.xlu0 %v1059
        %v1069 = vpop.xlane.xlu0 %1068
        %1070 = vadd.xlane.f32.xlu0 %v1060
        %v1071 = vpop.xlane.xlu0 %1070
        %1072 = vadd.xlane.f32.xlu0 %v1061
        %v1073 = vpop.xlane.xlu0 %1072
        %1074 = vadd.xlane.f32.xlu0 %v1062
        %v1075 = vpop.xlane.xlu0 %1074
        %1076 = vadd.xlane.f32.xlu0 %v1063
        %v1077 = vpop.xlane.xlu0 %1076
        %1078 = vadd.xlane.f32.xlu0 %v1064
        %v1079 = vpop.xlane.xlu0 %1078
        %1080 = vadd.xlane.f32.xlu0 %v1065
        %v1081 = vpop.xlane.xlu0 %1080
        %v1082 = vlaneseq
        %v1083 = vshrl.u32 %v1082, 7
        %v1084 = vsub.s32 0, %v1083
        %v1085 = vrot.slane %v635, %v1084
        %v1086 = vmul.f32 %v1039, %v1085
        %v1087 = vmul.f32 %v1041, %v1085
        %v1088 = vmul.f32 %v1043, %v1085
        %v1089 = vmul.f32 %v1045, %v1085
        %v1090 = vmul.f32 %v1047, %v1085
        %v1091 = vmul.f32 %v1049, %v1085
        %v1092 = vmul.f32 %v1051, %v1085
        %v1093 = vmul.f32 %v1053, %v1085
        %1094 = vadd.xlane.f32.xlu0 %v1086
        %v1095 = vpop.xlane.xlu0 %1094
        %1096 = vadd.xlane.f32.xlu0 %v1087
        %v1097 = vpop.xlane.xlu0 %1096
        %1098 = vadd.xlane.f32.xlu0 %v1088
        %v1099 = vpop.xlane.xlu0 %1098
        %1100 = vadd.xlane.f32.xlu0 %v1089
        %v1101 = vpop.xlane.xlu0 %1100
        %1102 = vadd.xlane.f32.xlu0 %v1090
        %v1103 = vpop.xlane.xlu0 %1102
        %1104 = vadd.xlane.f32.xlu0 %v1091
        %v1105 = vpop.xlane.xlu0 %1104
        %1106 = vadd.xlane.f32.xlu0 %v1092
        %v1107 = vpop.xlane.xlu0 %1106
        %1108 = vadd.xlane.f32.xlu0 %v1093
        %v1109 = vpop.xlane.xlu0 %1108
        %vm1110 = vcmp.le.s32.totalorder %v361, %v637
        %v1119 = vlaneseq
        %v1120 = vshrl.u32 %v1119, 7
        %v1121 = vsub.s32 %v637, %v1120
        %v1122 = vrot.slane %v1067, %v1121
        %v1123 = vlaneseq
        %v1124 = vshrl.u32 %v1123, 7
        %v1125 = vsub.s32 %v637, %v1124
        %v1126 = vrot.slane %v1069, %v1125
        %v1127 = vlaneseq
        %v1128 = vshrl.u32 %v1127, 7
        %v1129 = vsub.s32 %v637, %v1128
        %v1130 = vrot.slane %v1071, %v1129
        %v1131 = vlaneseq
        %v1132 = vshrl.u32 %v1131, 7
        %v1133 = vsub.s32 %v637, %v1132
        %v1134 = vrot.slane %v1073, %v1133
        %v1135 = vlaneseq
        %v1136 = vshrl.u32 %v1135, 7
        %v1137 = vsub.s32 %v637, %v1136
        %v1138 = vrot.slane %v1075, %v1137
        %v1139 = vlaneseq
        %v1140 = vshrl.u32 %v1139, 7
        %v1141 = vsub.s32 %v637, %v1140
        %v1142 = vrot.slane %v1077, %v1141
        %v1143 = vlaneseq
        %v1144 = vshrl.u32 %v1143, 7
        %v1145 = vsub.s32 %v637, %v1144
        %v1146 = vrot.slane %v1079, %v1145
        %v1147 = vlaneseq
        %v1148 = vshrl.u32 %v1147, 7
        %v1149 = vsub.s32 %v637, %v1148
        %v1150 = vrot.slane %v1081, %v1149
        %vm1151 = vcmask 1041409
        %v1152 = vsel %vm1151, %v1126, %v1122
        %vm1153 = vcmask 1042434
        %v1154 = vsel %vm1153, %v1130, %v1152
        %vm1155 = vcmask 1043459
        %v1156 = vsel %vm1155, %v1134, %v1154
        %vm1157 = vcmask 1044484
        %v1158 = vsel %vm1157, %v1138, %v1156
        %vm1159 = vcmask 1045509
        %v1160 = vsel %vm1159, %v1142, %v1158
        %vm1161 = vcmask 1046534
        %v1162 = vsel %vm1161, %v1146, %v1160
        %vm1163 = vcmask 1047559
        %v1164 = vsel %vm1163, %v1150, %v1162
        %v1174 = vlaneseq
        %v1175 = vshrl.u32 %v1174, 7
        %v1176 = vsub.s32 %v637, %v1175
        %v1177 = vrot.slane %v1095, %v1176
        %v1178 = vlaneseq
        %v1179 = vshrl.u32 %v1178, 7
        %v1180 = vsub.s32 %v637, %v1179
        %v1181 = vrot.slane %v1097, %v1180
        %v1182 = vlaneseq
        %v1183 = vshrl.u32 %v1182, 7
        %v1184 = vsub.s32 %v637, %v1183
        %v1185 = vrot.slane %v1099, %v1184
        %v1186 = vlaneseq
        %v1187 = vshrl.u32 %v1186, 7
        %v1188 = vsub.s32 %v637, %v1187
        %v1189 = vrot.slane %v1101, %v1188
        %v1190 = vlaneseq
        %v1191 = vshrl.u32 %v1190, 7
        %v1192 = vsub.s32 %v637, %v1191
        %v1193 = vrot.slane %v1103, %v1192
        %v1194 = vlaneseq
        %v1195 = vshrl.u32 %v1194, 7
        %v1196 = vsub.s32 %v637, %v1195
        %v1197 = vrot.slane %v1105, %v1196
        %v1198 = vlaneseq
        %v1199 = vshrl.u32 %v1198, 7
        %v1200 = vsub.s32 %v637, %v1199
        %v1201 = vrot.slane %v1107, %v1200
        %v1202 = vlaneseq
        %v1203 = vshrl.u32 %v1202, 7
        %v1204 = vsub.s32 %v637, %v1203
        %v1205 = vrot.slane %v1109, %v1204
        %v1206 = vsel %vm1151, %v1181, %v1177
        %v1207 = vsel %vm1153, %v1185, %v1206
        %v1208 = vsel %vm1155, %v1189, %v1207
        %v1209 = vsel %vm1157, %v1193, %v1208
        %v1210 = vsel %vm1159, %v1197, %v1209
        %v1211 = vsel %vm1161, %v1201, %v1210
        %v1212 = vsel %vm1163, %v1205, %v1211
        %v1214 = vsel %vm1110, %v1164, %v1212
        %v1215 = vcombine.high %v1214, 0.0
        %v1217 = vunpack.c.l.s4 1983009808
        %v1218 = vunpack.c.0.s8 %v1217
        %v1219 = vlaneseq
        %v1220 = vshrl.u32 %v1219, 7
        %v1221 = vsub.s32 %v1218, %v1220
        %v1222 = vrot.slane %v1214, %v1221
        %v1224 = vunpack.c.l.s4 1983009808
        %v1225 = vunpack.c.0.s8 %v1224
        %v1226 = vlaneseq
        %v1227 = vshrl.u32 %v1226, 7
        %v1228 = vsub.s32 %v1225, %v1227
        %v1229 = vrot.slane %v1215, %v1228
        %v1230 = vcombine.high %v1222, 0.0
        %v1232 = vunpack.c.l.s4 1934713408
        %v1233 = vunpack.c.0.s8 %v1232
        %v1234 = vlaneseq
        %v1235 = vshrl.u32 %v1234, 7
        %v1236 = vsub.s32 %v1233, %v1235
        %v1237 = vrot.slane %v1222, %v1236
        %v1239 = vunpack.c.l.s4 1934713408
        %v1240 = vunpack.c.0.s8 %v1239
        %v1241 = vlaneseq
        %v1242 = vshrl.u32 %v1241, 7
        %v1243 = vsub.s32 %v1240, %v1242
        %v1244 = vrot.slane %v1230, %v1243
        %v1245 = vcombine.high %v1229, 0.0
        %v1247 = vunpack.c.l.s4 1934713408
        %v1248 = vunpack.c.0.s8 %v1247
        %v1249 = vlaneseq
        %v1250 = vshrl.u32 %v1249, 7
        %v1251 = vsub.s32 %v1248, %v1250
        %v1252 = vrot.slane %v1229, %v1251
        %v1254 = vunpack.c.l.s4 1934713408
        %v1255 = vunpack.c.0.s8 %v1254
        %v1256 = vlaneseq
        %v1257 = vshrl.u32 %v1256, 7
        %v1258 = vsub.s32 %v1255, %v1257
        %v1259 = vrot.slane %v1245, %v1258
        %v1260 = vcombine.high %v1237, 0.0
        %v1261 = vcombine.high %v1244, 0.0
        %v1262 = vcombine.high %v1252, 0.0
        %v1263 = vcombine.high %v1259, 0.0
        %1265 = vrot.lane.b32.xlu0 %v1260, 8
        %v1266 = vpop.permute.xlu0 %1265
        %1269 = vrot.lane.b32.xlu0 %v1244, 16
        %v1270 = vpop.permute.xlu0 %1269
        %1273 = vrot.lane.b32.xlu0 %v1261, 24
        %v1274 = vpop.permute.xlu0 %1273
        %1277 = vrot.lane.b32.xlu0 %v1252, 32
        %v1278 = vpop.permute.xlu0 %1277
        %1281 = vrot.lane.b32.xlu0 %v1262, 40
        %v1282 = vpop.permute.xlu0 %1281
        %1285 = vrot.lane.b32.xlu0 %v1259, 48
        %v1286 = vpop.permute.xlu0 %1285
        %1289 = vrot.lane.b32.xlu0 %v1263, 56
        %v1290 = vpop.permute.xlu0 %1289
        %vm1292 = vcmask 64512
        %v1293 = vsel %vm1292, %v1237, %v1266
        %v1294 = vsel %vm379, %v1293, %v1270
        %vm1295 = vcmask 195584
        %v1296 = vsel %vm1295, %v1294, %v1274
        %v1297 = vsel %vm475, %v1296, %v1278
        %vm1298 = vcmask 326656
        %v1299 = vsel %vm1298, %v1297, %v1282
        %vm1300 = vcmask 392192
        %v1301 = vsel %vm1300, %v1299, %v1286
        %vm1302 = vcmask 457728
        %v1303 = vsel %vm1302, %v1301, %v1290
        %vm1304 = vcmask 523264
        %v1305 = vsel %vm1304, %v1303, 0.0
        %1306 = vst [vmem:[%s358] sm:$0x1] %v1305
        %s1307 = sand.u32 %s193, 1
        %s1308 = scalar_lea.sflag [#allocation4], %s1307
        %s1309 = sand.u32 %s193, 1
        %s1310 = scalar_lea.vmem [#allocation10], %s1309
        // Predicated region
        $region65: #{tpu_custom_call.1} parent=47 // pred_check
          %p1311 = pneg %p203
        $region66: #{tpu_custom_call.1} parent=47 // pred_check_branch
          %1313 = sbr.rel (%p1311) target = $region68
        $region67: #{tpu_custom_call.1} parent=47 // pred_region
          %s1315 = ssub.s32 16, 16
          %1316 = vsyncadd %s1308, %s1315
          %s1317 = smul.addr %s28, 16
          %s1318 = scalar_lea.hbm %s7, %s1317
          %s1320 = sshll.u32 %s1310, 4
          %s1321 = int_to_ptr.vmem [resolvable:$true] %s1320
          %1323 = dma.vmem_to_hbm [thread:$0]  %s1321, 16, %s1318, %s1308
        $region68: #{tpu_custom_call.1} parent=47 // pred_fallthru
          _
      $region48: #{tpu_custom_call.1} parent=5 // pred_fallthru
        _
      %p1324 = scmp.le.s32.totalorder 2, %s23
      // Predicated region
      $region69: #{tpu_custom_call.1} parent=5 // pred_check
        %p1325 = pneg %p1324
      $region70: #{tpu_custom_call.1} parent=5 // pred_check_branch
        %1327 = sbr.rel (%p1325) target = $region72
      $region71: #{tpu_custom_call.1} parent=5 // pred_region
        %s1328 = ssub.s32 %s23, 2
        // Predicated region
        $region73: #{tpu_custom_call.1} parent=71 // pred_check
          %p1329 = pneg %p209
        $region74: #{tpu_custom_call.1} parent=71 // pred_check_branch
          %1331 = sbr.rel (%p1329) target = $region76
        $region75: #{tpu_custom_call.1} parent=71 // pred_region
          %s1332 = sand.u32 %s194, 1
          %s1333 = scalar_lea.sflag [#allocation4], %s1332
          %s1334 = sand.u32 %s194, 1
          %s1335 = scalar_lea.vmem [#allocation10], %s1334
          %1336 = dma.done %s1333, 16
        $region76: #{tpu_custom_call.1} parent=71 // pred_fallthru
          _
      $region72: #{tpu_custom_call.1} parent=5 // pred_fallthru
        _
    $region6: #{tpu_custom_call.1} parent=1 // loop_footer
      %s27 = sadd.s32 1, %s23
    $region7: #{tpu_custom_call.1} parent=1 // loop_footer_branch
      %22 = sbr.rel target = $region3
    $region8: #{tpu_custom_call.1} parent=1 // loop_exit
      _
    %1337 = vsyncpa [#allocation3], 1
    %s1338 = scalar_lea.sflag [#allocation3], 1
    %1339 = vsyncpa %s1338, 1
    %1340 = vsyncpa [#allocation6], 1
    %s1341 = scalar_lea.sflag [#allocation6], 1
    %1342 = vsyncpa %s1341, 1
    %1343 = vsyncpa [#allocation9], 1
    %1344 = vsyncpa [#allocation4], 1
    %s1345 = scalar_lea.sflag [#allocation4], 1
    %1346 = vsyncpa %s1345, 1

</llo_original>
